<compile_context>
chip_gen: v7x
topology: tpu7x:2x2x1
jax: 0.10.0
libtpu: 0.0.40
codegen_flags: <defaults>
</compile_context>

<pallas_src>
import functools

import jax
import jax.numpy as jnp
from jax.experimental import pallas as pl
from jax.experimental.pallas import tpu as pltpu

_MAX_ROW_TILE = 512


def _pick_vmem_limit():
    """Scoped-VMEM budget per generation: ~3/4 of physical, capped at 96 MiB."""
    default = 32 * 1024 * 1024
    try:
        cap = int(pltpu.get_tpu_info().vmem_capacity_bytes)
    except Exception:  # no TPU info available -> conservative default
        return default
    return max(default, min((cap * 3) // 4, 96 * 1024 * 1024))


VMEM_LIMIT_BYTES = _pick_vmem_limit()


def _cparams(semantics):
    return pltpu.CompilerParams(dimension_semantics=semantics,
                                vmem_limit_bytes=VMEM_LIMIT_BYTES)


def _row_tile(m):
    """Row tile <= 512, sublane-aligned, and >= 2 grid steps when M allows (v7x has 2 TCs)."""
    if m <= 8:
        return m
    half = -(-m // 2)          # ceil(M / 2)
    half = -(-half // 8) * 8   # round up to a multiple of 8 rows
    return min(half, _MAX_ROW_TILE)


def _layernorm(x, g, b, eps=1e-5):
    """f32 LayerNorm over the last axis. g, b are [1, D]."""
    mean = jnp.mean(x, axis=-1, keepdims=True)
    var = jnp.mean(jnp.square(x - mean), axis=-1, keepdims=True)
    return (x - mean) * jax.lax.rsqrt(var + eps) * g + b


# ----------------------------------------------------------------------------- fused stack


def _stack_kernel(*refs, B, Sq, Sk, heads, dim_head, is_self, fuse_out):
    """One grid step == one full (attention + FFN) transformer layer.

    The residual stream lives in the f32 VMEM scratch `resid_ref` for the whole stack.
    On the last layer step the final LayerNorm (and optionally the output nn.Linear) is
    applied and the result is written to `o_ref` (constant block index -> single HBM write).
    """
    refs = list(refs)
    x_ref = refs.pop(0)                         # [M, D]  (M = B*Sq)
    ctx_ref = None if is_self else refs.pop(0)  # [Mk, D] (Mk = B*Sk)
    (ln1g, ln1b, wq, wk, wv, wo, bo,
     ln2g, ln2b, w1, b1, w2, b2, fing, finb) = refs[:15]
    refs = refs[15:]
    if fuse_out:
        lastw, lastb = refs[:2]
        refs = refs[2:]
    o_ref, resid_ref = refs

    layer = pl.program_id(0)
    D = x_ref.shape[-1]
    M = B * Sq
    scale = dim_head ** -0.5

    @pl.when(layer == 0)
    def _():
        resid_ref[...] = x_ref[...].astype(jnp.float32)

    resid = resid_ref[...]                                            # [M, D] f32

    # ---- attention sub-block: pre-LN, batched Q/K/V projections over all M rows ----
    xn = _layernorm(resid, ln1g[0], ln1b[0])
    kv_in = xn if is_self else ctx_ref[...].astype(jnp.float32)       # context is NOT normed

    q = jnp.dot(xn.astype(jnp.bfloat16), wq[0],
                preferred_element_type=jnp.float32) * scale           # [M, inner]
    k = jnp.dot(kv_in.astype(jnp.bfloat16), wk[0],
                preferred_element_type=jnp.float32)                   # [Mk, inner]
    v = jnp.dot(kv_in.astype(jnp.bfloat16), wv[0],
                preferred_element_type=jnp.float32)                   # [Mk, inner]

    # Per-head accumulation into the output projection (no lane concat of head outputs).
    out = jnp.zeros((M, D), jnp.float32)
    for h in range(heads):                                            # static unroll
        lo = h * dim_head
        wo_h = wo[0][lo:lo + dim_head, :]                             # [dh, D] sublane slice
        rows = []
        for bi in range(B):                                           # static unroll
            qb = q[bi * Sq:(bi + 1) * Sq, lo:lo + dim_head].astype(jnp.bfloat16)
            kb = k[bi * Sk:(bi + 1) * Sk, lo:lo + dim_head].astype(jnp.bfloat16)
            vb = v[bi * Sk:(bi + 1) * Sk, lo:lo + dim_head].astype(jnp.bfloat16)
            s = jax.lax.dot_general(qb, kb, (((1,), (1,)), ((), ())),
                                    preferred_element_type=jnp.float32)  # [Sq, Sk]
            s = s - jnp.max(s, axis=-1, keepdims=True)
            p = jnp.exp(s)
            p = p / jnp.sum(p, axis=-1, keepdims=True)                # exact softmax
            rows.append(jnp.dot(p.astype(jnp.bfloat16), vb,
                                preferred_element_type=jnp.float32))  # [Sq, dh]
        attn_h = jnp.concatenate(rows, axis=0) if B > 1 else rows[0]  # [M, dh] (sublane concat)
        out = out + jnp.dot(attn_h.astype(jnp.bfloat16), wo_h,
                            preferred_element_type=jnp.float32)       # [M, D]
    resid = resid + out + bo[0]

    # ---- feed-forward sub-block ----
    xn2 = _layernorm(resid, ln2g[0], ln2b[0])
    hmid = jnp.dot(xn2.astype(jnp.bfloat16), w1[0],
                   preferred_element_type=jnp.float32) + b1[0]
    hmid = jax.nn.gelu(hmid, approximate=True)  # TODO(synk): reference nn.GELU is exact erf
    y = jnp.dot(hmid.astype(jnp.bfloat16), w2[0],
                preferred_element_type=jnp.float32) + b2[0]
    resid = resid + y

    resid_ref[...] = resid

    # ---- epilogue on the last layer: final LayerNorm (+ optional fused output projection) ----
    @pl.when(layer == pl.num_programs(0) - 1)
    def _():
        xf = _layernorm(resid, fing[...], finb[...])
        if fuse_out:
            yf = jnp.dot(xf.astype(jnp.bfloat16), lastw[...],
                         preferred_element_type=jnp.float32) + lastb[...]
        else:
            yf = xf
        o_ref[...] = yf.astype(o_ref.dtype)


def transformer_stack(x, ctx, p, *, last_w=None, last_b=None):
    """Run a full (depth-layer) transformer stack as ONE pallas_call.

    x:   [B, Sq, D] f32 residual-stream input.
    ctx: [B, Sk, D] f32 cross-attention context, or None for self-attention (encoder).
    If last_w/last_b are given, the final LayerNorm + nn.Linear are fused into the epilogue.
    """
    B, Sq, D = x.shape
    M = B * Sq
    heads, dim_head = p["heads"], p["dim_head"]
    L = p["wq"].shape[0]
    is_self = ctx is None
    Sk = Sq if is_self else ctx.shape[1]
    Mk = B * Sk
    fuse_out = last_w is not None
    N = last_w.shape[1] if fuse_out else D

    def const(shape):
        nd = len(shape)
        return pl.BlockSpec(shape, lambda l, _nd=nd: (0,) * _nd)

    def per_layer(arr):
        nd = arr.ndim
        return pl.BlockSpec((1,) + arr.shape[1:], lambda l, _nd=nd: (l,) + (0,) * (_nd - 1))

    in_specs = [const((M, D))]
    args = [x.reshape(M, D)]
    if not is_self:
        in_specs.append(const((Mk, D)))
        args.append(ctx.reshape(Mk, D))
    for name in ("ln1_g", "ln1_b", "wq", "wk", "wv", "wo", "bo",
                 "ln2_g", "ln2_b", "w1", "b1", "w2", "b2"):
        in_specs.append(per_layer(p[name]))
        args.append(p[name])
    in_specs += [const((1, D)), const((1, D))]
    args += [p["final_g"], p["final_b"]]
    if fuse_out:
        in_specs += [const((D, N)), const((1, N))]
        args += [last_w, last_b.reshape(1, N)]

    kernel = functools.partial(_stack_kernel, B=B, Sq=Sq, Sk=Sk, heads=heads,
                               dim_head=dim_head, is_self=is_self, fuse_out=fuse_out)

    out = pl.pallas_call(
        kernel,
        out_shape=jax.ShapeDtypeStruct((M, N), jnp.float32),
        grid=(L,),                                   # layer axis is sequential
        in_specs=in_specs,
        out_specs=const((M, N)),
        scratch_shapes=[pltpu.VMEM((M, D), jnp.float32)],   # residual stream, VMEM-resident
        compiler_params=_cparams(("arbitrary",)),
    )(*args)
    return out.reshape(B, Sq, N)


# --------------------------------------------------------------------- final linear ("both")


def _linear_kernel(x_ref, w_ref, b_ref, o_ref):
    o_ref[...] = (jnp.dot(x_ref[...].astype(jnp.bfloat16), w_ref[...],
                          preferred_element_type=jnp.float32) + b_ref[...]
                  ).astype(o_ref.dtype)


def pallas_linear(x2d, w, bias):
    M, D = x2d.shape
    N = w.shape[1]
    TM = _row_tile(M)                                 # >= 2 row tiles when M allows (v7x 2 TCs)
    return pl.pallas_call(
        _linear_kernel,
        out_shape=jax.ShapeDtypeStruct((M, N), jnp.float32),
        grid=(pl.cdiv(M, TM),),
        in_specs=[pl.BlockSpec((TM, D), lambda i: (i, 0)),
                  pl.BlockSpec((D, N), lambda i: (0, 0)),
                  pl.BlockSpec((1, N), lambda i: (0, 0))],
        out_specs=pl.BlockSpec((TM, N), lambda i: (i, 0)),
        compiler_params=_cparams(("parallel",)),
    )(x2d, w, bias.reshape(1, N))


# ----------------------------------------------------------------------- transformer blocks


def encoder_forward(tokens, p):
    """TransformerWrapper(return_embeddings=True) with an Encoder. tokens: [B, S] int32."""
    B, S = tokens.shape
    D = p["tok_emb"].shape[1]
    x = jnp.take(p["tok_emb"], tokens, axis=0)            # token embedding gather (XLA glue)
    pos = p["pos_emb"][:S] * (D ** -0.5)                  # scaled absolute positional embedding
    x = (x + pos[None]).astype(jnp.float32)               # [B, S, D]
    return transformer_stack(x, None, p)                  # one call: L fused layers + final LN


def cross_attention_transformer_encoder(xa, xb, params, context="seq_b"):
    enc_xa = encoder_forward(xa, params["enc_a"])
    enc_xb = encoder_forward(xb, params["enc_b"])

    if context in ("seq_a", "seq_b"):
        cp = params["cross"]
        qin, ctx = (enc_xb, enc_xa) if context == "seq_a" else (enc_xa, enc_xb)
        # one call: L fused cross layers + final LN + last nn.Linear
        return transformer_stack(qin, ctx, cp,
                                 last_w=params["last_w"], last_b=params["last_b"])

    # context == "both": two cross attenders (each with its own fused final LN), concat, linear.
    x1 = transformer_stack(enc_xa, enc_xb, params["cross_b_ctx"])
    x2 = transformer_stack(enc_xb, enc_xa, params["cross_a_ctx"])
    x = jnp.concatenate((x1, x2), axis=1)
    B, S, D = x.shape
    out = pallas_linear(x.reshape(B * S, D), params["last_w"], params["last_b"])
    return out.reshape(B, S, params["last_w"].shape[1])


# ----------------------------------------------------------------------- deterministic init


def _dense(key, shape, scale=0.02):
    # Matmul weights stored in bf16: halves weight HBM traffic, 2x MXU throughput.
    return (jax.random.normal(key, shape, jnp.float32) * scale).astype(jnp.bfloat16)


def _init_stack(key, dim, depth, heads, dim_head, ff_mult=4):
    """Per-layer params stacked along a leading depth axis (streamed one slab per grid step)."""
    inner = heads * dim_head
    hidden = dim * ff_mult
    ks = jax.random.split(key, 6)
    f32 = jnp.float32
    return dict(
        heads=heads, dim_head=dim_head,
        ln1_g=jnp.ones((depth, 1, dim), f32), ln1_b=jnp.zeros((depth, 1, dim), f32),
        # bias-free q/k/v projections (x-transformers default); to_out keeps a bias
        wq=_dense(ks[0], (depth, dim, inner)),
        wk=_dense(ks[1], (depth, dim, inner)),
        wv=_dense(ks[2], (depth, dim, inner)),
        wo=_dense(ks[3], (depth, inner, dim)),
        bo=jnp.zeros((depth, 1, dim), f32),
        ln2_g=jnp.ones((depth, 1, dim), f32), ln2_b=jnp.zeros((depth, 1, dim), f32),
        w1=_dense(ks[4], (depth, dim, hidden)), b1=jnp.zeros((depth, 1, hidden), f32),
        w2=_dense(ks[5], (depth, hidden, dim)), b2=jnp.zeros((depth, 1, dim), f32),
        final_g=jnp.ones((1, dim), f32), final_b=jnp.zeros((1, dim), f32),
    )


def _init_encoder(key, num_tokens, max_seq_len, dim, depth, heads, dim_head):
    k_tok, k_pos, k_stack = jax.random.split(key, 3)
    p = _init_stack(k_stack, dim, depth, heads, dim_head)
    p["tok_emb"] = jax.random.normal(k_tok, (num_tokens, dim), jnp.float32) * 0.02
    p["pos_emb"] = jax.random.normal(k_pos, (max_seq_len, dim), jnp.float32) * 0.02
    return p


def init_model_params(key, emb_dim, num_tokens_a, num_tokens_b, max_seq_len_a,
                      max_seq_len_b, depth_a, depth_b, depth_cross, heads_a,
                      heads_b, heads_cross, dim_head, output_dim, context):
    ks = jax.random.split(key, 6)
    params = dict(
        enc_a=_init_encoder(ks[0], num_tokens_a, max_seq_len_a, emb_dim, depth_a,
                            heads_a, dim_head),
        enc_b=_init_encoder(ks[1], num_tokens_b, max_seq_len_b, emb_dim, depth_b,
                            heads_b, dim_head),
        last_w=_dense(ks[4], (emb_dim, output_dim)),
        last_b=jnp.zeros((output_dim,), jnp.float32),
    )
    if context in ("seq_a", "seq_b"):
        params["cross"] = _init_stack(ks[2], emb_dim, depth_cross, heads_cross, dim_head)
    else:
        params["cross_b_ctx"] = _init_stack(ks[2], emb_dim, depth_cross, heads_cross, dim_head)
        params["cross_a_ctx"] = _init_stack(ks[3], emb_dim, depth_cross, heads_cross, dim_head)
    return params


# ----------------------------------------------------------------------------------- main

if __name__ == "__main__":
    # Small, deterministic config. D = 128 and inner = heads*dim_head = 128 keep every kernel
    # output lane-dense; dim_head = 64 matches the x-transformers library default.
    EMB_DIM = 128
    NUM_TOKENS_A, NUM_TOKENS_B = 50, 60
    MAX_SEQ_A, MAX_SEQ_B = 16, 16
    DEPTH_A = DEPTH_B = DEPTH_X = 2
    HEADS = 2
    DIM_HEAD = 64
    OUTPUT_DIM = 128
    CONTEXT = "seq_b"
    B, SA, SB = 2, 8, 16

    root = jax.random.PRNGKey(0)
    k_params, k_xa, k_xb = jax.random.split(root, 3)

    params = init_model_params(
        k_params, EMB_DIM, NUM_TOKENS_A, NUM_TOKENS_B, MAX_SEQ_A, MAX_SEQ_B,
        DEPTH_A, DEPTH_B, DEPTH_X, HEADS, HEADS, HEADS, DIM_HEAD, OUTPUT_DIM, CONTEXT)

    xa = jax.random.randint(k_xa, (B, SA), 0, NUM_TOKENS_A, dtype=jnp.int32)
    xb = jax.random.randint(k_xb, (B, SB), 0, NUM_TOKENS_B, dtype=jnp.int32)

    out = cross_attention_transformer_encoder(xa, xb, params, context=CONTEXT)
    out = jax.block_until_ready(out)

    expected_seq = SA if CONTEXT in ("seq_a", "seq_b") else SA + SB
    assert out.shape == (B, expected_seq, OUTPUT_DIM), out.shape
    assert bool(jnp.all(jnp.isfinite(out)))
    print("KERNEL_OK")
</pallas_src>

<mosaic_0001>
module attributes {stable_mosaic.version = 11 : i64} {
  func.func @_stack_kernel(%arg0: i32, %arg1: memref<16x128xf32, #tpu.memory_space<vmem>>, %arg2: memref<1x1x128xf32, #tpu.memory_space<vmem>>, %arg3: memref<1x1x128xf32, #tpu.memory_space<vmem>>, %arg4: memref<1x128x128xbf16, #tpu.memory_space<vmem>>, %arg5: memref<1x128x128xbf16, #tpu.memory_space<vmem>>, %arg6: memref<1x128x128xbf16, #tpu.memory_space<vmem>>, %arg7: memref<1x128x128xbf16, #tpu.memory_space<vmem>>, %arg8: memref<1x1x128xf32, #tpu.memory_space<vmem>>, %arg9: memref<1x1x128xf32, #tpu.memory_space<vmem>>, %arg10: memref<1x1x128xf32, #tpu.memory_space<vmem>>, %arg11: memref<1x128x512xbf16, #tpu.memory_space<vmem>>, %arg12: memref<1x1x512xf32, #tpu.memory_space<vmem>>, %arg13: memref<1x512x128xbf16, #tpu.memory_space<vmem>>, %arg14: memref<1x1x128xf32, #tpu.memory_space<vmem>>, %arg15: memref<1x128xf32, #tpu.memory_space<vmem>>, %arg16: memref<1x128xf32, #tpu.memory_space<vmem>>, %arg17: memref<16x128xf32, #tpu.memory_space<vmem>>, %arg18: memref<16x128xf32, #tpu.memory_space<vmem>>) attributes {dimension_semantics = [#tpu.dimension_semantics<arbitrary>], iteration_bounds = array<i64: 2>, scalar_prefetch = 0 : i64, scratch_operands = 1 : i64, tpu.core_type = #tpu.core_type<tc>, window_params = [{pipeline_mode = #tpu.pipeline_mode<synchronous>, transform_indices = @transform_0, window_bounds = array<i64: 16, 128>}, {transform_indices = @transform_1, window_bounds = array<i64: 1, 1, 128>}, {transform_indices = @transform_2, window_bounds = array<i64: 1, 1, 128>}, {transform_indices = @transform_3, window_bounds = array<i64: 1, 128, 128>}, {transform_indices = @transform_4, window_bounds = array<i64: 1, 128, 128>}, {transform_indices = @transform_5, window_bounds = array<i64: 1, 128, 128>}, {transform_indices = @transform_6, window_bounds = array<i64: 1, 128, 128>}, {transform_indices = @transform_7, window_bounds = array<i64: 1, 1, 128>}, {transform_indices = @transform_8, window_bounds = array<i64: 1, 1, 128>}, {transform_indices = @transform_9, window_bounds = array<i64: 1, 1, 128>}, {transform_indices = @transform_10, window_bounds = array<i64: 1, 128, 512>}, {transform_indices = @transform_11, window_bounds = array<i64: 1, 1, 512>}, {transform_indices = @transform_12, window_bounds = array<i64: 1, 512, 128>}, {transform_indices = @transform_13, window_bounds = array<i64: 1, 1, 128>}, {pipeline_mode = #tpu.pipeline_mode<synchronous>, transform_indices = @transform_14, window_bounds = array<i64: 1, 128>}, {pipeline_mode = #tpu.pipeline_mode<synchronous>, transform_indices = @transform_15, window_bounds = array<i64: 1, 128>}, {pipeline_mode = #tpu.pipeline_mode<synchronous>, transform_indices = @transform_16, window_bounds = array<i64: 16, 128>}]} {
    %c0_i32 = arith.constant 0 : i32
    %0 = arith.cmpi eq, %arg0, %c0_i32 : i32
    %1 = arith.extui %0 : i1 to i32
    %c0_i32_0 = arith.constant 0 : i32
    %2 = arith.cmpi ne, %1, %c0_i32_0 : i32
    scf.if %2 {
      %c0_85 = arith.constant 0 : index
      %c0_86 = arith.constant 0 : index
      %196 = vector.load %arg1[%c0_85, %c0_86] : memref<16x128xf32, #tpu.memory_space<vmem>>, vector<16x128xf32>
      %c0_87 = arith.constant 0 : index
      %c0_88 = arith.constant 0 : index
      %197 = vector.load %arg18[%c0_87, %c0_88] : memref<16x128xf32, #tpu.memory_space<vmem>>, vector<16x128xf32>
      tpu.vector_store %arg18[%c0_87, %c0_88], %196 {strides = array<i32>} : memref<16x128xf32, #tpu.memory_space<vmem>>, vector<16x128xf32>,
    } else {
    }
    %c0 = arith.constant 0 : index
    %c0_1 = arith.constant 0 : index
    %3 = vector.load %arg18[%c0, %c0_1] : memref<16x128xf32, #tpu.memory_space<vmem>>, vector<16x128xf32>
    %c0_2 = arith.constant 0 : index
    %c0_3 = arith.constant 0 : index
    %c0_4 = arith.constant 0 : index
    %4 = vector.load %arg2[%c0_2, %c0_3, %c0_4] : memref<1x1x128xf32, #tpu.memory_space<vmem>>, vector<1x1x128xf32>
    %5 = vector.shape_cast %4 : vector<1x1x128xf32> to vector<1x128xf32>
    %c0_5 = arith.constant 0 : index
    %c0_6 = arith.constant 0 : index
    %c0_7 = arith.constant 0 : index
    %6 = vector.load %arg3[%c0_5, %c0_6, %c0_7] : memref<1x1x128xf32, #tpu.memory_space<vmem>>, vector<1x1x128xf32>
    %7 = vector.shape_cast %6 : vector<1x1x128xf32> to vector<1x128xf32>
    %cst = arith.constant dense<0.000000e+00> : vector<16xf32>
    %8 = vector.multi_reduction <add>, %3, %cst [1] : vector<16x128xf32> to vector<16xf32>
    %9 = vector.shape_cast %8 : vector<16xf32> to vector<16x1xf32>
    %cst_8 = arith.constant 1.280000e+02 : f32
    %10 = vector.broadcast %cst_8 : f32 to vector<16x1xf32>
    %11 = arith.divf %9, %10 : vector<16x1xf32>
    %12 = vector.broadcast %11 : vector<16x1xf32> to vector<16x128xf32>
    %13 = arith.subf %3, %12 : vector<16x128xf32>
    %14 = arith.mulf %13, %13 : vector<16x128xf32>
    %cst_9 = arith.constant dense<0.000000e+00> : vector<16xf32>
    %15 = vector.multi_reduction <add>, %14, %cst_9 [1] : vector<16x128xf32> to vector<16xf32>
    %16 = vector.shape_cast %15 : vector<16xf32> to vector<16x1xf32>
    %cst_10 = arith.constant 1.280000e+02 : f32
    %17 = vector.broadcast %cst_10 : f32 to vector<16x1xf32>
    %18 = arith.divf %16, %17 : vector<16x1xf32>
    %19 = vector.broadcast %11 : vector<16x1xf32> to vector<16x128xf32>
    %20 = arith.subf %3, %19 : vector<16x128xf32>
    %cst_11 = arith.constant 9.99999974E-6 : f32
    %21 = vector.broadcast %cst_11 : f32 to vector<16x1xf32>
    %22 = arith.addf %18, %21 : vector<16x1xf32>
    %23 = math.rsqrt %22 : vector<16x1xf32>
    %24 = vector.broadcast %23 : vector<16x1xf32> to vector<16x128xf32>
    %25 = arith.mulf %20, %24 : vector<16x128xf32>
    %26 = vector.broadcast %5 : vector<1x128xf32> to vector<16x128xf32>
    %27 = arith.mulf %25, %26 : vector<16x128xf32>
    %28 = vector.broadcast %7 : vector<1x128xf32> to vector<16x128xf32>
    %29 = arith.addf %27, %28 : vector<16x128xf32>
    %30 = arith.truncf %29 : vector<16x128xf32> to vector<16x128xbf16>
    %c0_12 = arith.constant 0 : index
    %c0_13 = arith.constant 0 : index
    %c0_14 = arith.constant 0 : index
    %31 = vector.load %arg4[%c0_12, %c0_13, %c0_14] : memref<1x128x128xbf16, #tpu.memory_space<vmem>>, vector<1x128x128xbf16>
    %32 = vector.shape_cast %31 : vector<1x128x128xbf16> to vector<128x128xbf16>
    %cst_15 = arith.constant dense<0.000000e+00> : vector<16x128xf32>
    %33 = tpu.matmul %30, %32, %cst_15 {dimension_numbers = #tpu.dot_dimension_numbers<[1], [0], [0], [1], [0, 0, 1, 1], [], []>} : vector<16x128xbf16>, vector<128x128xbf16>, vector<16x128xf32> -> vector<16x128xf32>
    %cst_16 = arith.constant 1.250000e-01 : f32
    %34 = vector.broadcast %cst_16 : f32 to vector<16x128xf32>
    %35 = arith.mulf %33, %34 : vector<16x128xf32>
    %36 = arith.truncf %29 : vector<16x128xf32> to vector<16x128xbf16>
    %c0_17 = arith.constant 0 : index
    %c0_18 = arith.constant 0 : index
    %c0_19 = arith.constant 0 : index
    %37 = vector.load %arg5[%c0_17, %c0_18, %c0_19] : memref<1x128x128xbf16, #tpu.memory_space<vmem>>, vector<1x128x128xbf16>
    %38 = vector.shape_cast %37 : vector<1x128x128xbf16> to vector<128x128xbf16>
    %cst_20 = arith.constant dense<0.000000e+00> : vector<16x128xf32>
    %39 = tpu.matmul %36, %38, %cst_20 {dimension_numbers = #tpu.dot_dimension_numbers<[1], [0], [0], [1], [0, 0, 1, 1], [], []>} : vector<16x128xbf16>, vector<128x128xbf16>, vector<16x128xf32> -> vector<16x128xf32>
    %40 = arith.truncf %29 : vector<16x128xf32> to vector<16x128xbf16>
    %c0_21 = arith.constant 0 : index
    %c0_22 = arith.constant 0 : index
    %c0_23 = arith.constant 0 : index
    %41 = vector.load %arg6[%c0_21, %c0_22, %c0_23] : memref<1x128x128xbf16, #tpu.memory_space<vmem>>, vector<1x128x128xbf16>
    %42 = vector.shape_cast %41 : vector<1x128x128xbf16> to vector<128x128xbf16>
    %cst_24 = arith.constant dense<0.000000e+00> : vector<16x128xf32>
    %43 = tpu.matmul %40, %42, %cst_24 {dimension_numbers = #tpu.dot_dimension_numbers<[1], [0], [0], [1], [0, 0, 1, 1], [], []>} : vector<16x128xbf16>, vector<128x128xbf16>, vector<16x128xf32> -> vector<16x128xf32>
    %cst_25 = arith.constant 0.000000e+00 : f32
    %44 = vector.broadcast %cst_25 : f32 to vector<16x128xf32>
    %c0_26 = arith.constant 0 : index
    %c0_27 = arith.constant 0 : index
    %c0_28 = arith.constant 0 : index
    %45 = vector.load %arg7[%c0_26, %c0_27, %c0_28] : memref<1x128x128xbf16, #tpu.memory_space<vmem>>, vector<1x128x128xbf16>
    %46 = vector.shape_cast %45 : vector<1x128x128xbf16> to vector<128x128xbf16>
    %47 = vector.extract_strided_slice %46 {offsets = [0, 0], sizes = [64, 128], strides = [1, 1]} : vector<128x128xbf16> to vector<64x128xbf16>
    %48 = vector.extract_strided_slice %35 {offsets = [0, 0], sizes = [8, 64], strides = [1, 1]} : vector<16x128xf32> to vector<8x64xf32>
    %49 = arith.truncf %48 : vector<8x64xf32> to vector<8x64xbf16>
    %50 = vector.extract_strided_slice %39 {offsets = [0, 0], sizes = [8, 64], strides = [1, 1]} : vector<16x128xf32> to vector<8x64xf32>
    %51 = arith.truncf %50 : vector<8x64xf32> to vector<8x64xbf16>
    %52 = vector.extract_strided_slice %43 {offsets = [0, 0], sizes = [8, 64], strides = [1, 1]} : vector<16x128xf32> to vector<8x64xf32>
    %53 = arith.truncf %52 : vector<8x64xf32> to vector<8x64xbf16>
    %cst_29 = arith.constant dense<0.000000e+00> : vector<8x8xf32>
    %54 = tpu.matmul %49, %51, %cst_29 {dimension_numbers = #tpu.dot_dimension_numbers<[1], [1], [0], [0], [0, 0, 1, 0], [], []>} : vector<8x64xbf16>, vector<8x64xbf16>, vector<8x8xf32> -> vector<8x8xf32>
    %cst_30 = arith.constant dense<0xFF800000> : vector<8xf32>
    %55 = vector.multi_reduction <maximumf>, %54, %cst_30 [1] : vector<8x8xf32> to vector<8xf32>
    %56 = vector.shape_cast %55 : vector<8xf32> to vector<8x1xf32>
    %57 = vector.broadcast %56 : vector<8x1xf32> to vector<8x8xf32>
    %58 = arith.subf %54, %57 : vector<8x8xf32>
    %59 = math.exp %58 : vector<8x8xf32>
    %cst_31 = arith.constant dense<0.000000e+00> : vector<8xf32>
    %60 = vector.multi_reduction <add>, %59, %cst_31 [1] : vector<8x8xf32> to vector<8xf32>
    %61 = vector.shape_cast %60 : vector<8xf32> to vector<8x1xf32>
    %62 = vector.broadcast %61 : vector<8x1xf32> to vector<8x8xf32>
    %63 = arith.divf %59, %62 : vector<8x8xf32>
    %64 = arith.truncf %63 : vector<8x8xf32> to vector<8x8xbf16>
    %cst_32 = arith.constant dense<0.000000e+00> : vector<8x64xf32>
    %65 = tpu.matmul %64, %53, %cst_32 {dimension_numbers = #tpu.dot_dimension_numbers<[1], [0], [0], [1], [0, 0, 1, 1], [], []>} : vector<8x8xbf16>, vector<8x64xbf16>, vector<8x64xf32> -> vector<8x64xf32>
    %66 = vector.extract_strided_slice %35 {offsets = [8, 0], sizes = [8, 64], strides = [1, 1]} : vector<16x128xf32> to vector<8x64xf32>
    %67 = arith.truncf %66 : vector<8x64xf32> to vector<8x64xbf16>
    %68 = vector.extract_strided_slice %39 {offsets = [8, 0], sizes = [8, 64], strides = [1, 1]} : vector<16x128xf32> to vector<8x64xf32>
    %69 = arith.truncf %68 : vector<8x64xf32> to vector<8x64xbf16>
    %70 = vector.extract_strided_slice %43 {offsets = [8, 0], sizes = [8, 64], strides = [1, 1]} : vector<16x128xf32> to vector<8x64xf32>
    %71 = arith.truncf %70 : vector<8x64xf32> to vector<8x64xbf16>
    %cst_33 = arith.constant dense<0.000000e+00> : vector<8x8xf32>
    %72 = tpu.matmul %67, %69, %cst_33 {dimension_numbers = #tpu.dot_dimension_numbers<[1], [1], [0], [0], [0, 0, 1, 0], [], []>} : vector<8x64xbf16>, vector<8x64xbf16>, vector<8x8xf32> -> vector<8x8xf32>
    %cst_34 = arith.constant dense<0xFF800000> : vector<8xf32>
    %73 = vector.multi_reduction <maximumf>, %72, %cst_34 [1] : vector<8x8xf32> to vector<8xf32>
    %74 = vector.shape_cast %73 : vector<8xf32> to vector<8x1xf32>
    %75 = vector.broadcast %74 : vector<8x1xf32> to vector<8x8xf32>
    %76 = arith.subf %72, %75 : vector<8x8xf32>
    %77 = math.exp %76 : vector<8x8xf32>
    %cst_35 = arith.constant dense<0.000000e+00> : vector<8xf32>
    %78 = vector.multi_reduction <add>, %77, %cst_35 [1] : vector<8x8xf32> to vector<8xf32>
    %79 = vector.shape_cast %78 : vector<8xf32> to vector<8x1xf32>
    %80 = vector.broadcast %79 : vector<8x1xf32> to vector<8x8xf32>
    %81 = arith.divf %77, %80 : vector<8x8xf32>
    %82 = arith.truncf %81 : vector<8x8xf32> to vector<8x8xbf16>
    %cst_36 = arith.constant dense<0.000000e+00> : vector<8x64xf32>
    %83 = tpu.matmul %82, %71, %cst_36 {dimension_numbers = #tpu.dot_dimension_numbers<[1], [0], [0], [1], [0, 0, 1, 1], [], []>} : vector<8x8xbf16>, vector<8x64xbf16>, vector<8x64xf32> -> vector<8x64xf32>
    %84 = tpu.concatenate %65, %83 in 0 : vector<8x64xf32>, vector<8x64xf32> -> vector<16x64xf32>
    %85 = arith.truncf %84 : vector<16x64xf32> to vector<16x64xbf16>
    %cst_37 = arith.constant dense<0.000000e+00> : vector<16x128xf32>
    %86 = tpu.matmul %85, %47, %cst_37 {dimension_numbers = #tpu.dot_dimension_numbers<[1], [0], [0], [1], [0, 0, 1, 1], [], []>} : vector<16x64xbf16>, vector<64x128xbf16>, vector<16x128xf32> -> vector<16x128xf32>
    %87 = arith.addf %44, %86 : vector<16x128xf32>
    %c0_38 = arith.constant 0 : index
    %c0_39 = arith.constant 0 : index
    %c0_40 = arith.constant 0 : index
    %88 = vector.load %arg7[%c0_38, %c0_39, %c0_40] : memref<1x128x128xbf16, #tpu.memory_space<vmem>>, vector<1x128x128xbf16>
    %89 = vector.shape_cast %88 : vector<1x128x128xbf16> to vector<128x128xbf16>
    %90 = vector.extract_strided_slice %89 {offsets = [64, 0], sizes = [64, 128], strides = [1, 1]} : vector<128x128xbf16> to vector<64x128xbf16>
    %91 = vector.extract_strided_slice %35 {offsets = [0, 64], sizes = [8, 64], strides = [1, 1]} : vector<16x128xf32> to vector<8x64xf32>
    %92 = arith.truncf %91 : vector<8x64xf32> to vector<8x64xbf16>
    %93 = vector.extract_strided_slice %39 {offsets = [0, 64], sizes = [8, 64], strides = [1, 1]} : vector<16x128xf32> to vector<8x64xf32>
    %94 = arith.truncf %93 : vector<8x64xf32> to vector<8x64xbf16>
    %95 = vector.extract_strided_slice %43 {offsets = [0, 64], sizes = [8, 64], strides = [1, 1]} : vector<16x128xf32> to vector<8x64xf32>
    %96 = arith.truncf %95 : vector<8x64xf32> to vector<8x64xbf16>
    %cst_41 = arith.constant dense<0.000000e+00> : vector<8x8xf32>
    %97 = tpu.matmul %92, %94, %cst_41 {dimension_numbers = #tpu.dot_dimension_numbers<[1], [1], [0], [0], [0, 0, 1, 0], [], []>} : vector<8x64xbf16>, vector<8x64xbf16>, vector<8x8xf32> -> vector<8x8xf32>
    %cst_42 = arith.constant dense<0xFF800000> : vector<8xf32>
    %98 = vector.multi_reduction <maximumf>, %97, %cst_42 [1] : vector<8x8xf32> to vector<8xf32>
    %99 = vector.shape_cast %98 : vector<8xf32> to vector<8x1xf32>
    %100 = vector.broadcast %99 : vector<8x1xf32> to vector<8x8xf32>
    %101 = arith.subf %97, %100 : vector<8x8xf32>
    %102 = math.exp %101 : vector<8x8xf32>
    %cst_43 = arith.constant dense<0.000000e+00> : vector<8xf32>
    %103 = vector.multi_reduction <add>, %102, %cst_43 [1] : vector<8x8xf32> to vector<8xf32>
    %104 = vector.shape_cast %103 : vector<8xf32> to vector<8x1xf32>
    %105 = vector.broadcast %104 : vector<8x1xf32> to vector<8x8xf32>
    %106 = arith.divf %102, %105 : vector<8x8xf32>
    %107 = arith.truncf %106 : vector<8x8xf32> to vector<8x8xbf16>
    %cst_44 = arith.constant dense<0.000000e+00> : vector<8x64xf32>
    %108 = tpu.matmul %107, %96, %cst_44 {dimension_numbers = #tpu.dot_dimension_numbers<[1], [0], [0], [1], [0, 0, 1, 1], [], []>} : vector<8x8xbf16>, vector<8x64xbf16>, vector<8x64xf32> -> vector<8x64xf32>
    %109 = vector.extract_strided_slice %35 {offsets = [8, 64], sizes = [8, 64], strides = [1, 1]} : vector<16x128xf32> to vector<8x64xf32>
    %110 = arith.truncf %109 : vector<8x64xf32> to vector<8x64xbf16>
    %111 = vector.extract_strided_slice %39 {offsets = [8, 64], sizes = [8, 64], strides = [1, 1]} : vector<16x128xf32> to vector<8x64xf32>
    %112 = arith.truncf %111 : vector<8x64xf32> to vector<8x64xbf16>
    %113 = vector.extract_strided_slice %43 {offsets = [8, 64], sizes = [8, 64], strides = [1, 1]} : vector<16x128xf32> to vector<8x64xf32>
    %114 = arith.truncf %113 : vector<8x64xf32> to vector<8x64xbf16>
    %cst_45 = arith.constant dense<0.000000e+00> : vector<8x8xf32>
    %115 = tpu.matmul %110, %112, %cst_45 {dimension_numbers = #tpu.dot_dimension_numbers<[1], [1], [0], [0], [0, 0, 1, 0], [], []>} : vector<8x64xbf16>, vector<8x64xbf16>, vector<8x8xf32> -> vector<8x8xf32>
    %cst_46 = arith.constant dense<0xFF800000> : vector<8xf32>
    %116 = vector.multi_reduction <maximumf>, %115, %cst_46 [1] : vector<8x8xf32> to vector<8xf32>
    %117 = vector.shape_cast %116 : vector<8xf32> to vector<8x1xf32>
    %118 = vector.broadcast %117 : vector<8x1xf32> to vector<8x8xf32>
    %119 = arith.subf %115, %118 : vector<8x8xf32>
    %120 = math.exp %119 : vector<8x8xf32>
    %cst_47 = arith.constant dense<0.000000e+00> : vector<8xf32>
    %121 = vector.multi_reduction <add>, %120, %cst_47 [1] : vector<8x8xf32> to vector<8xf32>
    %122 = vector.shape_cast %121 : vector<8xf32> to vector<8x1xf32>
    %123 = vector.broadcast %122 : vector<8x1xf32> to vector<8x8xf32>
    %124 = arith.divf %120, %123 : vector<8x8xf32>
    %125 = arith.truncf %124 : vector<8x8xf32> to vector<8x8xbf16>
    %cst_48 = arith.constant dense<0.000000e+00> : vector<8x64xf32>
    %126 = tpu.matmul %125, %114, %cst_48 {dimension_numbers = #tpu.dot_dimension_numbers<[1], [0], [0], [1], [0, 0, 1, 1], [], []>} : vector<8x8xbf16>, vector<8x64xbf16>, vector<8x64xf32> -> vector<8x64xf32>
    %127 = tpu.concatenate %108, %126 in 0 : vector<8x64xf32>, vector<8x64xf32> -> vector<16x64xf32>
    %128 = arith.truncf %127 : vector<16x64xf32> to vector<16x64xbf16>
    %cst_49 = arith.constant dense<0.000000e+00> : vector<16x128xf32>
    %129 = tpu.matmul %128, %90, %cst_49 {dimension_numbers = #tpu.dot_dimension_numbers<[1], [0], [0], [1], [0, 0, 1, 1], [], []>} : vector<16x64xbf16>, vector<64x128xbf16>, vector<16x128xf32> -> vector<16x128xf32>
    %130 = arith.addf %87, %129 : vector<16x128xf32>
    %131 = arith.addf %3, %130 : vector<16x128xf32>
    %c0_50 = arith.constant 0 : index
    %c0_51 = arith.constant 0 : index
    %c0_52 = arith.constant 0 : index
    %132 = vector.load %arg8[%c0_50, %c0_51, %c0_52] : memref<1x1x128xf32, #tpu.memory_space<vmem>>, vector<1x1x128xf32>
    %133 = vector.shape_cast %132 : vector<1x1x128xf32> to vector<1x128xf32>
    %134 = vector.broadcast %133 : vector<1x128xf32> to vector<16x128xf32>
    %135 = arith.addf %131, %134 : vector<16x128xf32>
    %c0_53 = arith.constant 0 : index
    %c0_54 = arith.constant 0 : index
    %c0_55 = arith.constant 0 : index
    %136 = vector.load %arg9[%c0_53, %c0_54, %c0_55] : memref<1x1x128xf32, #tpu.memory_space<vmem>>, vector<1x1x128xf32>
    %137 = vector.shape_cast %136 : vector<1x1x128xf32> to vector<1x128xf32>
    %c0_56 = arith.constant 0 : index
    %c0_57 = arith.constant 0 : index
    %c0_58 = arith.constant 0 : index
    %138 = vector.load %arg10[%c0_56, %c0_57, %c0_58] : memref<1x1x128xf32, #tpu.memory_space<vmem>>, vector<1x1x128xf32>
    %139 = vector.shape_cast %138 : vector<1x1x128xf32> to vector<1x128xf32>
    %cst_59 = arith.constant dense<0.000000e+00> : vector<16xf32>
    %140 = vector.multi_reduction <add>, %135, %cst_59 [1] : vector<16x128xf32> to vector<16xf32>
    %141 = vector.shape_cast %140 : vector<16xf32> to vector<16x1xf32>
    %cst_60 = arith.constant 1.280000e+02 : f32
    %142 = vector.broadcast %cst_60 : f32 to vector<16x1xf32>
    %143 = arith.divf %141, %142 : vector<16x1xf32>
    %144 = vector.broadcast %143 : vector<16x1xf32> to vector<16x128xf32>
    %145 = arith.subf %135, %144 : vector<16x128xf32>
    %146 = arith.mulf %145, %145 : vector<16x128xf32>
    %cst_61 = arith.constant dense<0.000000e+00> : vector<16xf32>
    %147 = vector.multi_reduction <add>, %146, %cst_61 [1] : vector<16x128xf32> to vector<16xf32>
    %148 = vector.shape_cast %147 : vector<16xf32> to vector<16x1xf32>
    %cst_62 = arith.constant 1.280000e+02 : f32
    %149 = vector.broadcast %cst_62 : f32 to vector<16x1xf32>
    %150 = arith.divf %148, %149 : vector<16x1xf32>
    %151 = vector.broadcast %143 : vector<16x1xf32> to vector<16x128xf32>
    %152 = arith.subf %135, %151 : vector<16x128xf32>
    %cst_63 = arith.constant 9.99999974E-6 : f32
    %153 = vector.broadcast %cst_63 : f32 to vector<16x1xf32>
    %154 = arith.addf %150, %153 : vector<16x1xf32>
    %155 = math.rsqrt %154 : vector<16x1xf32>
    %156 = vector.broadcast %155 : vector<16x1xf32> to vector<16x128xf32>
    %157 = arith.mulf %152, %156 : vector<16x128xf32>
    %158 = vector.broadcast %137 : vector<1x128xf32> to vector<16x128xf32>
    %159 = arith.mulf %157, %158 : vector<16x128xf32>
    %160 = vector.broadcast %139 : vector<1x128xf32> to vector<16x128xf32>
    %161 = arith.addf %159, %160 : vector<16x128xf32>
    %162 = arith.truncf %161 : vector<16x128xf32> to vector<16x128xbf16>
    %c0_64 = arith.constant 0 : index
    %c0_65 = arith.constant 0 : index
    %c0_66 = arith.constant 0 : index
    %163 = vector.load %arg11[%c0_64, %c0_65, %c0_66] : memref<1x128x512xbf16, #tpu.memory_space<vmem>>, vector<1x128x512xbf16>
    %164 = vector.shape_cast %163 : vector<1x128x512xbf16> to vector<128x512xbf16>
    %cst_67 = arith.constant dense<0.000000e+00> : vector<16x512xf32>
    %165 = tpu.matmul %162, %164, %cst_67 {dimension_numbers = #tpu.dot_dimension_numbers<[1], [0], [0], [1], [0, 0, 1, 1], [], []>} : vector<16x128xbf16>, vector<128x512xbf16>, vector<16x512xf32> -> vector<16x512xf32>
    %c0_68 = arith.constant 0 : index
    %c0_69 = arith.constant 0 : index
    %c0_70 = arith.constant 0 : index
    %166 = vector.load %arg12[%c0_68, %c0_69, %c0_70] : memref<1x1x512xf32, #tpu.memory_space<vmem>>, vector<1x1x512xf32>
    %167 = vector.shape_cast %166 : vector<1x1x512xf32> to vector<1x512xf32>
    %168 = vector.broadcast %167 : vector<1x512xf32> to vector<16x512xf32>
    %169 = arith.addf %165, %168 : vector<16x512xf32>
    %170 = arith.mulf %169, %169 : vector<16x512xf32>
    %171 = arith.mulf %169, %170 : vector<16x512xf32>
    %cst_71 = arith.constant 4.471500e-02 : f32
    %172 = vector.broadcast %cst_71 : f32 to vector<16x512xf32>
    %173 = arith.mulf %172, %171 : vector<16x512xf32>
    %174 = arith.addf %169, %173 : vector<16x512xf32>
    %cst_72 = arith.constant 0.797884583 : f32
    %175 = vector.broadcast %cst_72 : f32 to vector<16x512xf32>
    %176 = arith.mulf %175, %174 : vector<16x512xf32>
    %177 = math.tanh %176 : vector<16x512xf32>
    %cst_73 = arith.constant 1.000000e+00 : f32
    %178 = vector.broadcast %cst_73 : f32 to vector<16x512xf32>
    %179 = arith.addf %178, %177 : vector<16x512xf32>
    %cst_74 = arith.constant 5.000000e-01 : f32
    %180 = vector.broadcast %cst_74 : f32 to vector<16x512xf32>
    %181 = arith.mulf %180, %179 : vector<16x512xf32>
    %182 = arith.mulf %169, %181 : vector<16x512xf32>
    %183 = arith.truncf %182 : vector<16x512xf32> to vector<16x512xbf16>
    %c0_75 = arith.constant 0 : index
    %c0_76 = arith.constant 0 : index
    %c0_77 = arith.constant 0 : index
    %184 = vector.load %arg13[%c0_75, %c0_76, %c0_77] : memref<1x512x128xbf16, #tpu.memory_space<vmem>>, vector<1x512x128xbf16>
    %185 = vector.shape_cast %184 : vector<1x512x128xbf16> to vector<512x128xbf16>
    %cst_78 = arith.constant dense<0.000000e+00> : vector<16x128xf32>
    %186 = tpu.matmul %183, %185, %cst_78 {dimension_numbers = #tpu.dot_dimension_numbers<[1], [0], [0], [1], [0, 0, 1, 1], [], []>} : vector<16x512xbf16>, vector<512x128xbf16>, vector<16x128xf32> -> vector<16x128xf32>
    %c0_79 = arith.constant 0 : index
    %c0_80 = arith.constant 0 : index
    %c0_81 = arith.constant 0 : index
    %187 = vector.load %arg14[%c0_79, %c0_80, %c0_81] : memref<1x1x128xf32, #tpu.memory_space<vmem>>, vector<1x1x128xf32>
    %188 = vector.shape_cast %187 : vector<1x1x128xf32> to vector<1x128xf32>
    %189 = vector.broadcast %188 : vector<1x128xf32> to vector<16x128xf32>
    %190 = arith.addf %186, %189 : vector<16x128xf32>
    %191 = arith.addf %135, %190 : vector<16x128xf32>
    %c0_82 = arith.constant 0 : index
    %c0_83 = arith.constant 0 : index
    %192 = vector.load %arg18[%c0_82, %c0_83] : memref<16x128xf32, #tpu.memory_space<vmem>>, vector<16x128xf32>
    tpu.vector_store %arg18[%c0_82, %c0_83], %191 {strides = array<i32>} : memref<16x128xf32, #tpu.memory_space<vmem>>, vector<16x128xf32>,
    %c1_i32 = arith.constant 1 : i32
    %193 = arith.cmpi eq, %arg0, %c1_i32 : i32
    %194 = arith.extui %193 : i1 to i32
    %c0_i32_84 = arith.constant 0 : i32
    %195 = arith.cmpi ne, %194, %c0_i32_84 : i32
    scf.if %195 {
      %c0_85 = arith.constant 0 : index
      %c0_86 = arith.constant 0 : index
      %196 = vector.load %arg15[%c0_85, %c0_86] : memref<1x128xf32, #tpu.memory_space<vmem>>, vector<1x128xf32>
      %c0_87 = arith.constant 0 : index
      %c0_88 = arith.constant 0 : index
      %197 = vector.load %arg16[%c0_87, %c0_88] : memref<1x128xf32, #tpu.memory_space<vmem>>, vector<1x128xf32>
      %cst_89 = arith.constant dense<0.000000e+00> : vector<16xf32>
      %198 = vector.multi_reduction <add>, %191, %cst_89 [1] : vector<16x128xf32> to vector<16xf32>
      %199 = vector.shape_cast %198 : vector<16xf32> to vector<16x1xf32>
      %cst_90 = arith.constant 1.280000e+02 : f32
      %200 = vector.broadcast %cst_90 : f32 to vector<16x1xf32>
      %201 = arith.divf %199, %200 : vector<16x1xf32>
      %202 = vector.broadcast %201 : vector<16x1xf32> to vector<16x128xf32>
      %203 = arith.subf %191, %202 : vector<16x128xf32>
      %204 = arith.mulf %203, %203 : vector<16x128xf32>
      %cst_91 = arith.constant dense<0.000000e+00> : vector<16xf32>
      %205 = vector.multi_reduction <add>, %204, %cst_91 [1] : vector<16x128xf32> to vector<16xf32>
      %206 = vector.shape_cast %205 : vector<16xf32> to vector<16x1xf32>
      %cst_92 = arith.constant 1.280000e+02 : f32
      %207 = vector.broadcast %cst_92 : f32 to vector<16x1xf32>
      %208 = arith.divf %206, %207 : vector<16x1xf32>
      %209 = vector.broadcast %201 : vector<16x1xf32> to vector<16x128xf32>
      %210 = arith.subf %191, %209 : vector<16x128xf32>
      %cst_93 = arith.constant 9.99999974E-6 : f32
      %211 = vector.broadcast %cst_93 : f32 to vector<16x1xf32>
      %212 = arith.addf %208, %211 : vector<16x1xf32>
      %213 = math.rsqrt %212 : vector<16x1xf32>
      %214 = vector.broadcast %213 : vector<16x1xf32> to vector<16x128xf32>
      %215 = arith.mulf %210, %214 : vector<16x128xf32>
      %216 = vector.broadcast %196 : vector<1x128xf32> to vector<16x128xf32>
      %217 = arith.mulf %215, %216 : vector<16x128xf32>
      %218 = vector.broadcast %197 : vector<1x128xf32> to vector<16x128xf32>
      %219 = arith.addf %217, %218 : vector<16x128xf32>
      %c0_94 = arith.constant 0 : index
      %c0_95 = arith.constant 0 : index
      %220 = vector.load %arg17[%c0_94, %c0_95] : memref<16x128xf32, #tpu.memory_space<vmem>>, vector<16x128xf32>
      tpu.vector_store %arg17[%c0_94, %c0_95], %219 {strides = array<i32>} : memref<16x128xf32, #tpu.memory_space<vmem>>, vector<16x128xf32>,
    } else {
    }
    return
  }
  func.func @transform_0(%arg0: i32) -> (i32, i32) {
    %c0_i32 = arith.constant 0 : i32
    %c0_i32_0 = arith.constant 0 : i32
    %c0_i32_1 = arith.constant 0 : i32
    return %c0_i32, %c0_i32_0 : i32, i32
  }
  func.func @transform_1(%arg0: i32) -> (i32, i32, i32) {
    %c0_i32 = arith.constant 0 : i32
    %c0_i32_0 = arith.constant 0 : i32
    %c0_i32_1 = arith.constant 0 : i32
    return %arg0, %c0_i32, %c0_i32_0 : i32, i32, i32
  }
  func.func @transform_2(%arg0: i32) -> (i32, i32, i32) {
    %c0_i32 = arith.constant 0 : i32
    %c0_i32_0 = arith.constant 0 : i32
    %c0_i32_1 = arith.constant 0 : i32
    return %arg0, %c0_i32, %c0_i32_0 : i32, i32, i32
  }
  func.func @transform_3(%arg0: i32) -> (i32, i32, i32) {
    %c0_i32 = arith.constant 0 : i32
    %c0_i32_0 = arith.constant 0 : i32
    %c0_i32_1 = arith.constant 0 : i32
    return %arg0, %c0_i32, %c0_i32_0 : i32, i32, i32
  }
  func.func @transform_4(%arg0: i32) -> (i32, i32, i32) {
    %c0_i32 = arith.constant 0 : i32
    %c0_i32_0 = arith.constant 0 : i32
    %c0_i32_1 = arith.constant 0 : i32
    return %arg0, %c0_i32, %c0_i32_0 : i32, i32, i32
  }
  func.func @transform_5(%arg0: i32) -> (i32, i32, i32) {
    %c0_i32 = arith.constant 0 : i32
    %c0_i32_0 = arith.constant 0 : i32
    %c0_i32_1 = arith.constant 0 : i32
    return %arg0, %c0_i32, %c0_i32_0 : i32, i32, i32
  }
  func.func @transform_6(%arg0: i32) -> (i32, i32, i32) {
    %c0_i32 = arith.constant 0 : i32
    %c0_i32_0 = arith.constant 0 : i32
    %c0_i32_1 = arith.constant 0 : i32
    return %arg0, %c0_i32, %c0_i32_0 : i32, i32, i32
  }
  func.func @transform_7(%arg0: i32) -> (i32, i32, i32) {
    %c0_i32 = arith.constant 0 : i32
    %c0_i32_0 = arith.constant 0 : i32
    %c0_i32_1 = arith.constant 0 : i32
    return %arg0, %c0_i32, %c0_i32_0 : i32, i32, i32
  }
  func.func @transform_8(%arg0: i32) -> (i32, i32, i32) {
    %c0_i32 = arith.constant 0 : i32
    %c0_i32_0 = arith.constant 0 : i32
    %c0_i32_1 = arith.constant 0 : i32
    return %arg0, %c0_i32, %c0_i32_0 : i32, i32, i32
  }
  func.func @transform_9(%arg0: i32) -> (i32, i32, i32) {
    %c0_i32 = arith.constant 0 : i32
    %c0_i32_0 = arith.constant 0 : i32
    %c0_i32_1 = arith.constant 0 : i32
    return %arg0, %c0_i32, %c0_i32_0 : i32, i32, i32
  }
  func.func @transform_10(%arg0: i32) -> (i32, i32, i32) {
    %c0_i32 = arith.constant 0 : i32
    %c0_i32_0 = arith.constant 0 : i32
    %c0_i32_1 = arith.constant 0 : i32
    return %arg0, %c0_i32, %c0_i32_0 : i32, i32, i32
  }
  func.func @transform_11(%arg0: i32) -> (i32, i32, i32) {
    %c0_i32 = arith.constant 0 : i32
    %c0_i32_0 = arith.constant 0 : i32
    %c0_i32_1 = arith.constant 0 : i32
    return %arg0, %c0_i32, %c0_i32_0 : i32, i32, i32
  }
  func.func @transform_12(%arg0: i32) -> (i32, i32, i32) {
    %c0_i32 = arith.constant 0 : i32
    %c0_i32_0 = arith.constant 0 : i32
    %c0_i32_1 = arith.constant 0 : i32
    return %arg0, %c0_i32, %c0_i32_0 : i32, i32, i32
  }
  func.func @transform_13(%arg0: i32) -> (i32, i32, i32) {
    %c0_i32 = arith.constant 0 : i32
    %c0_i32_0 = arith.constant 0 : i32
    %c0_i32_1 = arith.constant 0 : i32
    return %arg0, %c0_i32, %c0_i32_0 : i32, i32, i32
  }
  func.func @transform_14(%arg0: i32) -> (i32, i32) {
    %c0_i32 = arith.constant 0 : i32
    %c0_i32_0 = arith.constant 0 : i32
    %c0_i32_1 = arith.constant 0 : i32
    return %c0_i32, %c0_i32_0 : i32, i32
  }
  func.func @transform_15(%arg0: i32) -> (i32, i32) {
    %c0_i32 = arith.constant 0 : i32
    %c0_i32_0 = arith.constant 0 : i32
    %c0_i32_1 = arith.constant 0 : i32
    return %c0_i32, %c0_i32_0 : i32, i32
  }
  func.func @transform_16(%arg0: i32) -> (i32, i32) {
    %c0_i32 = arith.constant 0 : i32
    %c0_i32_0 = arith.constant 0 : i32
    %c0_i32_1 = arith.constant 0 : i32
    return %c0_i32, %c0_i32_0 : i32, i32
  }
}

</mosaic_0001>

<llo_original>
// kernel: tpu_custom_call.1
$region0: #{tpu_custom_call.1}
  #allocation0 [shape = 'u32[]', space=smem, size = 0x4, offset = 0x4, fixed_abs, tag = 'smem constant byte address 0x4 - core index']
  #allocation1 [shape = 'u32[144,128]{1,0:T(1,128)}', space=vmem, size = 0x12000, scoped, tag = 'internal scratch']
  #allocation2 [shape = 'f32[16,128]{1,0:T(8,128)}', space=vmem, size = 0x2000, scoped, tag = 'scratch operand']
  %s0 = inlined_call_operand.hbm [shape: f32[16,128], index: 0, kind: input, shape index: {}]
  %s1 = inlined_call_operand.vmem [shape: f32[2,1,128], index: 1, kind: input, shape index: {}]
  %s2 = inlined_call_operand.vmem [shape: f32[2,1,128], index: 2, kind: input, shape index: {}]
  %s3 = inlined_call_operand.hbm [shape: bf16[2,128,128], index: 3, kind: input, shape index: {}]
  %s4 = inlined_call_operand.hbm [shape: bf16[2,128,128], index: 4, kind: input, shape index: {}]
  %s5 = inlined_call_operand.hbm [shape: bf16[2,128,128], index: 5, kind: input, shape index: {}]
  %s6 = inlined_call_operand.hbm [shape: bf16[2,128,128], index: 6, kind: input, shape index: {}]
  %s7 = inlined_call_operand.vmem [shape: f32[2,1,128], index: 7, kind: input, shape index: {}]
  %s8 = inlined_call_operand.vmem [shape: f32[2,1,128], index: 8, kind: input, shape index: {}]
  %s9 = inlined_call_operand.vmem [shape: f32[2,1,128], index: 9, kind: input, shape index: {}]
  %s10 = inlined_call_operand.hbm [shape: bf16[2,128,512], index: 10, kind: input, shape index: {}]
  %s11 = inlined_call_operand.vmem [shape: f32[2,1,512], index: 11, kind: input, shape index: {}]
  %s12 = inlined_call_operand.hbm [shape: bf16[2,512,128], index: 12, kind: input, shape index: {}]
  %s13 = inlined_call_operand.vmem [shape: f32[2,1,128], index: 13, kind: input, shape index: {}]
  %s14 = inlined_call_operand.vmem [shape: f32[1,128], index: 14, kind: input, shape index: {}]
  %s15 = inlined_call_operand.vmem [shape: f32[1,128], index: 15, kind: input, shape index: {}]
  %s16 = inlined_call_operand.hbm [shape: f32[16,128], index: 16, kind: output, shape index: {}]
  %s17 = sld [smem:[#allocation0]]
  $region133: #{tpu_custom_call.1} parent=0
    _
  %s19 = ssub.s32 1, %s17
  %s20 = scalar_select 0, %s19, %s17
  $region1: #{tpu_custom_call.1} parent=0
    #allocation3 [shape = 'u8[8192]{0}', space=vmem, size = 0x2000, scoped, tag = 'input window, operand 0, single buffered']
    #allocation4 [shape = 's32[2]{0}', space=sflag, size = 0x8, scoped, tag = 'scoped memory for tpu_custom_call.1']
    #allocation5 [shape = 's32[2]{0}', space=sflag, size = 0x8, scoped, tag = 'scoped memory for tpu_custom_call.1']
    #allocation6 [shape = 'u8[65536]{0}', space=vmem, size = 0x10000, scoped, tag = 'input window, operand 3']
    #allocation7 [shape = 's32[2]{0}', space=sflag, size = 0x8, scoped, tag = 'scoped memory for tpu_custom_call.1']
    #allocation8 [shape = 'u8[65536]{0}', space=vmem, size = 0x10000, scoped, tag = 'input window, operand 4']
    #allocation9 [shape = 'u8[65536]{0}', space=vmem, size = 0x10000, scoped, tag = 'input window, operand 5']
    #allocation10 [shape = 's32[2]{0}', space=sflag, size = 0x8, scoped, tag = 'scoped memory for tpu_custom_call.1']
    #allocation11 [shape = 'u8[65536]{0}', space=vmem, size = 0x10000, scoped, tag = 'input window, operand 6']
    #allocation12 [shape = 'u8[262144]{0}', space=vmem, size = 0x40000, scoped, tag = 'input window, operand 10']
    #allocation13 [shape = 's32[2]{0}', space=sflag, size = 0x8, scoped, tag = 'scoped memory for tpu_custom_call.1']
    #allocation14 [shape = 'u8[262144]{0}', space=vmem, size = 0x40000, scoped, tag = 'input window, operand 12']
    #allocation15 [shape = 'u8[8192]{0}', space=vmem, size = 0x2000, scoped, tag = 'output window, operand 0, single buffered']
    %21 = vsyncpa [#allocation4], 0
    %22 = vsyncpa [#allocation7], 0
    %s23 = scalar_lea.sflag [#allocation7], 1
    %24 = vsyncpa %s23, 0
    %25 = vsyncpa [#allocation10], 0
    %s26 = scalar_lea.sflag [#allocation10], 1
    %27 = vsyncpa %s26, 0
    %28 = vsyncpa [#allocation13], 0
    %s29 = scalar_lea.sflag [#allocation13], 1
    %30 = vsyncpa %s29, 0
    %31 = vsyncpa [#allocation5], 0
    loop: start=0, step=1, limit=4
    $region2: #{tpu_custom_call.1} parent=1 // loop_pre_header
      _
    $region3: #{tpu_custom_call.1} parent=1 // loop_header
      %s33 = sphi 0, %s37
      %p34 = scmp.ge.s32.totalorder %s33, 4
      %s41 = sphi 0, %s41
      %s43 = sphi 0, %s41
      %s44 = sphi 0, %s43
      %s58 = sphi 0, %s44
      %s64 = sphi 0, %s66
      %s67 = sphi 0, %s64
      %s68 = sphi 0, %s67
      %s84 = sphi 0, %s68
      %s90 = sphi 0, %s92
      %s93 = sphi 0, %s90
      %s94 = sphi 0, %s93
      %s110 = sphi 0, %s94
      %s116 = sphi 0, %s118
      %s119 = sphi 0, %s116
      %s120 = sphi 0, %s119
      %s136 = sphi 0, %s120
      %s142 = sphi 0, %s144
      %s145 = sphi 0, %s142
      %s146 = sphi 0, %s145
      %s162 = sphi 0, %s146
      %s168 = sphi 0, %s170
      %s171 = sphi 0, %s168
      %s172 = sphi 0, %s171
      %s188 = sphi 0, %s172
      %s194 = sphi 0, %s196
      %s197 = sphi 0, %s194
      %s198 = sphi 0, %s197
      %s214 = sphi 0, %s198
      %s220 = sphi 0, %s222
      %s223 = sphi 0, %s220
      %s224 = sphi 0, %s223
      %s240 = sphi 0, %s224
      %s246 = sphi 0, %s248
      %s249 = sphi 0, %s246
      %s250 = sphi 0, %s249
      %s266 = sphi 0, %s250
      %s272 = sphi 0, %s274
      %s275 = sphi 0, %s272
      %s276 = sphi 0, %s275
      %s292 = sphi 0, %s276
      %s298 = sphi 0, %s300
      %s301 = sphi 0, %s298
      %s302 = sphi 0, %s301
      %s318 = sphi 0, %s302
      %s324 = sphi 0, %s326
      %s327 = sphi 0, %s324
      %s328 = sphi 0, %s327
      %s344 = sphi 0, %s328
      %s350 = sphi 0, %s352
      %s353 = sphi 0, %s350
      %s354 = sphi 0, %s353
      %s370 = sphi 0, %s354
      %s376 = sphi 0, %s378
      %s379 = sphi 0, %s376
      %s380 = sphi 0, %s379
      %s396 = sphi 0, %s380
      %s400 = sphi 0, %s400
      %s402 = sphi 0, %s400
      %s403 = sphi 0, %s402
      %s417 = sphi 0, %s403
      %s421 = sphi 0, %s421
      %s423 = sphi 0, %s421
      %s424 = sphi 0, %s423
      %s438 = sphi 0, %s424
      %s442 = sphi 0, %s442
      %s444 = sphi 0, %s442
      %s445 = sphi 0, %s444
      %s459 = sphi 0, %s445
    $region4: #{tpu_custom_call.1} parent=1 // loop_header_branch
      %36 = sbr.rel (%p34) target = $region8
    $region5: #{tpu_custom_call.1} parent=1 // loop_body
      %s38 = ssub.s32 %s33, 1
      %s39 = ssub.s32 %s33, 2
      %s40 = sadd.s32 %s33, 1
      %s42 = sadd.s32 %s41, 1
      %p45 = scmp.eq.s32.totalorder %s33, 1
      %p46 = scmp.ne.s32.totalorder %s41, %s43
      %p47 = scmp.eq.s32.totalorder %s33, 0
      %p48 = por %p46, %p47
      %p49 = scmp.ne.s32.totalorder %s41, %s43
      %p50 = scmp.eq.s32.totalorder %s38, 1
      %p51 = por %p49, %p50
      %p52 = scmp.ne.s32.totalorder %s43, %s44
      %p53 = scmp.eq.s32.totalorder %s38, 0
      %p54 = por %p52, %p53
      %p55 = scmp.ne.s32.totalorder %s43, %s44
      %p56 = scmp.eq.s32.totalorder %s39, 1
      %p57 = por %p55, %p56
      %p59 = scmp.ne.s32.totalorder %s44, %s58
      %p60 = scmp.eq.s32.totalorder %s39, 0
      %p61 = por %p59, %p60
      %s62 = ssub.s32 %s33, %s40
      %p63 = scmp.eq.s32.totalorder %s62, 0
      %s65 = sadd.s32 %s64, 1
      %s66 = scalar_select %p63, %s64, %s65
      %p69 = pneg %p63
      %p70 = scmp.eq.s32.totalorder %s33, 1
      %p71 = por %p69, %p70
      %p72 = scmp.ne.s32.totalorder %s64, %s67
      %p73 = scmp.eq.s32.totalorder %s33, 0
      %p74 = por %p72, %p73
      %p75 = scmp.ne.s32.totalorder %s64, %s67
      %p76 = scmp.eq.s32.totalorder %s38, 1
      %p77 = por %p75, %p76
      %p78 = scmp.ne.s32.totalorder %s67, %s68
      %p79 = scmp.eq.s32.totalorder %s38, 0
      %p80 = por %p78, %p79
      %p81 = scmp.ne.s32.totalorder %s67, %s68
      %p82 = scmp.eq.s32.totalorder %s39, 1
      %p83 = por %p81, %p82
      %p85 = scmp.ne.s32.totalorder %s68, %s84
      %p86 = scmp.eq.s32.totalorder %s39, 0
      %p87 = por %p85, %p86
      %s88 = ssub.s32 %s33, %s40
      %p89 = scmp.eq.s32.totalorder %s88, 0
      %s91 = sadd.s32 %s90, 1
      %s92 = scalar_select %p89, %s90, %s91
      %p95 = pneg %p89
      %p96 = scmp.eq.s32.totalorder %s33, 1
      %p97 = por %p95, %p96
      %p98 = scmp.ne.s32.totalorder %s90, %s93
      %p99 = scmp.eq.s32.totalorder %s33, 0
      %p100 = por %p98, %p99
      %p101 = scmp.ne.s32.totalorder %s90, %s93
      %p102 = scmp.eq.s32.totalorder %s38, 1
      %p103 = por %p101, %p102
      %p104 = scmp.ne.s32.totalorder %s93, %s94
      %p105 = scmp.eq.s32.totalorder %s38, 0
      %p106 = por %p104, %p105
      %p107 = scmp.ne.s32.totalorder %s93, %s94
      %p108 = scmp.eq.s32.totalorder %s39, 1
      %p109 = por %p107, %p108
      %p111 = scmp.ne.s32.totalorder %s94, %s110
      %p112 = scmp.eq.s32.totalorder %s39, 0
      %p113 = por %p111, %p112
      %s114 = ssub.s32 %s33, %s40
      %p115 = scmp.eq.s32.totalorder %s114, 0
      %s117 = sadd.s32 %s116, 1
      %s118 = scalar_select %p115, %s116, %s117
      %p121 = pneg %p115
      %p122 = scmp.eq.s32.totalorder %s33, 1
      %p123 = por %p121, %p122
      %p124 = scmp.ne.s32.totalorder %s116, %s119
      %p125 = scmp.eq.s32.totalorder %s33, 0
      %p126 = por %p124, %p125
      %p127 = scmp.ne.s32.totalorder %s116, %s119
      %p128 = scmp.eq.s32.totalorder %s38, 1
      %p129 = por %p127, %p128
      %p130 = scmp.ne.s32.totalorder %s119, %s120
      %p131 = scmp.eq.s32.totalorder %s38, 0
      %p132 = por %p130, %p131
      %p133 = scmp.ne.s32.totalorder %s119, %s120
      %p134 = scmp.eq.s32.totalorder %s39, 1
      %p135 = por %p133, %p134
      %p137 = scmp.ne.s32.totalorder %s120, %s136
      %p138 = scmp.eq.s32.totalorder %s39, 0
      %p139 = por %p137, %p138
      %s140 = ssub.s32 %s33, %s40
      %p141 = scmp.eq.s32.totalorder %s140, 0
      %s143 = sadd.s32 %s142, 1
      %s144 = scalar_select %p141, %s142, %s143
      %p147 = pneg %p141
      %p148 = scmp.eq.s32.totalorder %s33, 1
      %p149 = por %p147, %p148
      %p150 = scmp.ne.s32.totalorder %s142, %s145
      %p151 = scmp.eq.s32.totalorder %s33, 0
      %p152 = por %p150, %p151
      %p153 = scmp.ne.s32.totalorder %s142, %s145
      %p154 = scmp.eq.s32.totalorder %s38, 1
      %p155 = por %p153, %p154
      %p156 = scmp.ne.s32.totalorder %s145, %s146
      %p157 = scmp.eq.s32.totalorder %s38, 0
      %p158 = por %p156, %p157
      %p159 = scmp.ne.s32.totalorder %s145, %s146
      %p160 = scmp.eq.s32.totalorder %s39, 1
      %p161 = por %p159, %p160
      %p163 = scmp.ne.s32.totalorder %s146, %s162
      %p164 = scmp.eq.s32.totalorder %s39, 0
      %p165 = por %p163, %p164
      %s166 = ssub.s32 %s33, %s40
      %p167 = scmp.eq.s32.totalorder %s166, 0
      %s169 = sadd.s32 %s168, 1
      %s170 = scalar_select %p167, %s168, %s169
      %p173 = pneg %p167
      %p174 = scmp.eq.s32.totalorder %s33, 1
      %p175 = por %p173, %p174
      %p176 = scmp.ne.s32.totalorder %s168, %s171
      %p177 = scmp.eq.s32.totalorder %s33, 0
      %p178 = por %p176, %p177
      %p179 = scmp.ne.s32.totalorder %s168, %s171
      %p180 = scmp.eq.s32.totalorder %s38, 1
      %p181 = por %p179, %p180
      %p182 = scmp.ne.s32.totalorder %s171, %s172
      %p183 = scmp.eq.s32.totalorder %s38, 0
      %p184 = por %p182, %p183
      %p185 = scmp.ne.s32.totalorder %s171, %s172
      %p186 = scmp.eq.s32.totalorder %s39, 1
      %p187 = por %p185, %p186
      %p189 = scmp.ne.s32.totalorder %s172, %s188
      %p190 = scmp.eq.s32.totalorder %s39, 0
      %p191 = por %p189, %p190
      %s192 = ssub.s32 %s33, %s40
      %p193 = scmp.eq.s32.totalorder %s192, 0
      %s195 = sadd.s32 %s194, 1
      %s196 = scalar_select %p193, %s194, %s195
      %p199 = pneg %p193
      %p200 = scmp.eq.s32.totalorder %s33, 1
      %p201 = por %p199, %p200
      %p202 = scmp.ne.s32.totalorder %s194, %s197
      %p203 = scmp.eq.s32.totalorder %s33, 0
      %p204 = por %p202, %p203
      %p205 = scmp.ne.s32.totalorder %s194, %s197
      %p206 = scmp.eq.s32.totalorder %s38, 1
      %p207 = por %p205, %p206
      %p208 = scmp.ne.s32.totalorder %s197, %s198
      %p209 = scmp.eq.s32.totalorder %s38, 0
      %p210 = por %p208, %p209
      %p211 = scmp.ne.s32.totalorder %s197, %s198
      %p212 = scmp.eq.s32.totalorder %s39, 1
      %p213 = por %p211, %p212
      %p215 = scmp.ne.s32.totalorder %s198, %s214
      %p216 = scmp.eq.s32.totalorder %s39, 0
      %p217 = por %p215, %p216
      %s218 = ssub.s32 %s33, %s40
      %p219 = scmp.eq.s32.totalorder %s218, 0
      %s221 = sadd.s32 %s220, 1
      %s222 = scalar_select %p219, %s220, %s221
      %p225 = pneg %p219
      %p226 = scmp.eq.s32.totalorder %s33, 1
      %p227 = por %p225, %p226
      %p228 = scmp.ne.s32.totalorder %s220, %s223
      %p229 = scmp.eq.s32.totalorder %s33, 0
      %p230 = por %p228, %p229
      %p231 = scmp.ne.s32.totalorder %s220, %s223
      %p232 = scmp.eq.s32.totalorder %s38, 1
      %p233 = por %p231, %p232
      %p234 = scmp.ne.s32.totalorder %s223, %s224
      %p235 = scmp.eq.s32.totalorder %s38, 0
      %p236 = por %p234, %p235
      %p237 = scmp.ne.s32.totalorder %s223, %s224
      %p238 = scmp.eq.s32.totalorder %s39, 1
      %p239 = por %p237, %p238
      %p241 = scmp.ne.s32.totalorder %s224, %s240
      %p242 = scmp.eq.s32.totalorder %s39, 0
      %p243 = por %p241, %p242
      %s244 = ssub.s32 %s33, %s40
      %p245 = scmp.eq.s32.totalorder %s244, 0
      %s247 = sadd.s32 %s246, 1
      %s248 = scalar_select %p245, %s246, %s247
      %p251 = pneg %p245
      %p252 = scmp.eq.s32.totalorder %s33, 1
      %p253 = por %p251, %p252
      %p254 = scmp.ne.s32.totalorder %s246, %s249
      %p255 = scmp.eq.s32.totalorder %s33, 0
      %p256 = por %p254, %p255
      %p257 = scmp.ne.s32.totalorder %s246, %s249
      %p258 = scmp.eq.s32.totalorder %s38, 1
      %p259 = por %p257, %p258
      %p260 = scmp.ne.s32.totalorder %s249, %s250
      %p261 = scmp.eq.s32.totalorder %s38, 0
      %p262 = por %p260, %p261
      %p263 = scmp.ne.s32.totalorder %s249, %s250
      %p264 = scmp.eq.s32.totalorder %s39, 1
      %p265 = por %p263, %p264
      %p267 = scmp.ne.s32.totalorder %s250, %s266
      %p268 = scmp.eq.s32.totalorder %s39, 0
      %p269 = por %p267, %p268
      %s270 = ssub.s32 %s33, %s40
      %p271 = scmp.eq.s32.totalorder %s270, 0
      %s273 = sadd.s32 %s272, 1
      %s274 = scalar_select %p271, %s272, %s273
      %p277 = pneg %p271
      %p278 = scmp.eq.s32.totalorder %s33, 1
      %p279 = por %p277, %p278
      %p280 = scmp.ne.s32.totalorder %s272, %s275
      %p281 = scmp.eq.s32.totalorder %s33, 0
      %p282 = por %p280, %p281
      %p283 = scmp.ne.s32.totalorder %s272, %s275
      %p284 = scmp.eq.s32.totalorder %s38, 1
      %p285 = por %p283, %p284
      %p286 = scmp.ne.s32.totalorder %s275, %s276
      %p287 = scmp.eq.s32.totalorder %s38, 0
      %p288 = por %p286, %p287
      %p289 = scmp.ne.s32.totalorder %s275, %s276
      %p290 = scmp.eq.s32.totalorder %s39, 1
      %p291 = por %p289, %p290
      %p293 = scmp.ne.s32.totalorder %s276, %s292
      %p294 = scmp.eq.s32.totalorder %s39, 0
      %p295 = por %p293, %p294
      %s296 = ssub.s32 %s33, %s40
      %p297 = scmp.eq.s32.totalorder %s296, 0
      %s299 = sadd.s32 %s298, 1
      %s300 = scalar_select %p297, %s298, %s299
      %p303 = pneg %p297
      %p304 = scmp.eq.s32.totalorder %s33, 1
      %p305 = por %p303, %p304
      %p306 = scmp.ne.s32.totalorder %s298, %s301
      %p307 = scmp.eq.s32.totalorder %s33, 0
      %p308 = por %p306, %p307
      %p309 = scmp.ne.s32.totalorder %s298, %s301
      %p310 = scmp.eq.s32.totalorder %s38, 1
      %p311 = por %p309, %p310
      %p312 = scmp.ne.s32.totalorder %s301, %s302
      %p313 = scmp.eq.s32.totalorder %s38, 0
      %p314 = por %p312, %p313
      %p315 = scmp.ne.s32.totalorder %s301, %s302
      %p316 = scmp.eq.s32.totalorder %s39, 1
      %p317 = por %p315, %p316
      %p319 = scmp.ne.s32.totalorder %s302, %s318
      %p320 = scmp.eq.s32.totalorder %s39, 0
      %p321 = por %p319, %p320
      %s322 = ssub.s32 %s33, %s40
      %p323 = scmp.eq.s32.totalorder %s322, 0
      %s325 = sadd.s32 %s324, 1
      %s326 = scalar_select %p323, %s324, %s325
      %p329 = pneg %p323
      %p330 = scmp.eq.s32.totalorder %s33, 1
      %p331 = por %p329, %p330
      %p332 = scmp.ne.s32.totalorder %s324, %s327
      %p333 = scmp.eq.s32.totalorder %s33, 0
      %p334 = por %p332, %p333
      %p335 = scmp.ne.s32.totalorder %s324, %s327
      %p336 = scmp.eq.s32.totalorder %s38, 1
      %p337 = por %p335, %p336
      %p338 = scmp.ne.s32.totalorder %s327, %s328
      %p339 = scmp.eq.s32.totalorder %s38, 0
      %p340 = por %p338, %p339
      %p341 = scmp.ne.s32.totalorder %s327, %s328
      %p342 = scmp.eq.s32.totalorder %s39, 1
      %p343 = por %p341, %p342
      %p345 = scmp.ne.s32.totalorder %s328, %s344
      %p346 = scmp.eq.s32.totalorder %s39, 0
      %p347 = por %p345, %p346
      %s348 = ssub.s32 %s33, %s40
      %p349 = scmp.eq.s32.totalorder %s348, 0
      %s351 = sadd.s32 %s350, 1
      %s352 = scalar_select %p349, %s350, %s351
      %p355 = pneg %p349
      %p356 = scmp.eq.s32.totalorder %s33, 1
      %p357 = por %p355, %p356
      %p358 = scmp.ne.s32.totalorder %s350, %s353
      %p359 = scmp.eq.s32.totalorder %s33, 0
      %p360 = por %p358, %p359
      %p361 = scmp.ne.s32.totalorder %s350, %s353
      %p362 = scmp.eq.s32.totalorder %s38, 1
      %p363 = por %p361, %p362
      %p364 = scmp.ne.s32.totalorder %s353, %s354
      %p365 = scmp.eq.s32.totalorder %s38, 0
      %p366 = por %p364, %p365
      %p367 = scmp.ne.s32.totalorder %s353, %s354
      %p368 = scmp.eq.s32.totalorder %s39, 1
      %p369 = por %p367, %p368
      %p371 = scmp.ne.s32.totalorder %s354, %s370
      %p372 = scmp.eq.s32.totalorder %s39, 0
      %p373 = por %p371, %p372
      %s374 = ssub.s32 %s33, %s40
      %p375 = scmp.eq.s32.totalorder %s374, 0
      %s377 = sadd.s32 %s376, 1
      %s378 = scalar_select %p375, %s376, %s377
      %p381 = pneg %p375
      %p382 = scmp.eq.s32.totalorder %s33, 1
      %p383 = por %p381, %p382
      %p384 = scmp.ne.s32.totalorder %s376, %s379
      %p385 = scmp.eq.s32.totalorder %s33, 0
      %p386 = por %p384, %p385
      %p387 = scmp.ne.s32.totalorder %s376, %s379
      %p388 = scmp.eq.s32.totalorder %s38, 1
      %p389 = por %p387, %p388
      %p390 = scmp.ne.s32.totalorder %s379, %s380
      %p391 = scmp.eq.s32.totalorder %s38, 0
      %p392 = por %p390, %p391
      %p393 = scmp.ne.s32.totalorder %s379, %s380
      %p394 = scmp.eq.s32.totalorder %s39, 1
      %p395 = por %p393, %p394
      %p397 = scmp.ne.s32.totalorder %s380, %s396
      %p398 = scmp.eq.s32.totalorder %s39, 0
      %p399 = por %p397, %p398
      %s401 = sadd.s32 %s400, 1
      %p404 = scmp.eq.s32.totalorder %s33, 1
      %p405 = scmp.ne.s32.totalorder %s400, %s402
      %p406 = scmp.eq.s32.totalorder %s33, 0
      %p407 = por %p405, %p406
      %p408 = scmp.ne.s32.totalorder %s400, %s402
      %p409 = scmp.eq.s32.totalorder %s38, 1
      %p410 = por %p408, %p409
      %p411 = scmp.ne.s32.totalorder %s402, %s403
      %p412 = scmp.eq.s32.totalorder %s38, 0
      %p413 = por %p411, %p412
      %p414 = scmp.ne.s32.totalorder %s402, %s403
      %p415 = scmp.eq.s32.totalorder %s39, 1
      %p416 = por %p414, %p415
      %p418 = scmp.ne.s32.totalorder %s403, %s417
      %p419 = scmp.eq.s32.totalorder %s39, 0
      %p420 = por %p418, %p419
      %s422 = sadd.s32 %s421, 1
      %p425 = scmp.eq.s32.totalorder %s33, 1
      %p426 = scmp.ne.s32.totalorder %s421, %s423
      %p427 = scmp.eq.s32.totalorder %s33, 0
      %p428 = por %p426, %p427
      %p429 = scmp.ne.s32.totalorder %s421, %s423
      %p430 = scmp.eq.s32.totalorder %s38, 1
      %p431 = por %p429, %p430
      %p432 = scmp.ne.s32.totalorder %s423, %s424
      %p433 = scmp.eq.s32.totalorder %s38, 0
      %p434 = por %p432, %p433
      %p435 = scmp.ne.s32.totalorder %s423, %s424
      %p436 = scmp.eq.s32.totalorder %s39, 1
      %p437 = por %p435, %p436
      %p439 = scmp.ne.s32.totalorder %s424, %s438
      %p440 = scmp.eq.s32.totalorder %s39, 0
      %p441 = por %p439, %p440
      %s443 = sadd.s32 %s442, 1
      %p446 = scmp.eq.s32.totalorder %s33, 1
      %p447 = scmp.ne.s32.totalorder %s442, %s444
      %p448 = scmp.eq.s32.totalorder %s33, 0
      %p449 = por %p447, %p448
      %p450 = scmp.ne.s32.totalorder %s442, %s444
      %p451 = scmp.eq.s32.totalorder %s38, 1
      %p452 = por %p450, %p451
      %p453 = scmp.ne.s32.totalorder %s444, %s445
      %p454 = scmp.eq.s32.totalorder %s38, 0
      %p455 = por %p453, %p454
      %p456 = scmp.ne.s32.totalorder %s444, %s445
      %p457 = scmp.eq.s32.totalorder %s39, 1
      %p458 = por %p456, %p457
      %p460 = scmp.ne.s32.totalorder %s445, %s459
      %p461 = scmp.eq.s32.totalorder %s39, 0
      %p462 = por %p460, %p461
      %p463 = scmp.le.s32.totalorder 1, %s33
      %p464 = scmp.lt.s32.totalorder %s33, 3
      %p465 = pnand %p463, %p464
      %p466 = pneg %p465
      // Predicated region
      $region9: #{tpu_custom_call.1} parent=5 // pred_check
        _
      $region10: #{tpu_custom_call.1} parent=5 // pred_check_branch
        %468 = sbr.rel (%p465) target = $region12
      $region11: #{tpu_custom_call.1} parent=5 // pred_region
        %s469 = ssub.s32 %s33, 1
        // Predicated region
        $region13: #{tpu_custom_call.1} parent=11 // pred_check
          %p470 = pneg %p54
        $region14: #{tpu_custom_call.1} parent=11 // pred_check_branch
          %472 = sbr.rel (%p470) target = $region16
        $region15: #{tpu_custom_call.1} parent=11 // pred_region
          %s474 = ssub.s32 256, 256
          %475 = vsyncadd [#allocation4], %s474
          %s476 = sshll.u32 [#allocation3], 4
          %s477 = int_to_ptr.vmem [resolvable:$true] %s476
          %482 = dma.hbm_to_vmem [thread:$0]  %s0, 256, %s477, [#allocation4], 128, 128, 8
        $region16: #{tpu_custom_call.1} parent=11 // pred_fallthru
          _
        // Predicated region
        $region17: #{tpu_custom_call.1} parent=11 // pred_check
          %p483 = pneg %p413
        $region18: #{tpu_custom_call.1} parent=11 // pred_check_branch
          %485 = sbr.rel (%p483) target = $region20
        $region19: #{tpu_custom_call.1} parent=11 // pred_region
          _
        $region20: #{tpu_custom_call.1} parent=11 // pred_fallthru
          _
        // Predicated region
        $region21: #{tpu_custom_call.1} parent=11 // pred_check
          %p486 = pneg %p434
        $region22: #{tpu_custom_call.1} parent=11 // pred_check_branch
          %488 = sbr.rel (%p486) target = $region24
        $region23: #{tpu_custom_call.1} parent=11 // pred_region
          _
        $region24: #{tpu_custom_call.1} parent=11 // pred_fallthru
          _
      $region12: #{tpu_custom_call.1} parent=5 // pred_fallthru
        _
      %p489 = scmp.lt.s32.totalorder %s33, 2
      // Predicated region
      $region25: #{tpu_custom_call.1} parent=5 // pred_check
        %p490 = pneg %p489
      $region26: #{tpu_custom_call.1} parent=5 // pred_check_branch
        %492 = sbr.rel (%p490) target = $region28
      $region27: #{tpu_custom_call.1} parent=5 // pred_region
        // Predicated region
        $region29: #{tpu_custom_call.1} parent=27 // pred_check
          %p493 = pneg %p74
        $region30: #{tpu_custom_call.1} parent=27 // pred_check_branch
          %495 = sbr.rel (%p493) target = $region32
        $region31: #{tpu_custom_call.1} parent=27 // pred_region
          %p496 = scmp.lt.s32.totalorder %s33, 1
          %s497 = scalar_select %p496, %s33, 1
          %s498 = scalar_lea.vmem %s1, %s497
        $region32: #{tpu_custom_call.1} parent=27 // pred_fallthru
          _
        // Predicated region
        $region33: #{tpu_custom_call.1} parent=27 // pred_check
          %p499 = pneg %p100
        $region34: #{tpu_custom_call.1} parent=27 // pred_check_branch
          %501 = sbr.rel (%p499) target = $region36
        $region35: #{tpu_custom_call.1} parent=27 // pred_region
          %p502 = scmp.lt.s32.totalorder %s33, 1
          %s503 = scalar_select %p502, %s33, 1
          %s504 = scalar_lea.vmem %s2, %s503
        $region36: #{tpu_custom_call.1} parent=27 // pred_fallthru
          _
        // Predicated region
        $region37: #{tpu_custom_call.1} parent=27 // pred_check
          %p505 = pneg %p126
        $region38: #{tpu_custom_call.1} parent=27 // pred_check_branch
          %507 = sbr.rel (%p505) target = $region40
        $region39: #{tpu_custom_call.1} parent=27 // pred_region
          %s508 = sand.u32 %s33, 1
          %s509 = scalar_lea.sflag [#allocation7], %s508
          %s510 = sand.u32 %s116, 1
          %s511 = smul.addr %s510, 64
          %s512 = scalar_lea.vmem [#allocation6], %s511
          %s514 = ssub.s32 1024, 1024
          %515 = vsyncadd %s509, %s514
          %s516 = smul.addr %s33, 16
          %s517 = smul.addr %s516, 64
          %s518 = scalar_lea.hbm %s3, %s517
          %s519 = sshll.u32 %s512, 4
          %s520 = int_to_ptr.vmem [resolvable:$true] %s519
          %525 = dma.hbm_to_vmem [thread:$0]  %s518, 1024, %s520, %s509, 64, 64, 4
        $region40: #{tpu_custom_call.1} parent=27 // pred_fallthru
          _
        // Predicated region
        $region41: #{tpu_custom_call.1} parent=27 // pred_check
          %p526 = pneg %p152
        $region42: #{tpu_custom_call.1} parent=27 // pred_check_branch
          %528 = sbr.rel (%p526) target = $region44
        $region43: #{tpu_custom_call.1} parent=27 // pred_region
          %s529 = sand.u32 %s33, 1
          %s530 = scalar_lea.sflag [#allocation7], %s529
          %s531 = sand.u32 %s142, 1
          %s532 = smul.addr %s531, 64
          %s533 = scalar_lea.vmem [#allocation8], %s532
          %s535 = ssub.s32 1024, 1024
          %536 = vsyncadd %s530, %s535
          %s537 = smul.addr %s33, 16
          %s538 = smul.addr %s537, 64
          %s539 = scalar_lea.hbm %s4, %s538
          %s540 = sshll.u32 %s533, 4
          %s541 = int_to_ptr.vmem [resolvable:$true] %s540
          %546 = dma.hbm_to_vmem [thread:$0]  %s539, 1024, %s541, %s530, 64, 64, 4
        $region44: #{tpu_custom_call.1} parent=27 // pred_fallthru
          _
        // Predicated region
        $region45: #{tpu_custom_call.1} parent=27 // pred_check
          %p547 = pneg %p178
        $region46: #{tpu_custom_call.1} parent=27 // pred_check_branch
          %549 = sbr.rel (%p547) target = $region48
        $region47: #{tpu_custom_call.1} parent=27 // pred_region
          %s550 = sand.u32 %s33, 1
          %s551 = scalar_lea.sflag [#allocation10], %s550
          %s552 = sand.u32 %s168, 1
          %s553 = smul.addr %s552, 64
          %s554 = scalar_lea.vmem [#allocation9], %s553
          %s556 = ssub.s32 1024, 1024
          %557 = vsyncadd %s551, %s556
          %s558 = smul.addr %s33, 16
          %s559 = smul.addr %s558, 64
          %s560 = scalar_lea.hbm %s5, %s559
          %s561 = sshll.u32 %s554, 4
          %s562 = int_to_ptr.vmem [resolvable:$true] %s561
          %567 = dma.hbm_to_vmem [thread:$0]  %s560, 1024, %s562, %s551, 64, 64, 4
        $region48: #{tpu_custom_call.1} parent=27 // pred_fallthru
          _
        // Predicated region
        $region49: #{tpu_custom_call.1} parent=27 // pred_check
          %p568 = pneg %p204
        $region50: #{tpu_custom_call.1} parent=27 // pred_check_branch
          %570 = sbr.rel (%p568) target = $region52
        $region51: #{tpu_custom_call.1} parent=27 // pred_region
          %s571 = sand.u32 %s33, 1
          %s572 = scalar_lea.sflag [#allocation10], %s571
          %s573 = sand.u32 %s194, 1
          %s574 = smul.addr %s573, 64
          %s575 = scalar_lea.vmem [#allocation11], %s574
          %s577 = ssub.s32 1024, 1024
          %578 = vsyncadd %s572, %s577
          %s579 = smul.addr %s33, 16
          %s580 = smul.addr %s579, 64
          %s581 = scalar_lea.hbm %s6, %s580
          %s582 = sshll.u32 %s575, 4
          %s583 = int_to_ptr.vmem [resolvable:$true] %s582
          %588 = dma.hbm_to_vmem [thread:$0]  %s581, 1024, %s583, %s572, 64, 64, 4
        $region52: #{tpu_custom_call.1} parent=27 // pred_fallthru
          _
        // Predicated region
        $region53: #{tpu_custom_call.1} parent=27 // pred_check
          %p589 = pneg %p230
        $region54: #{tpu_custom_call.1} parent=27 // pred_check_branch
          %591 = sbr.rel (%p589) target = $region56
        $region55: #{tpu_custom_call.1} parent=27 // pred_region
          %p592 = scmp.lt.s32.totalorder %s33, 1
          %s593 = scalar_select %p592, %s33, 1
          %s594 = scalar_lea.vmem %s7, %s593
        $region56: #{tpu_custom_call.1} parent=27 // pred_fallthru
          _
        // Predicated region
        $region57: #{tpu_custom_call.1} parent=27 // pred_check
          %p595 = pneg %p256
        $region58: #{tpu_custom_call.1} parent=27 // pred_check_branch
          %597 = sbr.rel (%p595) target = $region60
        $region59: #{tpu_custom_call.1} parent=27 // pred_region
          %p598 = scmp.lt.s32.totalorder %s33, 1
          %s599 = scalar_select %p598, %s33, 1
          %s600 = scalar_lea.vmem %s8, %s599
        $region60: #{tpu_custom_call.1} parent=27 // pred_fallthru
          _
        // Predicated region
        $region61: #{tpu_custom_call.1} parent=27 // pred_check
          %p601 = pneg %p282
        $region62: #{tpu_custom_call.1} parent=27 // pred_check_branch
          %603 = sbr.rel (%p601) target = $region64
        $region63: #{tpu_custom_call.1} parent=27 // pred_region
          %p604 = scmp.lt.s32.totalorder %s33, 1
          %s605 = scalar_select %p604, %s33, 1
          %s606 = scalar_lea.vmem %s9, %s605
        $region64: #{tpu_custom_call.1} parent=27 // pred_fallthru
          _
        // Predicated region
        $region65: #{tpu_custom_call.1} parent=27 // pred_check
          %p607 = pneg %p308
        $region66: #{tpu_custom_call.1} parent=27 // pred_check_branch
          %609 = sbr.rel (%p607) target = $region68
        $region67: #{tpu_custom_call.1} parent=27 // pred_region
          %s610 = sand.u32 %s33, 1
          %s611 = scalar_lea.sflag [#allocation13], %s610
          %s612 = sand.u32 %s298, 1
          %s613 = smul.addr %s612, 256
          %s614 = scalar_lea.vmem [#allocation12], %s613
          %s616 = ssub.s32 4096, 4096
          %617 = vsyncadd %s611, %s616
          %s618 = smul.addr %s33, 64
          %s619 = smul.addr %s618, 64
          %s620 = scalar_lea.hbm %s10, %s619
          %s621 = sshll.u32 %s614, 4
          %s622 = int_to_ptr.vmem [resolvable:$true] %s621
          %627 = dma.hbm_to_vmem [thread:$0]  %s620, 4096, %s622, %s611, 256, 256, 16
        $region68: #{tpu_custom_call.1} parent=27 // pred_fallthru
          _
        // Predicated region
        $region69: #{tpu_custom_call.1} parent=27 // pred_check
          %p628 = pneg %p334
        $region70: #{tpu_custom_call.1} parent=27 // pred_check_branch
          %630 = sbr.rel (%p628) target = $region72
        $region71: #{tpu_custom_call.1} parent=27 // pred_region
          %p631 = scmp.lt.s32.totalorder %s33, 1
          %s632 = scalar_select %p631, %s33, 1
          %s633 = smul.addr %s632, 4
          %s634 = scalar_lea.vmem %s11, %s633
        $region72: #{tpu_custom_call.1} parent=27 // pred_fallthru
          _
        // Predicated region
        $region73: #{tpu_custom_call.1} parent=27 // pred_check
          %p635 = pneg %p360
        $region74: #{tpu_custom_call.1} parent=27 // pred_check_branch
          %637 = sbr.rel (%p635) target = $region76
        $region75: #{tpu_custom_call.1} parent=27 // pred_region
          %s638 = sand.u32 %s33, 1
          %s639 = scalar_lea.sflag [#allocation13], %s638
          %s640 = sand.u32 %s350, 1
          %s641 = smul.addr %s640, 256
          %s642 = scalar_lea.vmem [#allocation14], %s641
          %s644 = ssub.s32 4096, 4096
          %645 = vsyncadd %s639, %s644
          %s646 = smul.addr %s33, 64
          %s647 = smul.addr %s646, 64
          %s648 = scalar_lea.hbm %s12, %s647
          %s649 = sshll.u32 %s642, 4
          %s650 = int_to_ptr.vmem [resolvable:$true] %s649
          %655 = dma.hbm_to_vmem [thread:$0]  %s648, 4096, %s650, %s639, 64, 64, 4
        $region76: #{tpu_custom_call.1} parent=27 // pred_fallthru
          _
        // Predicated region
        $region77: #{tpu_custom_call.1} parent=27 // pred_check
          %p656 = pneg %p386
        $region78: #{tpu_custom_call.1} parent=27 // pred_check_branch
          %658 = sbr.rel (%p656) target = $region80
        $region79: #{tpu_custom_call.1} parent=27 // pred_region
          %p659 = scmp.lt.s32.totalorder %s33, 1
          %s660 = scalar_select %p659, %s33, 1
          %s661 = scalar_lea.vmem %s13, %s660
        $region80: #{tpu_custom_call.1} parent=27 // pred_fallthru
          _
      $region28: #{tpu_custom_call.1} parent=5 // pred_fallthru
        _
      %p662 = scmp.le.s32.totalorder 1, %s33
      %p663 = scmp.lt.s32.totalorder %s33, 3
      %p664 = pnand %p662, %p663
      %p665 = pneg %p664
      // Predicated region
      $region81: #{tpu_custom_call.1} parent=5 // pred_check
        _
      $region82: #{tpu_custom_call.1} parent=5 // pred_check_branch
        %667 = sbr.rel (%p664) target = $region84
      $region83: #{tpu_custom_call.1} parent=5 // pred_region
        %s668 = ssub.s32 %s33, 1
        // Predicated region
        $region85: #{tpu_custom_call.1} parent=83 // pred_check
          %p669 = pneg %p54
        $region86: #{tpu_custom_call.1} parent=83 // pred_check_branch
          %671 = sbr.rel (%p669) target = $region88
        $region87: #{tpu_custom_call.1} parent=83 // pred_region
          %672 = dma.done [#allocation4], 256
        $region88: #{tpu_custom_call.1} parent=83 // pred_fallthru
          _
        %s673 = sand.u32 %s38, 1
        %s674 = scalar_lea.sflag [#allocation7], %s673
        %s675 = sand.u32 %s119, 1
        %s676 = smul.addr %s675, 64
        %s677 = scalar_lea.vmem [#allocation6], %s676
        // Predicated region
        $region89: #{tpu_custom_call.1} parent=83 // pred_check
          %p678 = pneg %p132
        $region90: #{tpu_custom_call.1} parent=83 // pred_check_branch
          %680 = sbr.rel (%p678) target = $region92
        $region91: #{tpu_custom_call.1} parent=83 // pred_region
          %681 = dma.done %s674, 1024
        $region92: #{tpu_custom_call.1} parent=83 // pred_fallthru
          _
        %s682 = sand.u32 %s38, 1
        %s683 = scalar_lea.sflag [#allocation7], %s682
        %s684 = sand.u32 %s145, 1
        %s685 = smul.addr %s684, 64
        %s686 = scalar_lea.vmem [#allocation8], %s685
        // Predicated region
        $region93: #{tpu_custom_call.1} parent=83 // pred_check
          %p687 = pneg %p158
        $region94: #{tpu_custom_call.1} parent=83 // pred_check_branch
          %689 = sbr.rel (%p687) target = $region96
        $region95: #{tpu_custom_call.1} parent=83 // pred_region
          %690 = dma.done %s683, 1024
        $region96: #{tpu_custom_call.1} parent=83 // pred_fallthru
          _
        %s691 = sand.u32 %s38, 1
        %s692 = scalar_lea.sflag [#allocation10], %s691
        %s693 = sand.u32 %s171, 1
        %s694 = smul.addr %s693, 64
        %s695 = scalar_lea.vmem [#allocation9], %s694
        // Predicated region
        $region97: #{tpu_custom_call.1} parent=83 // pred_check
          %p696 = pneg %p184
        $region98: #{tpu_custom_call.1} parent=83 // pred_check_branch
          %698 = sbr.rel (%p696) target = $region100
        $region99: #{tpu_custom_call.1} parent=83 // pred_region
          %699 = dma.done %s692, 1024
        $region100: #{tpu_custom_call.1} parent=83 // pred_fallthru
          _
        %s700 = sand.u32 %s38, 1
        %s701 = scalar_lea.sflag [#allocation10], %s700
        %s702 = sand.u32 %s197, 1
        %s703 = smul.addr %s702, 64
        %s704 = scalar_lea.vmem [#allocation11], %s703
        // Predicated region
        $region101: #{tpu_custom_call.1} parent=83 // pred_check
          %p705 = pneg %p210
        $region102: #{tpu_custom_call.1} parent=83 // pred_check_branch
          %707 = sbr.rel (%p705) target = $region104
        $region103: #{tpu_custom_call.1} parent=83 // pred_region
          %708 = dma.done %s701, 1024
        $region104: #{tpu_custom_call.1} parent=83 // pred_fallthru
          _
        %s709 = sand.u32 %s38, 1
        %s710 = scalar_lea.sflag [#allocation13], %s709
        %s711 = sand.u32 %s301, 1
        %s712 = smul.addr %s711, 256
        %s713 = scalar_lea.vmem [#allocation12], %s712
        // Predicated region
        $region105: #{tpu_custom_call.1} parent=83 // pred_check
          %p714 = pneg %p314
        $region106: #{tpu_custom_call.1} parent=83 // pred_check_branch
          %716 = sbr.rel (%p714) target = $region108
        $region107: #{tpu_custom_call.1} parent=83 // pred_region
          %717 = dma.done %s710, 4096
        $region108: #{tpu_custom_call.1} parent=83 // pred_fallthru
          _
        %s718 = sand.u32 %s38, 1
        %s719 = scalar_lea.sflag [#allocation13], %s718
        %s720 = sand.u32 %s353, 1
        %s721 = smul.addr %s720, 256
        %s722 = scalar_lea.vmem [#allocation14], %s721
        // Predicated region
        $region109: #{tpu_custom_call.1} parent=83 // pred_check
          %p723 = pneg %p366
        $region110: #{tpu_custom_call.1} parent=83 // pred_check_branch
          %725 = sbr.rel (%p723) target = $region112
        $region111: #{tpu_custom_call.1} parent=83 // pred_region
          %726 = dma.done %s719, 4096
        $region112: #{tpu_custom_call.1} parent=83 // pred_fallthru
          _
        %p727 = pneg %p54
        %p728 = pneg %p51
        %p729 = scmp.lt.s32.totalorder %s38, 1
        %s730 = scalar_select %p729, %s38, 1
        %s731 = scalar_lea.vmem %s1, %s730
        %p732 = pneg %p80
        %p733 = pneg %p77
        %p734 = scmp.lt.s32.totalorder %s38, 1
        %s735 = scalar_select %p734, %s38, 1
        %s736 = scalar_lea.vmem %s2, %s735
        %p737 = pneg %p106
        %p738 = pneg %p103
        %s739 = sand.u32 %s38, 1
        %s740 = scalar_lea.sflag [#allocation7], %s739
        %s741 = sand.u32 %s119, 1
        %s742 = smul.addr %s741, 64
        %s743 = scalar_lea.vmem [#allocation6], %s742
        %p744 = pneg %p132
        %p745 = pneg %p129
        %s746 = sand.u32 %s38, 1
        %s747 = scalar_lea.sflag [#allocation7], %s746
        %s748 = sand.u32 %s145, 1
        %s749 = smul.addr %s748, 64
        %s750 = scalar_lea.vmem [#allocation8], %s749
        %p751 = pneg %p158
        %p752 = pneg %p155
        %s753 = sand.u32 %s38, 1
        %s754 = scalar_lea.sflag [#allocation10], %s753
        %s755 = sand.u32 %s171, 1
        %s756 = smul.addr %s755, 64
        %s757 = scalar_lea.vmem [#allocation9], %s756
        %p758 = pneg %p184
        %p759 = pneg %p181
        %s760 = sand.u32 %s38, 1
        %s761 = scalar_lea.sflag [#allocation10], %s760
        %s762 = sand.u32 %s197, 1
        %s763 = smul.addr %s762, 64
        %s764 = scalar_lea.vmem [#allocation11], %s763
        %p765 = pneg %p210
        %p766 = pneg %p207
        %p767 = scmp.lt.s32.totalorder %s38, 1
        %s768 = scalar_select %p767, %s38, 1
        %s769 = scalar_lea.vmem %s7, %s768
        %p770 = pneg %p236
        %p771 = pneg %p233
        %p772 = scmp.lt.s32.totalorder %s38, 1
        %s773 = scalar_select %p772, %s38, 1
        %s774 = scalar_lea.vmem %s8, %s773
        %p775 = pneg %p262
        %p776 = pneg %p259
        %p777 = scmp.lt.s32.totalorder %s38, 1
        %s778 = scalar_select %p777, %s38, 1
        %s779 = scalar_lea.vmem %s9, %s778
        %p780 = pneg %p288
        %p781 = pneg %p285
        %s782 = sand.u32 %s38, 1
        %s783 = scalar_lea.sflag [#allocation13], %s782
        %s784 = sand.u32 %s301, 1
        %s785 = smul.addr %s784, 256
        %s786 = scalar_lea.vmem [#allocation12], %s785
        %p787 = pneg %p314
        %p788 = pneg %p311
        %p789 = scmp.lt.s32.totalorder %s38, 1
        %s790 = scalar_select %p789, %s38, 1
        %s791 = smul.addr %s790, 4
        %s792 = scalar_lea.vmem %s11, %s791
        %p793 = pneg %p340
        %p794 = pneg %p337
        %s795 = sand.u32 %s38, 1
        %s796 = scalar_lea.sflag [#allocation13], %s795
        %s797 = sand.u32 %s353, 1
        %s798 = smul.addr %s797, 256
        %s799 = scalar_lea.vmem [#allocation14], %s798
        %p800 = pneg %p366
        %p801 = pneg %p363
        %p802 = scmp.lt.s32.totalorder %s38, 1
        %s803 = scalar_select %p802, %s38, 1
        %s804 = scalar_lea.vmem %s13, %s803
        %p805 = pneg %p392
        %p806 = pneg %p389
        %p807 = pneg %p413
        %p808 = pneg %p410
        %p809 = pneg %p434
        %p810 = pneg %p431
        %p811 = pneg %p455
        %p812 = pneg %p452
        %p813 = scmp.lt.s32.totalorder %s38, 1
        %s814 = scalar_select %p813, %s38, 1
        %s815 = scalar_lea.vmem %s1, %s814
        %p816 = scmp.lt.s32.totalorder %s38, 1
        %s817 = scalar_select %p816, %s38, 1
        %s818 = scalar_lea.vmem %s2, %s817
        %p819 = scmp.lt.s32.totalorder %s38, 1
        %s820 = scalar_select %p819, %s38, 1
        %s821 = scalar_lea.vmem %s7, %s820
        %p822 = scmp.lt.s32.totalorder %s38, 1
        %s823 = scalar_select %p822, %s38, 1
        %s824 = scalar_lea.vmem %s8, %s823
        %p825 = scmp.lt.s32.totalorder %s38, 1
        %s826 = scalar_select %p825, %s38, 1
        %s827 = scalar_lea.vmem %s9, %s826
        %p828 = scmp.lt.s32.totalorder %s38, 1
        %s829 = scalar_select %p828, %s38, 1
        %s830 = smul.addr %s829, 4
        %s831 = scalar_lea.vmem %s11, %s830
        %p832 = scmp.lt.s32.totalorder %s38, 1
        %s833 = scalar_select %p832, %s38, 1
        %s834 = scalar_lea.vmem %s13, %s833
        %p836 = scmp.eq.s32.totalorder %s38, 0
        // Predicated region
        $region113: #{tpu_custom_call.1} parent=83 // pred_check
          %p837 = pneg %p836
        $region114: #{tpu_custom_call.1} parent=83 // pred_check_branch
          %839 = sbr.rel (%p837) target = $region116
        $region115: #{tpu_custom_call.1} parent=83 // pred_region
          %v840 = vld [vmem:[#allocation3] sm:$0xff]
          %v841 = vld [vmem:[#allocation3 + $0x8] sm:$0xff]
          %842 = vst [vmem:[#allocation2] sm:$0xff] %v840
          %843 = vst [vmem:[#allocation2 + $0x8] sm:$0xff] %v841
        $region116: #{tpu_custom_call.1} parent=83 // pred_fallthru
          _
        %v844 = vld [vmem:[#allocation2] sm:$0xff]
        %v845 = vld [vmem:[#allocation2 + $0x8] sm:$0xff]
        %v846 = vld [vmem:[%s815] sm:$0x1]
        %v847 = vld [vmem:[%s818] sm:$0x1]
        %848 = vadd.xlane.f32.xlu0 %v844
        %v849 = vpop.xlane.xlu0 %848
        %850 = vadd.xlane.f32.xlu0 %v845
        %v851 = vpop.xlane.xlu0 %850
        %v852 = vrcp.pop 128.0
        %v853 = vmul.f32 %v849, %v852
        %v854 = vmul.f32 %v851, %v852
        %v855 = vsub.f32 %v844, %v853
        %v856 = vsub.f32 %v845, %v854
        %v857 = vmul.f32 %v855, %v855
        %v858 = vmul.f32 %v856, %v856
        %859 = vadd.xlane.f32.xlu0 %v857
        %v860 = vpop.xlane.xlu0 %859
        %861 = vadd.xlane.f32.xlu0 %v858
        %v862 = vpop.xlane.xlu0 %861
        %v863 = vmul.f32 %v860, %v852
        %v864 = vmul.f32 %v862, %v852
        %v865 = vadd.f32 %v863, 1e-05
        %v866 = vadd.f32 %v864, 1e-05
        %v867 = vrsqrt.pop %v865
        %v868 = vrsqrt.pop %v866
        %v869 = vmul.f32 %v855, %v867
        %v870 = vmul.f32 %v856, %v868
        %v872 = vlaneseq
        %v873 = vshrl.u32 %v872, 7
        %v874 = vsub.s32 0, %v873
        %v875 = vrot.slane %v846, %v874
        %v877 = vmul.f32 %v869, %v875
        %v878 = vmul.f32 %v870, %v875
        %v880 = vlaneseq
        %v881 = vshrl.u32 %v880, 7
        %v882 = vsub.s32 0, %v881
        %v883 = vrot.slane %v847, %v882
        %v885 = vadd.f32 %v877, %v883
        %v886 = vadd.f32 %v878, %v883
        %v887 = vpack.c.bf16 %v886, %v885
        %v888 = vld [vmem:[%s677] sm:$0xf]
        %v889 = vld [vmem:[%s677 + $0x4] sm:$0xf]
        %v890 = vld [vmem:[%s677 + $0x8] sm:$0xf]
        %v891 = vld [vmem:[%s677 + $0xc] sm:$0xf]
        %v892 = vld [vmem:[%s677 + $0x10] sm:$0xf]
        %v893 = vld [vmem:[%s677 + $0x14] sm:$0xf]
        %v894 = vld [vmem:[%s677 + $0x18] sm:$0xf]
        %v895 = vld [vmem:[%s677 + $0x1c] sm:$0xf]
        %v896 = vld [vmem:[%s677 + $0x20] sm:$0xf]
        %v897 = vld [vmem:[%s677 + $0x24] sm:$0xf]
        %v898 = vld [vmem:[%s677 + $0x28] sm:$0xf]
        %v899 = vld [vmem:[%s677 + $0x2c] sm:$0xf]
        %v900 = vld [vmem:[%s677 + $0x30] sm:$0xf]
        %v901 = vld [vmem:[%s677 + $0x34] sm:$0xf]
        %v902 = vld [vmem:[%s677 + $0x38] sm:$0xf]
        %v903 = vld [vmem:[%s677 + $0x3c] sm:$0xf]
        %v920 = vunpack.c.l.b16 %v888
        %v921 = vunpack.c.l.b16 %v889
        %v922 = vunpack.c.l.b16 %v890
        %v923 = vunpack.c.l.b16 %v891
        %v924 = vunpack.c.l.b16 %v892
        %v925 = vunpack.c.l.b16 %v893
        %v926 = vunpack.c.l.b16 %v894
        %v927 = vunpack.c.l.b16 %v895
        %v928 = vunpack.c.l.b16 %v896
        %v929 = vunpack.c.l.b16 %v897
        %v930 = vunpack.c.l.b16 %v898
        %v931 = vunpack.c.l.b16 %v899
        %v932 = vunpack.c.l.b16 %v900
        %v933 = vunpack.c.l.b16 %v901
        %v934 = vunpack.c.l.b16 %v902
        %v935 = vunpack.c.l.b16 %v903
        %v936 = vpack.c.b16 %v921, %v920
        %v937 = vpack.c.b16 %v923, %v922
        %v938 = vpack.c.b16 %v925, %v924
        %v939 = vpack.c.b16 %v927, %v926
        %v940 = vpack.c.b16 %v929, %v928
        %v941 = vpack.c.b16 %v931, %v930
        %v942 = vpack.c.b16 %v933, %v932
        %v943 = vpack.c.b16 %v935, %v934
        %952 = vmatprep.subr.bf16.mxu0 0
        %953 = vmatpush1.bf16.msra.mxu0 %v936
        %954 = vmatprep.subr.bf16.mxu0 0
        %955 = vmatpush1.bf16.msra.mxu0 %v937
        %956 = vmatprep.subr.bf16.mxu0 0
        %957 = vmatpush1.bf16.msra.mxu0 %v938
        %958 = vmatprep.subr.bf16.mxu0 0
        %959 = vmatpush1.bf16.msra.mxu0 %v939
        %960 = vmatprep.subr.bf16.mxu0 0
        %961 = vmatpush1.bf16.msra.mxu0 %v940
        %962 = vmatprep.subr.bf16.mxu0 0
        %963 = vmatpush1.bf16.msra.mxu0 %v941
        %964 = vmatprep.subr.bf16.mxu0 0
        %965 = vmatpush1.bf16.msra.mxu0 %v942
        %966 = vmatprep.subr.bf16.mxu0 0
        %967 = vmatpush1.bf16.msra.mxu0 %v943
        %968 = vmatprep.subr.bf16.mxu0 0
        %969 = vmatpush1.bf16.msra.mxu0 0
        %970 = vmatprep.subr.bf16.mxu0 0
        %971 = vmatpush1.bf16.msra.mxu0 0
        %972 = vmatprep.subr.bf16.mxu0 0
        %973 = vmatpush1.bf16.msra.mxu0 0
        %974 = vmatprep.subr.bf16.mxu0 0
        %975 = vmatpush1.bf16.msra.mxu0 0
        %976 = vmatprep.subr.bf16.mxu0 0
        %977 = vmatpush1.bf16.msra.mxu0 0
        %978 = vmatprep.subr.bf16.mxu0 0
        %979 = vmatpush1.bf16.msra.mxu0 0
        %980 = vmatprep.subr.bf16.mxu0 0
        %981 = vmatpush1.bf16.msra.mxu0 0
        %982 = vmatprep.subr.bf16.mxu0 0
        %983 = vmatpush1.bf16.msra.mxu0 0
        %984 = vmatprep.mubr.bf16.mxu0 0
        %985 = vmatmul.mubr.bf16.gmra.mrb[0].mxu0 %v887
        %v986 = vpop.f32.mrb[0].mxu0
        %v987 = vadd.f32 0.0, %v986
        %v988 = vpop.f32.mrb[0].mxu0
        %v989 = vpop.f32.mrb[0].mxu0
        %v990 = vadd.f32 0.0, %v989
        %v991 = vpop.f32.mrb[0].mxu0
        %992 = vdwg.mxu0
        %v993 = vmul.f32 %v987, 0.125
        %v994 = vmul.f32 %v990, 0.125
        %v995 = vld [vmem:[%s686] sm:$0xf]
        %v996 = vld [vmem:[%s686 + $0x4] sm:$0xf]
        %v997 = vld [vmem:[%s686 + $0x8] sm:$0xf]
        %v998 = vld [vmem:[%s686 + $0xc] sm:$0xf]
        %v999 = vld [vmem:[%s686 + $0x10] sm:$0xf]
        %v1000 = vld [vmem:[%s686 + $0x14] sm:$0xf]
        %v1001 = vld [vmem:[%s686 + $0x18] sm:$0xf]
        %v1002 = vld [vmem:[%s686 + $0x1c] sm:$0xf]
        %v1003 = vld [vmem:[%s686 + $0x20] sm:$0xf]
        %v1004 = vld [vmem:[%s686 + $0x24] sm:$0xf]
        %v1005 = vld [vmem:[%s686 + $0x28] sm:$0xf]
        %v1006 = vld [vmem:[%s686 + $0x2c] sm:$0xf]
        %v1007 = vld [vmem:[%s686 + $0x30] sm:$0xf]
        %v1008 = vld [vmem:[%s686 + $0x34] sm:$0xf]
        %v1009 = vld [vmem:[%s686 + $0x38] sm:$0xf]
        %v1010 = vld [vmem:[%s686 + $0x3c] sm:$0xf]
        %v1027 = vunpack.c.l.b16 %v995
        %v1028 = vunpack.c.l.b16 %v996
        %v1029 = vunpack.c.l.b16 %v997
        %v1030 = vunpack.c.l.b16 %v998
        %v1031 = vunpack.c.l.b16 %v999
        %v1032 = vunpack.c.l.b16 %v1000
        %v1033 = vunpack.c.l.b16 %v1001
        %v1034 = vunpack.c.l.b16 %v1002
        %v1035 = vunpack.c.l.b16 %v1003
        %v1036 = vunpack.c.l.b16 %v1004
        %v1037 = vunpack.c.l.b16 %v1005
        %v1038 = vunpack.c.l.b16 %v1006
        %v1039 = vunpack.c.l.b16 %v1007
        %v1040 = vunpack.c.l.b16 %v1008
        %v1041 = vunpack.c.l.b16 %v1009
        %v1042 = vunpack.c.l.b16 %v1010
        %v1043 = vpack.c.b16 %v1028, %v1027
        %v1044 = vpack.c.b16 %v1030, %v1029
        %v1045 = vpack.c.b16 %v1032, %v1031
        %v1046 = vpack.c.b16 %v1034, %v1033
        %v1047 = vpack.c.b16 %v1036, %v1035
        %v1048 = vpack.c.b16 %v1038, %v1037
        %v1049 = vpack.c.b16 %v1040, %v1039
        %v1050 = vpack.c.b16 %v1042, %v1041
        %1059 = vmatprep.subr.bf16.mxu0 0
        %1060 = vmatpush1.bf16.msra.mxu0 %v1043
        %1061 = vmatprep.subr.bf16.mxu0 0
        %1062 = vmatpush1.bf16.msra.mxu0 %v1044
        %1063 = vmatprep.subr.bf16.mxu0 0
        %1064 = vmatpush1.bf16.msra.mxu0 %v1045
        %1065 = vmatprep.subr.bf16.mxu0 0
        %1066 = vmatpush1.bf16.msra.mxu0 %v1046
        %1067 = vmatprep.subr.bf16.mxu0 0
        %1068 = vmatpush1.bf16.msra.mxu0 %v1047
        %1069 = vmatprep.subr.bf16.mxu0 0
        %1070 = vmatpush1.bf16.msra.mxu0 %v1048
        %1071 = vmatprep.subr.bf16.mxu0 0
        %1072 = vmatpush1.bf16.msra.mxu0 %v1049
        %1073 = vmatprep.subr.bf16.mxu0 0
        %1074 = vmatpush1.bf16.msra.mxu0 %v1050
        %1075 = vmatprep.subr.bf16.mxu0 0
        %1076 = vmatpush1.bf16.msra.mxu0 0
        %1077 = vmatprep.subr.bf16.mxu0 0
        %1078 = vmatpush1.bf16.msra.mxu0 0
        %1079 = vmatprep.subr.bf16.mxu0 0
        %1080 = vmatpush1.bf16.msra.mxu0 0
        %1081 = vmatprep.subr.bf16.mxu0 0
        %1082 = vmatpush1.bf16.msra.mxu0 0
        %1083 = vmatprep.subr.bf16.mxu0 0
        %1084 = vmatpush1.bf16.msra.mxu0 0
        %1085 = vmatprep.subr.bf16.mxu0 0
        %1086 = vmatpush1.bf16.msra.mxu0 0
        %1087 = vmatprep.subr.bf16.mxu0 0
        %1088 = vmatpush1.bf16.msra.mxu0 0
        %1089 = vmatprep.subr.bf16.mxu0 0
        %1090 = vmatpush1.bf16.msra.mxu0 0
        %1091 = vmatprep.mubr.bf16.mxu0 0
        %1092 = vmatmul.mubr.bf16.gmra.mrb[0].mxu0 %v887
        %v1093 = vpop.f32.mrb[0].mxu0
        %v1094 = vadd.f32 0.0, %v1093
        %v1095 = vpop.f32.mrb[0].mxu0
        %v1096 = vpop.f32.mrb[0].mxu0
        %v1097 = vadd.f32 0.0, %v1096
        %v1098 = vpop.f32.mrb[0].mxu0
        %1099 = vdwg.mxu0
        %v1100 = vld [vmem:[%s695] sm:$0xf]
        %v1101 = vld [vmem:[%s695 + $0x4] sm:$0xf]
        %v1102 = vld [vmem:[%s695 + $0x8] sm:$0xf]
        %v1103 = vld [vmem:[%s695 + $0xc] sm:$0xf]
        %v1104 = vld [vmem:[%s695 + $0x10] sm:$0xf]
        %v1105 = vld [vmem:[%s695 + $0x14] sm:$0xf]
        %v1106 = vld [vmem:[%s695 + $0x18] sm:$0xf]
        %v1107 = vld [vmem:[%s695 + $0x1c] sm:$0xf]
        %v1108 = vld [vmem:[%s695 + $0x20] sm:$0xf]
        %v1109 = vld [vmem:[%s695 + $0x24] sm:$0xf]
        %v1110 = vld [vmem:[%s695 + $0x28] sm:$0xf]
        %v1111 = vld [vmem:[%s695 + $0x2c] sm:$0xf]
        %v1112 = vld [vmem:[%s695 + $0x30] sm:$0xf]
        %v1113 = vld [vmem:[%s695 + $0x34] sm:$0xf]
        %v1114 = vld [vmem:[%s695 + $0x38] sm:$0xf]
        %v1115 = vld [vmem:[%s695 + $0x3c] sm:$0xf]
        %v1132 = vunpack.c.l.b16 %v1100
        %v1133 = vunpack.c.l.b16 %v1101
        %v1134 = vunpack.c.l.b16 %v1102
        %v1135 = vunpack.c.l.b16 %v1103
        %v1136 = vunpack.c.l.b16 %v1104
        %v1137 = vunpack.c.l.b16 %v1105
        %v1138 = vunpack.c.l.b16 %v1106
        %v1139 = vunpack.c.l.b16 %v1107
        %v1140 = vunpack.c.l.b16 %v1108
        %v1141 = vunpack.c.l.b16 %v1109
        %v1142 = vunpack.c.l.b16 %v1110
        %v1143 = vunpack.c.l.b16 %v1111
        %v1144 = vunpack.c.l.b16 %v1112
        %v1145 = vunpack.c.l.b16 %v1113
        %v1146 = vunpack.c.l.b16 %v1114
        %v1147 = vunpack.c.l.b16 %v1115
        %v1148 = vpack.c.b16 %v1133, %v1132
        %v1149 = vpack.c.b16 %v1135, %v1134
        %v1150 = vpack.c.b16 %v1137, %v1136
        %v1151 = vpack.c.b16 %v1139, %v1138
        %v1152 = vpack.c.b16 %v1141, %v1140
        %v1153 = vpack.c.b16 %v1143, %v1142
        %v1154 = vpack.c.b16 %v1145, %v1144
        %v1155 = vpack.c.b16 %v1147, %v1146
        %1164 = vmatprep.subr.bf16.mxu0 0
        %1165 = vmatpush1.bf16.msra.mxu0 %v1148
        %1166 = vmatprep.subr.bf16.mxu0 0
        %1167 = vmatpush1.bf16.msra.mxu0 %v1149
        %1168 = vmatprep.subr.bf16.mxu0 0
        %1169 = vmatpush1.bf16.msra.mxu0 %v1150
        %1170 = vmatprep.subr.bf16.mxu0 0
        %1171 = vmatpush1.bf16.msra.mxu0 %v1151
        %1172 = vmatprep.subr.bf16.mxu0 0
        %1173 = vmatpush1.bf16.msra.mxu0 %v1152
        %1174 = vmatprep.subr.bf16.mxu0 0
        %1175 = vmatpush1.bf16.msra.mxu0 %v1153
        %1176 = vmatprep.subr.bf16.mxu0 0
        %1177 = vmatpush1.bf16.msra.mxu0 %v1154
        %1178 = vmatprep.subr.bf16.mxu0 0
        %1179 = vmatpush1.bf16.msra.mxu0 %v1155
        %1180 = vmatprep.subr.bf16.mxu0 0
        %1181 = vmatpush1.bf16.msra.mxu0 0
        %1182 = vmatprep.subr.bf16.mxu0 0
        %1183 = vmatpush1.bf16.msra.mxu0 0
        %1184 = vmatprep.subr.bf16.mxu0 0
        %1185 = vmatpush1.bf16.msra.mxu0 0
        %1186 = vmatprep.subr.bf16.mxu0 0
        %1187 = vmatpush1.bf16.msra.mxu0 0
        %1188 = vmatprep.subr.bf16.mxu0 0
        %1189 = vmatpush1.bf16.msra.mxu0 0
        %1190 = vmatprep.subr.bf16.mxu0 0
        %1191 = vmatpush1.bf16.msra.mxu0 0
        %1192 = vmatprep.subr.bf16.mxu0 0
        %1193 = vmatpush1.bf16.msra.mxu0 0
        %1194 = vmatprep.subr.bf16.mxu0 0
        %1195 = vmatpush1.bf16.msra.mxu0 0
        %1196 = vmatprep.mubr.bf16.mxu0 0
        %1197 = vmatmul.mubr.bf16.gmra.mrb[0].mxu0 %v887
        %v1198 = vpop.f32.mrb[0].mxu0
        %v1199 = vadd.f32 0.0, %v1198
        %v1200 = vpop.f32.mrb[0].mxu0
        %v1201 = vpop.f32.mrb[0].mxu0
        %v1202 = vadd.f32 0.0, %v1201
        %v1203 = vpop.f32.mrb[0].mxu0
        %1204 = vdwg.mxu0
        %v1205 = vld [vmem:[%s704] sm:$0xf]
        %v1206 = vld [vmem:[%s704 + $0x4] sm:$0xf]
        %v1207 = vld [vmem:[%s704 + $0x8] sm:$0xf]
        %v1208 = vld [vmem:[%s704 + $0xc] sm:$0xf]
        %v1209 = vld [vmem:[%s704 + $0x10] sm:$0xf]
        %v1210 = vld [vmem:[%s704 + $0x14] sm:$0xf]
        %v1211 = vld [vmem:[%s704 + $0x18] sm:$0xf]
        %v1212 = vld [vmem:[%s704 + $0x1c] sm:$0xf]
        %v1213 = vld [vmem:[%s704 + $0x20] sm:$0xf]
        %v1214 = vld [vmem:[%s704 + $0x24] sm:$0xf]
        %v1215 = vld [vmem:[%s704 + $0x28] sm:$0xf]
        %v1216 = vld [vmem:[%s704 + $0x2c] sm:$0xf]
        %v1217 = vld [vmem:[%s704 + $0x30] sm:$0xf]
        %v1218 = vld [vmem:[%s704 + $0x34] sm:$0xf]
        %v1219 = vld [vmem:[%s704 + $0x38] sm:$0xf]
        %v1220 = vld [vmem:[%s704 + $0x3c] sm:$0xf]
        %v1221 = vpack.c.bf16 %v993, %v993
        %v1222 = vpack.c.bf16 %v1094, %v1094
        %v1223 = vpack.c.bf16 %v1199, %v1199
        %vm1224 = vcmask 523264
        %v1226 = vsel %vm1224, %v1221, 0
        %v1229 = vsel %vm1224, %v1222, 0
        %1231 = vmatprep.subr.bf16.mxu0 0
        %1232 = vmatpush1.bf16.xpose.msra.mxu0 %v1229
        %1233 = vmatprep.subr.bf16.mxu0 0
        %1234 = vmatpush1.bf16.xpose.msra.mxu0 0
        %1235 = vmatprep.subr.bf16.mxu0 0
        %1236 = vmatpush1.bf16.xpose.msra.mxu0 0
        %1237 = vmatprep.subr.bf16.mxu0 0
        %1238 = vmatpush1.bf16.xpose.msra.mxu0 0
        %1239 = vmatprep.subr.bf16.mxu0 0
        %1240 = vmatpush1.bf16.xpose.msra.mxu0 0
        %1241 = vmatprep.subr.bf16.mxu0 0
        %1242 = vmatpush1.bf16.xpose.msra.mxu0 0
        %1243 = vmatprep.subr.bf16.mxu0 0
        %1244 = vmatpush1.bf16.xpose.msra.mxu0 0
        %1245 = vmatprep.subr.bf16.mxu0 0
        %1246 = vmatpush1.bf16.xpose.msra.mxu0 0
        %1247 = vmatprep.subr.bf16.mxu0 0
        %1248 = vmatpush1.bf16.xpose.msra.mxu0 0
        %1249 = vmatprep.subr.bf16.mxu0 0
        %1250 = vmatpush1.bf16.xpose.msra.mxu0 0
        %1251 = vmatprep.subr.bf16.mxu0 0
        %1252 = vmatpush1.bf16.xpose.msra.mxu0 0
        %1253 = vmatprep.subr.bf16.mxu0 0
        %1254 = vmatpush1.bf16.xpose.msra.mxu0 0
        %1255 = vmatprep.subr.bf16.mxu0 0
        %1256 = vmatpush1.bf16.xpose.msra.mxu0 0
        %1257 = vmatprep.subr.bf16.mxu0 0
        %1258 = vmatpush1.bf16.xpose.msra.mxu0 0
        %1259 = vmatprep.subr.bf16.mxu0 0
        %1260 = vmatpush1.bf16.xpose.msra.mxu0 0
        %1261 = vmatprep.subr.bf16.mxu0 0
        %1262 = vmatpush1.bf16.xpose.msra.mxu0 0
        %1263 = vmatprep.mubr.bf16.mxu0 0
        %1264 = vmatmul.mubr.bf16.gmra.mrb[0].mxu0 %v1226
        %v1265 = vpop.f32.mrb[0].mxu0
        %v1266 = vadd.f32 0.0, %v1265
        %v1267 = vpop.f32.mrb[0].mxu0
        %v1268 = vpop.f32.mrb[0].mxu0
        %v1269 = vpop.f32.mrb[0].mxu0
        %1270 = vdwg.mxu0
        %vm1271 = vcmask 64512
        %v1272 = vsel %vm1271, %v1266, -inf
        %1273 = vmax.xlane.f32.xlu0 %v1272
        %v1274 = vpop.xlane.xlu0 %1273
        %v1275 = vsub.f32 %v1266, %v1274
        %v1276 = vmul.f32 %v1275, 1.442695
        %v1277 = vpow.pop %v1276
        %v1278 = vsel %vm1271, %v1277, 0.0
        %1279 = vadd.xlane.f32.xlu0 %v1278
        %v1280 = vpop.xlane.xlu0 %1279
        %v1281 = vrcp.pop %v1280
        %v1282 = vmul.f32 %v1277, %v1281
        %v1283 = vpack.c.bf16 %v1282, %v1282
        %v1285 = vsel %vm1271, %v1283, 0
        %vm1287 = vcmask 1043456
        %v1289 = vsel %vm1287, %v1223, 0
        %1291 = vmatprep.subr.bf16.mxu0 0
        %1292 = vmatpush1.bf16.msra.mxu0 %v1289
        %1293 = vmatprep.subr.bf16.mxu0 0
        %1294 = vmatpush1.bf16.msra.mxu0 0
        %1295 = vmatprep.subr.bf16.mxu0 0
        %1296 = vmatpush1.bf16.msra.mxu0 0
        %1297 = vmatprep.subr.bf16.mxu0 0
        %1298 = vmatpush1.bf16.msra.mxu0 0
        %1299 = vmatprep.subr.bf16.mxu0 0
        %1300 = vmatpush1.bf16.msra.mxu0 0
        %1301 = vmatprep.subr.bf16.mxu0 0
        %1302 = vmatpush1.bf16.msra.mxu0 0
        %1303 = vmatprep.subr.bf16.mxu0 0
        %1304 = vmatpush1.bf16.msra.mxu0 0
        %1305 = vmatprep.subr.bf16.mxu0 0
        %1306 = vmatpush1.bf16.msra.mxu0 0
        %1307 = vmatprep.subr.bf16.mxu0 0
        %1308 = vmatpush1.bf16.msra.mxu0 0
        %1309 = vmatprep.subr.bf16.mxu0 0
        %1310 = vmatpush1.bf16.msra.mxu0 0
        %1311 = vmatprep.subr.bf16.mxu0 0
        %1312 = vmatpush1.bf16.msra.mxu0 0
        %1313 = vmatprep.subr.bf16.mxu0 0
        %1314 = vmatpush1.bf16.msra.mxu0 0
        %1315 = vmatprep.subr.bf16.mxu0 0
        %1316 = vmatpush1.bf16.msra.mxu0 0
        %1317 = vmatprep.subr.bf16.mxu0 0
        %1318 = vmatpush1.bf16.msra.mxu0 0
        %1319 = vmatprep.subr.bf16.mxu0 0
        %1320 = vmatpush1.bf16.msra.mxu0 0
        %1321 = vmatprep.subr.bf16.mxu0 0
        %1322 = vmatpush1.bf16.msra.mxu0 0
        %1323 = vmatprep.mubr.bf16.mxu0 0
        %1324 = vmatmul.mubr.bf16.gmra.mrb[0].mxu0 %v1285
        %v1325 = vpop.f32.mrb[0].mxu0
        %v1326 = vadd.f32 0.0, %v1325
        %v1327 = vpop.f32.mrb[0].mxu0
        %v1328 = vpop.f32.mrb[0].mxu0
        %v1329 = vpop.f32.mrb[0].mxu0
        %1330 = vdwg.mxu0
        %v1331 = vpack.c.bf16 %v994, %v994
        %v1332 = vpack.c.bf16 %v1097, %v1097
        %v1333 = vpack.c.bf16 %v1202, %v1202
        %v1335 = vsel %vm1224, %v1331, 0
        %v1338 = vsel %vm1224, %v1332, 0
        %1340 = vmatprep.subr.bf16.mxu0 0
        %1341 = vmatpush1.bf16.xpose.msra.mxu0 %v1338
        %1342 = vmatprep.subr.bf16.mxu0 0
        %1343 = vmatpush1.bf16.xpose.msra.mxu0 0
        %1344 = vmatprep.subr.bf16.mxu0 0
        %1345 = vmatpush1.bf16.xpose.msra.mxu0 0
        %1346 = vmatprep.subr.bf16.mxu0 0
        %1347 = vmatpush1.bf16.xpose.msra.mxu0 0
        %1348 = vmatprep.subr.bf16.mxu0 0
        %1349 = vmatpush1.bf16.xpose.msra.mxu0 0
        %1350 = vmatprep.subr.bf16.mxu0 0
        %1351 = vmatpush1.bf16.xpose.msra.mxu0 0
        %1352 = vmatprep.subr.bf16.mxu0 0
        %1353 = vmatpush1.bf16.xpose.msra.mxu0 0
        %1354 = vmatprep.subr.bf16.mxu0 0
        %1355 = vmatpush1.bf16.xpose.msra.mxu0 0
        %1356 = vmatprep.subr.bf16.mxu0 0
        %1357 = vmatpush1.bf16.xpose.msra.mxu0 0
        %1358 = vmatprep.subr.bf16.mxu0 0
        %1359 = vmatpush1.bf16.xpose.msra.mxu0 0
        %1360 = vmatprep.subr.bf16.mxu0 0
        %1361 = vmatpush1.bf16.xpose.msra.mxu0 0
        %1362 = vmatprep.subr.bf16.mxu0 0
        %1363 = vmatpush1.bf16.xpose.msra.mxu0 0
        %1364 = vmatprep.subr.bf16.mxu0 0
        %1365 = vmatpush1.bf16.xpose.msra.mxu0 0
        %1366 = vmatprep.subr.bf16.mxu0 0
        %1367 = vmatpush1.bf16.xpose.msra.mxu0 0
        %1368 = vmatprep.subr.bf16.mxu0 0
        %1369 = vmatpush1.bf16.xpose.msra.mxu0 0
        %1370 = vmatprep.subr.bf16.mxu0 0
        %1371 = vmatpush1.bf16.xpose.msra.mxu0 0
        %1372 = vmatprep.mubr.bf16.mxu0 0
        %1373 = vmatmul.mubr.bf16.gmra.mrb[0].mxu0 %v1335
        %v1374 = vpop.f32.mrb[0].mxu0
        %v1375 = vadd.f32 0.0, %v1374
        %v1376 = vpop.f32.mrb[0].mxu0
        %v1377 = vpop.f32.mrb[0].mxu0
        %v1378 = vpop.f32.mrb[0].mxu0
        %1379 = vdwg.mxu0
        %v1380 = vsel %vm1271, %v1375, -inf
        %1381 = vmax.xlane.f32.xlu0 %v1380
        %v1382 = vpop.xlane.xlu0 %1381
        %v1383 = vsub.f32 %v1375, %v1382
        %v1384 = vmul.f32 %v1383, 1.442695
        %v1385 = vpow.pop %v1384
        %v1386 = vsel %vm1271, %v1385, 0.0
        %1387 = vadd.xlane.f32.xlu0 %v1386
        %v1388 = vpop.xlane.xlu0 %1387
        %v1389 = vrcp.pop %v1388
        %v1390 = vmul.f32 %v1385, %v1389
        %v1391 = vpack.c.bf16 %v1390, %v1390
        %v1393 = vsel %vm1271, %v1391, 0
        %v1396 = vsel %vm1287, %v1333, 0
        %1398 = vmatprep.subr.bf16.mxu0 0
        %1399 = vmatpush1.bf16.msra.mxu0 %v1396
        %1400 = vmatprep.subr.bf16.mxu0 0
        %1401 = vmatpush1.bf16.msra.mxu0 0
        %1402 = vmatprep.subr.bf16.mxu0 0
        %1403 = vmatpush1.bf16.msra.mxu0 0
        %1404 = vmatprep.subr.bf16.mxu0 0
        %1405 = vmatpush1.bf16.msra.mxu0 0
        %1406 = vmatprep.subr.bf16.mxu0 0
        %1407 = vmatpush1.bf16.msra.mxu0 0
        %1408 = vmatprep.subr.bf16.mxu0 0
        %1409 = vmatpush1.bf16.msra.mxu0 0
        %1410 = vmatprep.subr.bf16.mxu0 0
        %1411 = vmatpush1.bf16.msra.mxu0 0
        %1412 = vmatprep.subr.bf16.mxu0 0
        %1413 = vmatpush1.bf16.msra.mxu0 0
        %1414 = vmatprep.subr.bf16.mxu0 0
        %1415 = vmatpush1.bf16.msra.mxu0 0
        %1416 = vmatprep.subr.bf16.mxu0 0
        %1417 = vmatpush1.bf16.msra.mxu0 0
        %1418 = vmatprep.subr.bf16.mxu0 0
        %1419 = vmatpush1.bf16.msra.mxu0 0
        %1420 = vmatprep.subr.bf16.mxu0 0
        %1421 = vmatpush1.bf16.msra.mxu0 0
        %1422 = vmatprep.subr.bf16.mxu0 0
        %1423 = vmatpush1.bf16.msra.mxu0 0
        %1424 = vmatprep.subr.bf16.mxu0 0
        %1425 = vmatpush1.bf16.msra.mxu0 0
        %1426 = vmatprep.subr.bf16.mxu0 0
        %1427 = vmatpush1.bf16.msra.mxu0 0
        %1428 = vmatprep.subr.bf16.mxu0 0
        %1429 = vmatpush1.bf16.msra.mxu0 0
        %1430 = vmatprep.mubr.bf16.mxu0 0
        %1431 = vmatmul.mubr.bf16.gmra.mrb[0].mxu0 %v1393
        %v1432 = vpop.f32.mrb[0].mxu0
        %v1433 = vadd.f32 0.0, %v1432
        %v1434 = vpop.f32.mrb[0].mxu0
        %v1435 = vpop.f32.mrb[0].mxu0
        %v1436 = vpop.f32.mrb[0].mxu0
        %1437 = vdwg.mxu0
        %v1438 = vpack.c.bf16 %v1433, %v1326
        %1440 = vrot.lane.b32.xlu0 %v1221, 64
        %v1441 = vpop.permute.xlu0 %1440
        %1443 = vrot.lane.b32.xlu0 %v1222, 64
        %v1444 = vpop.permute.xlu0 %1443
        %v1446 = vsel %vm1224, %v1441, 0
        %v1449 = vsel %vm1224, %v1444, 0
        %1451 = vmatprep.subr.bf16.mxu0 0
        %1452 = vmatpush1.bf16.xpose.msra.mxu0 %v1449
        %1453 = vmatprep.subr.bf16.mxu0 0
        %1454 = vmatpush1.bf16.xpose.msra.mxu0 0
        %1455 = vmatprep.subr.bf16.mxu0 0
        %1456 = vmatpush1.bf16.xpose.msra.mxu0 0
        %1457 = vmatprep.subr.bf16.mxu0 0
        %1458 = vmatpush1.bf16.xpose.msra.mxu0 0
        %1459 = vmatprep.subr.bf16.mxu0 0
        %1460 = vmatpush1.bf16.xpose.msra.mxu0 0
        %1461 = vmatprep.subr.bf16.mxu0 0
        %1462 = vmatpush1.bf16.xpose.msra.mxu0 0
        %1463 = vmatprep.subr.bf16.mxu0 0
        %1464 = vmatpush1.bf16.xpose.msra.mxu0 0
        %1465 = vmatprep.subr.bf16.mxu0 0
        %1466 = vmatpush1.bf16.xpose.msra.mxu0 0
        %1467 = vmatprep.subr.bf16.mxu0 0
        %1468 = vmatpush1.bf16.xpose.msra.mxu0 0
        %1469 = vmatprep.subr.bf16.mxu0 0
        %1470 = vmatpush1.bf16.xpose.msra.mxu0 0
        %1471 = vmatprep.subr.bf16.mxu0 0
        %1472 = vmatpush1.bf16.xpose.msra.mxu0 0
        %1473 = vmatprep.subr.bf16.mxu0 0
        %1474 = vmatpush1.bf16.xpose.msra.mxu0 0
        %1475 = vmatprep.subr.bf16.mxu0 0
        %1476 = vmatpush1.bf16.xpose.msra.mxu0 0
        %1477 = vmatprep.subr.bf16.mxu0 0
        %1478 = vmatpush1.bf16.xpose.msra.mxu0 0
        %1479 = vmatprep.subr.bf16.mxu0 0
        %1480 = vmatpush1.bf16.xpose.msra.mxu0 0
        %1481 = vmatprep.subr.bf16.mxu0 0
        %1482 = vmatpush1.bf16.xpose.msra.mxu0 0
        %1483 = vmatprep.mubr.bf16.mxu0 0
        %1484 = vmatmul.mubr.bf16.gmra.mrb[0].mxu0 %v1446
        %v1485 = vpop.f32.mrb[0].mxu0
        %v1486 = vadd.f32 0.0, %v1485
        %v1487 = vpop.f32.mrb[0].mxu0
        %v1488 = vpop.f32.mrb[0].mxu0
        %v1489 = vpop.f32.mrb[0].mxu0
        %1490 = vdwg.mxu0
        %v1491 = vsel %vm1271, %v1486, -inf
        %1492 = vmax.xlane.f32.xlu0 %v1491
        %v1493 = vpop.xlane.xlu0 %1492
        %v1494 = vsub.f32 %v1486, %v1493
        %v1495 = vmul.f32 %v1494, 1.442695
        %v1496 = vpow.pop %v1495
        %v1497 = vsel %vm1271, %v1496, 0.0
        %1498 = vadd.xlane.f32.xlu0 %v1497
        %v1499 = vpop.xlane.xlu0 %1498
        %v1500 = vrcp.pop %v1499
        %v1501 = vmul.f32 %v1496, %v1500
        %v1502 = vpack.c.bf16 %v1501, %v1501
        %1504 = vrot.lane.b32.xlu0 %v1223, 64
        %v1505 = vpop.permute.xlu0 %1504
        %v1507 = vsel %vm1271, %v1502, 0
        %v1510 = vsel %vm1287, %v1505, 0
        %1512 = vmatprep.subr.bf16.mxu0 0
        %1513 = vmatpush1.bf16.msra.mxu0 %v1510
        %1514 = vmatprep.subr.bf16.mxu0 0
        %1515 = vmatpush1.bf16.msra.mxu0 0
        %1516 = vmatprep.subr.bf16.mxu0 0
        %1517 = vmatpush1.bf16.msra.mxu0 0
        %1518 = vmatprep.subr.bf16.mxu0 0
        %1519 = vmatpush1.bf16.msra.mxu0 0
        %1520 = vmatprep.subr.bf16.mxu0 0
        %1521 = vmatpush1.bf16.msra.mxu0 0
        %1522 = vmatprep.subr.bf16.mxu0 0
        %1523 = vmatpush1.bf16.msra.mxu0 0
        %1524 = vmatprep.subr.bf16.mxu0 0
        %1525 = vmatpush1.bf16.msra.mxu0 0
        %1526 = vmatprep.subr.bf16.mxu0 0
        %1527 = vmatpush1.bf16.msra.mxu0 0
        %1528 = vmatprep.subr.bf16.mxu0 0
        %1529 = vmatpush1.bf16.msra.mxu0 0
        %1530 = vmatprep.subr.bf16.mxu0 0
        %1531 = vmatpush1.bf16.msra.mxu0 0
        %1532 = vmatprep.subr.bf16.mxu0 0
        %1533 = vmatpush1.bf16.msra.mxu0 0
        %1534 = vmatprep.subr.bf16.mxu0 0
        %1535 = vmatpush1.bf16.msra.mxu0 0
        %1536 = vmatprep.subr.bf16.mxu0 0
        %1537 = vmatpush1.bf16.msra.mxu0 0
        %1538 = vmatprep.subr.bf16.mxu0 0
        %1539 = vmatpush1.bf16.msra.mxu0 0
        %1540 = vmatprep.subr.bf16.mxu0 0
        %1541 = vmatpush1.bf16.msra.mxu0 0
        %1542 = vmatprep.subr.bf16.mxu0 0
        %1543 = vmatpush1.bf16.msra.mxu0 0
        %1544 = vmatprep.mubr.bf16.mxu0 0
        %1545 = vmatmul.mubr.bf16.gmra.mrb[0].mxu0 %v1507
        %v1546 = vpop.f32.mrb[0].mxu0
        %v1547 = vadd.f32 0.0, %v1546
        %v1548 = vpop.f32.mrb[0].mxu0
        %v1549 = vpop.f32.mrb[0].mxu0
        %v1550 = vpop.f32.mrb[0].mxu0
        %1551 = vdwg.mxu0
        %1553 = vrot.lane.b32.xlu0 %v1331, 64
        %v1554 = vpop.permute.xlu0 %1553
        %1556 = vrot.lane.b32.xlu0 %v1332, 64
        %v1557 = vpop.permute.xlu0 %1556
        %v1559 = vsel %vm1224, %v1554, 0
        %v1562 = vsel %vm1224, %v1557, 0
        %1564 = vmatprep.subr.bf16.mxu0 0
        %1565 = vmatpush1.bf16.xpose.msra.mxu0 %v1562
        %1566 = vmatprep.subr.bf16.mxu0 0
        %1567 = vmatpush1.bf16.xpose.msra.mxu0 0
        %1568 = vmatprep.subr.bf16.mxu0 0
        %1569 = vmatpush1.bf16.xpose.msra.mxu0 0
        %1570 = vmatprep.subr.bf16.mxu0 0
        %1571 = vmatpush1.bf16.xpose.msra.mxu0 0
        %1572 = vmatprep.subr.bf16.mxu0 0
        %1573 = vmatpush1.bf16.xpose.msra.mxu0 0
        %1574 = vmatprep.subr.bf16.mxu0 0
        %1575 = vmatpush1.bf16.xpose.msra.mxu0 0
        %1576 = vmatprep.subr.bf16.mxu0 0
        %1577 = vmatpush1.bf16.xpose.msra.mxu0 0
        %1578 = vmatprep.subr.bf16.mxu0 0
        %1579 = vmatpush1.bf16.xpose.msra.mxu0 0
        %1580 = vmatprep.subr.bf16.mxu0 0
        %1581 = vmatpush1.bf16.xpose.msra.mxu0 0
        %1582 = vmatprep.subr.bf16.mxu0 0
        %1583 = vmatpush1.bf16.xpose.msra.mxu0 0
        %1584 = vmatprep.subr.bf16.mxu0 0
        %1585 = vmatpush1.bf16.xpose.msra.mxu0 0
        %1586 = vmatprep.subr.bf16.mxu0 0
        %1587 = vmatpush1.bf16.xpose.msra.mxu0 0
        %1588 = vmatprep.subr.bf16.mxu0 0
        %1589 = vmatpush1.bf16.xpose.msra.mxu0 0
        %1590 = vmatprep.subr.bf16.mxu0 0
        %1591 = vmatpush1.bf16.xpose.msra.mxu0 0
        %1592 = vmatprep.subr.bf16.mxu0 0
        %1593 = vmatpush1.bf16.xpose.msra.mxu0 0
        %1594 = vmatprep.subr.bf16.mxu0 0
        %1595 = vmatpush1.bf16.xpose.msra.mxu0 0
        %1596 = vmatprep.mubr.bf16.mxu0 0
        %1597 = vmatmul.mubr.bf16.gmra.mrb[0].mxu0 %v1559
        %v1598 = vpop.f32.mrb[0].mxu0
        %v1599 = vadd.f32 0.0, %v1598
        %v1600 = vpop.f32.mrb[0].mxu0
        %v1601 = vpop.f32.mrb[0].mxu0
        %v1602 = vpop.f32.mrb[0].mxu0
        %1603 = vdwg.mxu0
        %v1604 = vsel %vm1271, %v1599, -inf
        %1605 = vmax.xlane.f32.xlu0 %v1604
        %v1606 = vpop.xlane.xlu0 %1605
        %v1607 = vsub.f32 %v1599, %v1606
        %v1608 = vmul.f32 %v1607, 1.442695
        %v1609 = vpow.pop %v1608
        %v1610 = vsel %vm1271, %v1609, 0.0
        %1611 = vadd.xlane.f32.xlu0 %v1610
        %v1612 = vpop.xlane.xlu0 %1611
        %v1613 = vrcp.pop %v1612
        %v1614 = vmul.f32 %v1609, %v1613
        %v1615 = vpack.c.bf16 %v1614, %v1614
        %1617 = vrot.lane.b32.xlu0 %v1333, 64
        %v1618 = vpop.permute.xlu0 %1617
        %v1620 = vsel %vm1271, %v1615, 0
        %v1623 = vsel %vm1287, %v1618, 0
        %1625 = vmatprep.subr.bf16.mxu0 0
        %1626 = vmatpush1.bf16.msra.mxu0 %v1623
        %1627 = vmatprep.subr.bf16.mxu0 0
        %1628 = vmatpush1.bf16.msra.mxu0 0
        %1629 = vmatprep.subr.bf16.mxu0 0
        %1630 = vmatpush1.bf16.msra.mxu0 0
        %1631 = vmatprep.subr.bf16.mxu0 0
        %1632 = vmatpush1.bf16.msra.mxu0 0
        %1633 = vmatprep.subr.bf16.mxu0 0
        %1634 = vmatpush1.bf16.msra.mxu0 0
        %1635 = vmatprep.subr.bf16.mxu0 0
        %1636 = vmatpush1.bf16.msra.mxu0 0
        %1637 = vmatprep.subr.bf16.mxu0 0
        %1638 = vmatpush1.bf16.msra.mxu0 0
        %1639 = vmatprep.subr.bf16.mxu0 0
        %1640 = vmatpush1.bf16.msra.mxu0 0
        %1641 = vmatprep.subr.bf16.mxu0 0
        %1642 = vmatpush1.bf16.msra.mxu0 0
        %1643 = vmatprep.subr.bf16.mxu0 0
        %1644 = vmatpush1.bf16.msra.mxu0 0
        %1645 = vmatprep.subr.bf16.mxu0 0
        %1646 = vmatpush1.bf16.msra.mxu0 0
        %1647 = vmatprep.subr.bf16.mxu0 0
        %1648 = vmatpush1.bf16.msra.mxu0 0
        %1649 = vmatprep.subr.bf16.mxu0 0
        %1650 = vmatpush1.bf16.msra.mxu0 0
        %1651 = vmatprep.subr.bf16.mxu0 0
        %1652 = vmatpush1.bf16.msra.mxu0 0
        %1653 = vmatprep.subr.bf16.mxu0 0
        %1654 = vmatpush1.bf16.msra.mxu0 0
        %1655 = vmatprep.subr.bf16.mxu0 0
        %1656 = vmatpush1.bf16.msra.mxu0 0
        %1657 = vmatprep.mubr.bf16.mxu0 0
        %1658 = vmatmul.mubr.bf16.gmra.mrb[0].mxu0 %v1620
        %v1659 = vpop.f32.mrb[0].mxu0
        %v1660 = vadd.f32 0.0, %v1659
        %v1661 = vpop.f32.mrb[0].mxu0
        %v1662 = vpop.f32.mrb[0].mxu0
        %v1663 = vpop.f32.mrb[0].mxu0
        %1664 = vdwg.mxu0
        %v1665 = vpack.c.bf16 %v1660, %v1547
        %v1674 = vunpack.c.l.b16 %v1213
        %v1675 = vunpack.c.l.b16 %v1214
        %v1676 = vunpack.c.l.b16 %v1215
        %v1677 = vunpack.c.l.b16 %v1216
        %v1678 = vunpack.c.l.b16 %v1217
        %v1679 = vunpack.c.l.b16 %v1218
        %v1680 = vunpack.c.l.b16 %v1219
        %v1681 = vunpack.c.l.b16 %v1220
        %v1682 = vpack.c.b16 %v1675, %v1674
        %v1683 = vpack.c.b16 %v1677, %v1676
        %v1684 = vpack.c.b16 %v1679, %v1678
        %v1685 = vpack.c.b16 %v1681, %v1680
        %v1691 = vsel %vm1224, %v1665, 0
        %1693 = vmatprep.subr.bf16.mxu0 0
        %1694 = vmatpush1.bf16.msra.mxu0 %v1682
        %1695 = vmatprep.subr.bf16.mxu0 0
        %1696 = vmatpush1.bf16.msra.mxu0 %v1683
        %1697 = vmatprep.subr.bf16.mxu0 0
        %1698 = vmatpush1.bf16.msra.mxu0 %v1684
        %1699 = vmatprep.subr.bf16.mxu0 0
        %1700 = vmatpush1.bf16.msra.mxu0 %v1685
        %1701 = vmatprep.subr.bf16.mxu0 0
        %1702 = vmatpush1.bf16.msra.mxu0 0
        %1703 = vmatprep.subr.bf16.mxu0 0
        %1704 = vmatpush1.bf16.msra.mxu0 0
        %1705 = vmatprep.subr.bf16.mxu0 0
        %1706 = vmatpush1.bf16.msra.mxu0 0
        %1707 = vmatprep.subr.bf16.mxu0 0
        %1708 = vmatpush1.bf16.msra.mxu0 0
        %1709 = vmatprep.subr.bf16.mxu0 0
        %1710 = vmatpush1.bf16.msra.mxu0 0
        %1711 = vmatprep.subr.bf16.mxu0 0
        %1712 = vmatpush1.bf16.msra.mxu0 0
        %1713 = vmatprep.subr.bf16.mxu0 0
        %1714 = vmatpush1.bf16.msra.mxu0 0
        %1715 = vmatprep.subr.bf16.mxu0 0
        %1716 = vmatpush1.bf16.msra.mxu0 0
        %1717 = vmatprep.subr.bf16.mxu0 0
        %1718 = vmatpush1.bf16.msra.mxu0 0
        %1719 = vmatprep.subr.bf16.mxu0 0
        %1720 = vmatpush1.bf16.msra.mxu0 0
        %1721 = vmatprep.subr.bf16.mxu0 0
        %1722 = vmatpush1.bf16.msra.mxu0 0
        %1723 = vmatprep.subr.bf16.mxu0 0
        %1724 = vmatpush1.bf16.msra.mxu0 0
        %1725 = vmatprep.mubr.bf16.mxu0 0
        %1726 = vmatmul.mubr.bf16.gmra.mrb[0].mxu0 %v1691
        %v1727 = vpop.f32.mrb[0].mxu0
        %v1728 = vadd.f32 0.0, %v1727
        %v1729 = vpop.f32.mrb[0].mxu0
        %v1730 = vpop.f32.mrb[0].mxu0
        %v1731 = vadd.f32 0.0, %v1730
        %v1732 = vpop.f32.mrb[0].mxu0
        %1733 = vdwg.mxu0
        %v1742 = vunpack.c.l.b16 %v1205
        %v1743 = vunpack.c.l.b16 %v1206
        %v1744 = vunpack.c.l.b16 %v1207
        %v1745 = vunpack.c.l.b16 %v1208
        %v1746 = vunpack.c.l.b16 %v1209
        %v1747 = vunpack.c.l.b16 %v1210
        %v1748 = vunpack.c.l.b16 %v1211
        %v1749 = vunpack.c.l.b16 %v1212
        %v1750 = vpack.c.b16 %v1743, %v1742
        %v1751 = vpack.c.b16 %v1745, %v1744
        %v1752 = vpack.c.b16 %v1747, %v1746
        %v1753 = vpack.c.b16 %v1749, %v1748
        %v1759 = vsel %vm1224, %v1438, 0
        %1761 = vmatprep.subr.bf16.mxu0 0
        %1762 = vmatpush1.bf16.msra.mxu0 %v1750
        %1763 = vmatprep.subr.bf16.mxu0 0
        %1764 = vmatpush1.bf16.msra.mxu0 %v1751
        %1765 = vmatprep.subr.bf16.mxu0 0
        %1766 = vmatpush1.bf16.msra.mxu0 %v1752
        %1767 = vmatprep.subr.bf16.mxu0 0
        %1768 = vmatpush1.bf16.msra.mxu0 %v1753
        %1769 = vmatprep.subr.bf16.mxu0 0
        %1770 = vmatpush1.bf16.msra.mxu0 0
        %1771 = vmatprep.subr.bf16.mxu0 0
        %1772 = vmatpush1.bf16.msra.mxu0 0
        %1773 = vmatprep.subr.bf16.mxu0 0
        %1774 = vmatpush1.bf16.msra.mxu0 0
        %1775 = vmatprep.subr.bf16.mxu0 0
        %1776 = vmatpush1.bf16.msra.mxu0 0
        %1777 = vmatprep.subr.bf16.mxu0 0
        %1778 = vmatpush1.bf16.msra.mxu0 0
        %1779 = vmatprep.subr.bf16.mxu0 0
        %1780 = vmatpush1.bf16.msra.mxu0 0
        %1781 = vmatprep.subr.bf16.mxu0 0
        %1782 = vmatpush1.bf16.msra.mxu0 0
        %1783 = vmatprep.subr.bf16.mxu0 0
        %1784 = vmatpush1.bf16.msra.mxu0 0
        %1785 = vmatprep.subr.bf16.mxu0 0
        %1786 = vmatpush1.bf16.msra.mxu0 0
        %1787 = vmatprep.subr.bf16.mxu0 0
        %1788 = vmatpush1.bf16.msra.mxu0 0
        %1789 = vmatprep.subr.bf16.mxu0 0
        %1790 = vmatpush1.bf16.msra.mxu0 0
        %1791 = vmatprep.subr.bf16.mxu0 0
        %1792 = vmatpush1.bf16.msra.mxu0 0
        %1793 = vmatprep.mubr.bf16.mxu0 0
        %1794 = vmatmul.mubr.bf16.gmra.mrb[0].mxu0 %v1759
        %v1795 = vpop.f32.mrb[0].mxu0
        %v1796 = vadd.f32 %v1728, %v1795
        %v1797 = vpop.f32.mrb[0].mxu0
        %v1798 = vpop.f32.mrb[0].mxu0
        %v1799 = vadd.f32 %v1731, %v1798
        %v1800 = vpop.f32.mrb[0].mxu0
        %1801 = vdwg.mxu0
        %v1802 = vadd.f32 %v844, %v1796
        %v1803 = vadd.f32 %v845, %v1799
        %v1804 = vld [vmem:[%s821] sm:$0x1]
        %v1806 = vlaneseq
        %v1807 = vshrl.u32 %v1806, 7
        %v1808 = vsub.s32 0, %v1807
        %v1809 = vrot.slane %v1804, %v1808
        %v1811 = vadd.f32 %v1802, %v1809
        %v1812 = vadd.f32 %v1803, %v1809
        %v1813 = vld [vmem:[%s824] sm:$0x1]
        %v1814 = vld [vmem:[%s827] sm:$0x1]
        %1815 = vadd.xlane.f32.xlu0 %v1811
        %v1816 = vpop.xlane.xlu0 %1815
        %1817 = vadd.xlane.f32.xlu0 %v1812
        %v1818 = vpop.xlane.xlu0 %1817
        %v1819 = vmul.f32 %v1816, %v852
        %v1820 = vmul.f32 %v1818, %v852
        %v1821 = vsub.f32 %v1811, %v1819
        %v1822 = vsub.f32 %v1812, %v1820
        %v1823 = vmul.f32 %v1821, %v1821
        %v1824 = vmul.f32 %v1822, %v1822
        %1825 = vadd.xlane.f32.xlu0 %v1823
        %v1826 = vpop.xlane.xlu0 %1825
        %1827 = vadd.xlane.f32.xlu0 %v1824
        %v1828 = vpop.xlane.xlu0 %1827
        %v1829 = vmul.f32 %v1826, %v852
        %v1830 = vmul.f32 %v1828, %v852
        %v1831 = vadd.f32 %v1829, 1e-05
        %v1832 = vadd.f32 %v1830, 1e-05
        %v1833 = vrsqrt.pop %v1831
        %v1834 = vrsqrt.pop %v1832
        %v1835 = vmul.f32 %v1821, %v1833
        %v1836 = vmul.f32 %v1822, %v1834
        %v1838 = vlaneseq
        %v1839 = vshrl.u32 %v1838, 7
        %v1840 = vsub.s32 0, %v1839
        %v1841 = vrot.slane %v1813, %v1840
        %v1843 = vmul.f32 %v1835, %v1841
        %v1844 = vmul.f32 %v1836, %v1841
        %v1846 = vlaneseq
        %v1847 = vshrl.u32 %v1846, 7
        %v1848 = vsub.s32 0, %v1847
        %v1849 = vrot.slane %v1814, %v1848
        %v1851 = vadd.f32 %v1843, %v1849
        %v1852 = vadd.f32 %v1844, %v1849
        %v1853 = vpack.c.bf16 %v1852, %v1851
        %v1854 = vld [vmem:[%s713] sm:$0xff]
        %v1855 = vld [vmem:[%s713 + $0x8] sm:$0xff]
        %v1856 = vld [vmem:[%s713 + $0x10] sm:$0xff]
        %v1857 = vld [vmem:[%s713 + $0x18] sm:$0xff]
        %v1858 = vld [vmem:[%s713 + $0x20] sm:$0xff]
        %v1859 = vld [vmem:[%s713 + $0x28] sm:$0xff]
        %v1860 = vld [vmem:[%s713 + $0x30] sm:$0xff]
        %v1861 = vld [vmem:[%s713 + $0x38] sm:$0xff]
        %v1862 = vld [vmem:[%s713 + $0x40] sm:$0xff]
        %v1863 = vld [vmem:[%s713 + $0x48] sm:$0xff]
        %v1864 = vld [vmem:[%s713 + $0x50] sm:$0xff]
        %v1865 = vld [vmem:[%s713 + $0x58] sm:$0xff]
        %v1866 = vld [vmem:[%s713 + $0x60] sm:$0xff]
        %v1867 = vld [vmem:[%s713 + $0x68] sm:$0xff]
        %v1868 = vld [vmem:[%s713 + $0x70] sm:$0xff]
        %v1869 = vld [vmem:[%s713 + $0x78] sm:$0xff]
        %v1870 = vld [vmem:[%s713 + $0x80] sm:$0xff]
        %v1871 = vld [vmem:[%s713 + $0x88] sm:$0xff]
        %v1872 = vld [vmem:[%s713 + $0x90] sm:$0xff]
        %v1873 = vld [vmem:[%s713 + $0x98] sm:$0xff]
        %v1874 = vld [vmem:[%s713 + $0xa0] sm:$0xff]
        %v1875 = vld [vmem:[%s713 + $0xa8] sm:$0xff]
        %v1876 = vld [vmem:[%s713 + $0xb0] sm:$0xff]
        %v1877 = vld [vmem:[%s713 + $0xb8] sm:$0xff]
        %v1878 = vld [vmem:[%s713 + $0xc0] sm:$0xff]
        %v1879 = vld [vmem:[%s713 + $0xc8] sm:$0xff]
        %v1880 = vld [vmem:[%s713 + $0xd0] sm:$0xff]
        %v1881 = vld [vmem:[%s713 + $0xd8] sm:$0xff]
        %v1882 = vld [vmem:[%s713 + $0xe0] sm:$0xff]
        %v1883 = vld [vmem:[%s713 + $0xe8] sm:$0xff]
        %v1884 = vld [vmem:[%s713 + $0xf0] sm:$0xff]
        %v1885 = vld [vmem:[%s713 + $0xf8] sm:$0xff]
        %v1886 = vld [vmem:[%s831] sm:$0xf]
        %v1888 = vlaneseq
        %v1889 = vshrl.u32 %v1888, 7
        %v1890 = vsub.s32 0, %v1889
        %v1891 = vrot.slane %v1886, %v1890
        %v1892 = vlaneseq
        %v1893 = vshrl.u32 %v1892, 7
        %v1894 = vsub.s32 1, %v1893
        %v1895 = vrot.slane %v1886, %v1894
        %v1896 = vlaneseq
        %v1897 = vshrl.u32 %v1896, 7
        %v1898 = vsub.s32 2, %v1897
        %v1899 = vrot.slane %v1886, %v1898
        %v1900 = vlaneseq
        %v1901 = vshrl.u32 %v1900, 7
        %v1902 = vsub.s32 3, %v1901
        %v1903 = vrot.slane %v1886, %v1902
        %v1940 = vunpack.c.l.b16 %v1854
        %v1941 = vunpack.c.h.b16 %v1854
        %v1942 = vunpack.c.l.b16 %v1855
        %v1943 = vunpack.c.h.b16 %v1855
        %v1944 = vunpack.c.l.b16 %v1856
        %v1945 = vunpack.c.h.b16 %v1856
        %v1946 = vunpack.c.l.b16 %v1857
        %v1947 = vunpack.c.h.b16 %v1857
        %v1948 = vunpack.c.l.b16 %v1858
        %v1949 = vunpack.c.h.b16 %v1858
        %v1950 = vunpack.c.l.b16 %v1859
        %v1951 = vunpack.c.h.b16 %v1859
        %v1952 = vunpack.c.l.b16 %v1860
        %v1953 = vunpack.c.h.b16 %v1860
        %v1954 = vunpack.c.l.b16 %v1861
        %v1955 = vunpack.c.h.b16 %v1861
        %v1956 = vunpack.c.l.b16 %v1862
        %v1957 = vunpack.c.h.b16 %v1862
        %v1958 = vunpack.c.l.b16 %v1863
        %v1959 = vunpack.c.h.b16 %v1863
        %v1960 = vunpack.c.l.b16 %v1864
        %v1961 = vunpack.c.h.b16 %v1864
        %v1962 = vunpack.c.l.b16 %v1865
        %v1963 = vunpack.c.h.b16 %v1865
        %v1964 = vunpack.c.l.b16 %v1866
        %v1965 = vunpack.c.h.b16 %v1866
        %v1966 = vunpack.c.l.b16 %v1867
        %v1967 = vunpack.c.h.b16 %v1867
        %v1968 = vunpack.c.l.b16 %v1868
        %v1969 = vunpack.c.h.b16 %v1868
        %v1970 = vunpack.c.l.b16 %v1869
        %v1971 = vunpack.c.h.b16 %v1869
        %v1972 = vunpack.c.l.b16 %v1870
        %v1973 = vunpack.c.h.b16 %v1870
        %v1974 = vunpack.c.l.b16 %v1871
        %v1975 = vunpack.c.h.b16 %v1871
        %v1976 = vunpack.c.l.b16 %v1872
        %v1977 = vunpack.c.h.b16 %v1872
        %v1978 = vunpack.c.l.b16 %v1873
        %v1979 = vunpack.c.h.b16 %v1873
        %v1980 = vunpack.c.l.b16 %v1874
        %v1981 = vunpack.c.h.b16 %v1874
        %v1982 = vunpack.c.l.b16 %v1875
        %v1983 = vunpack.c.h.b16 %v1875
        %v1984 = vunpack.c.l.b16 %v1876
        %v1985 = vunpack.c.h.b16 %v1876
        %v1986 = vunpack.c.l.b16 %v1877
        %v1987 = vunpack.c.h.b16 %v1877
        %v1988 = vunpack.c.l.b16 %v1878
        %v1989 = vunpack.c.h.b16 %v1878
        %v1990 = vunpack.c.l.b16 %v1879
        %v1991 = vunpack.c.h.b16 %v1879
        %v1992 = vunpack.c.l.b16 %v1880
        %v1993 = vunpack.c.h.b16 %v1880
        %v1994 = vunpack.c.l.b16 %v1881
        %v1995 = vunpack.c.h.b16 %v1881
        %v1996 = vunpack.c.l.b16 %v1882
        %v1997 = vunpack.c.h.b16 %v1882
        %v1998 = vunpack.c.l.b16 %v1883
        %v1999 = vunpack.c.h.b16 %v1883
        %v2000 = vunpack.c.l.b16 %v1884
        %v2001 = vunpack.c.h.b16 %v1884
        %v2002 = vunpack.c.l.b16 %v1885
        %v2003 = vunpack.c.h.b16 %v1885
        %v2004 = vpack.c.b16 %v1944, %v1940
        %v2005 = vpack.c.b16 %v1945, %v1941
        %v2006 = vpack.c.b16 %v1946, %v1942
        %v2007 = vpack.c.b16 %v1947, %v1943
        %v2008 = vpack.c.b16 %v1952, %v1948
        %v2009 = vpack.c.b16 %v1953, %v1949
        %v2010 = vpack.c.b16 %v1954, %v1950
        %v2011 = vpack.c.b16 %v1955, %v1951
        %v2012 = vpack.c.b16 %v1960, %v1956
        %v2013 = vpack.c.b16 %v1961, %v1957
        %v2014 = vpack.c.b16 %v1962, %v1958
        %v2015 = vpack.c.b16 %v1963, %v1959
        %v2016 = vpack.c.b16 %v1968, %v1964
        %v2017 = vpack.c.b16 %v1969, %v1965
        %v2018 = vpack.c.b16 %v1970, %v1966
        %v2019 = vpack.c.b16 %v1971, %v1967
        %v2020 = vpack.c.b16 %v1976, %v1972
        %v2021 = vpack.c.b16 %v1977, %v1973
        %v2022 = vpack.c.b16 %v1978, %v1974
        %v2023 = vpack.c.b16 %v1979, %v1975
        %v2024 = vpack.c.b16 %v1984, %v1980
        %v2025 = vpack.c.b16 %v1985, %v1981
        %v2026 = vpack.c.b16 %v1986, %v1982
        %v2027 = vpack.c.b16 %v1987, %v1983
        %v2028 = vpack.c.b16 %v1992, %v1988
        %v2029 = vpack.c.b16 %v1993, %v1989
        %v2030 = vpack.c.b16 %v1994, %v1990
        %v2031 = vpack.c.b16 %v1995, %v1991
        %v2032 = vpack.c.b16 %v2000, %v1996
        %v2033 = vpack.c.b16 %v2001, %v1997
        %v2034 = vpack.c.b16 %v2002, %v1998
        %v2035 = vpack.c.b16 %v2003, %v1999
        %2068 = vmatprep.subr.bf16.mxu0 %v2005
        %2069 = vmatpush1.bf16.msra.mxu0 %v2004
        %2070 = vmatprep.subr.bf16.mxu0 %v2009
        %2071 = vmatpush1.bf16.msra.mxu0 %v2008
        %2072 = vmatprep.subr.bf16.mxu0 %v2013
        %2073 = vmatpush1.bf16.msra.mxu0 %v2012
        %2074 = vmatprep.subr.bf16.mxu0 %v2017
        %2075 = vmatpush1.bf16.msra.mxu0 %v2016
        %2076 = vmatprep.subr.bf16.mxu0 %v2021
        %2077 = vmatpush1.bf16.msra.mxu0 %v2020
        %2078 = vmatprep.subr.bf16.mxu0 %v2025
        %2079 = vmatpush1.bf16.msra.mxu0 %v2024
        %2080 = vmatprep.subr.bf16.mxu0 %v2029
        %2081 = vmatpush1.bf16.msra.mxu0 %v2028
        %2082 = vmatprep.subr.bf16.mxu0 %v2033
        %2083 = vmatpush1.bf16.msra.mxu0 %v2032
        %2084 = vmatprep.subr.bf16.mxu0 0
        %2085 = vmatpush1.bf16.msra.mxu0 0
        %2086 = vmatprep.subr.bf16.mxu0 0
        %2087 = vmatpush1.bf16.msra.mxu0 0
        %2088 = vmatprep.subr.bf16.mxu0 0
        %2089 = vmatpush1.bf16.msra.mxu0 0
        %2090 = vmatprep.subr.bf16.mxu0 0
        %2091 = vmatpush1.bf16.msra.mxu0 0
        %2092 = vmatprep.subr.bf16.mxu0 0
        %2093 = vmatpush1.bf16.msra.mxu0 0
        %2094 = vmatprep.subr.bf16.mxu0 0
        %2095 = vmatpush1.bf16.msra.mxu0 0
        %2096 = vmatprep.subr.bf16.mxu0 0
        %2097 = vmatpush1.bf16.msra.mxu0 0
        %2098 = vmatprep.subr.bf16.mxu0 0
        %2099 = vmatpush1.bf16.msra.mxu0 0
        %2100 = vmatprep.mubr.bf16.mxu0 0
        %2101 = vmatmul.mubr.bf16.gmra.mrb[0].mxu0 %v1853
        %v2102 = vpop.f32.mrb[0].mxu0
        %v2103 = vadd.f32 %v1891, %v2102
        %v2104 = vpop.f32.mrb[0].mxu0
        %v2105 = vadd.f32 %v1895, %v2104
        %v2106 = vpop.f32.mrb[0].mxu0
        %v2107 = vadd.f32 %v1891, %v2106
        %v2108 = vpop.f32.mrb[0].mxu0
        %v2109 = vadd.f32 %v1895, %v2108
        %2110 = vdwg.mxu0
        %2111 = vmatprep.subr.bf16.mxu0 %v2007
        %2112 = vmatpush1.bf16.msra.mxu0 %v2006
        %2113 = vmatprep.subr.bf16.mxu0 %v2011
        %2114 = vmatpush1.bf16.msra.mxu0 %v2010
        %2115 = vmatprep.subr.bf16.mxu0 %v2015
        %2116 = vmatpush1.bf16.msra.mxu0 %v2014
        %2117 = vmatprep.subr.bf16.mxu0 %v2019
        %2118 = vmatpush1.bf16.msra.mxu0 %v2018
        %2119 = vmatprep.subr.bf16.mxu0 %v2023
        %2120 = vmatpush1.bf16.msra.mxu0 %v2022
        %2121 = vmatprep.subr.bf16.mxu0 %v2027
        %2122 = vmatpush1.bf16.msra.mxu0 %v2026
        %2123 = vmatprep.subr.bf16.mxu0 %v2031
        %2124 = vmatpush1.bf16.msra.mxu0 %v2030
        %2125 = vmatprep.subr.bf16.mxu0 %v2035
        %2126 = vmatpush1.bf16.msra.mxu0 %v2034
        %2127 = vmatprep.subr.bf16.mxu0 0
        %2128 = vmatpush1.bf16.msra.mxu0 0
        %2129 = vmatprep.subr.bf16.mxu0 0
        %2130 = vmatpush1.bf16.msra.mxu0 0
        %2131 = vmatprep.subr.bf16.mxu0 0
        %2132 = vmatpush1.bf16.msra.mxu0 0
        %2133 = vmatprep.subr.bf16.mxu0 0
        %2134 = vmatpush1.bf16.msra.mxu0 0
        %2135 = vmatprep.subr.bf16.mxu0 0
        %2136 = vmatpush1.bf16.msra.mxu0 0
        %2137 = vmatprep.subr.bf16.mxu0 0
        %2138 = vmatpush1.bf16.msra.mxu0 0
        %2139 = vmatprep.subr.bf16.mxu0 0
        %2140 = vmatpush1.bf16.msra.mxu0 0
        %2141 = vmatprep.subr.bf16.mxu0 0
        %2142 = vmatpush1.bf16.msra.mxu0 0
        %2143 = vmatprep.mubr.bf16.mxu0 0
        %2144 = vmatmul.mubr.bf16.gmra.mrb[0].mxu0 %v1853
        %v2145 = vpop.f32.mrb[0].mxu0
        %v2146 = vadd.f32 %v1899, %v2145
        %v2147 = vpop.f32.mrb[0].mxu0
        %v2148 = vadd.f32 %v1903, %v2147
        %v2149 = vpop.f32.mrb[0].mxu0
        %v2150 = vadd.f32 %v1899, %v2149
        %v2151 = vpop.f32.mrb[0].mxu0
        %v2152 = vadd.f32 %v1903, %v2151
        %2153 = vdwg.mxu0
        %v2154 = vmul.f32 %v2103, %v2103
        %v2155 = vmul.f32 %v2105, %v2105
        %v2156 = vmul.f32 %v2146, %v2146
        %v2157 = vmul.f32 %v2148, %v2148
        %v2158 = vmul.f32 %v2107, %v2107
        %v2159 = vmul.f32 %v2109, %v2109
        %v2160 = vmul.f32 %v2150, %v2150
        %v2161 = vmul.f32 %v2152, %v2152
        %v2162 = vmul.f32 %v2103, %v2154
        %v2163 = vmul.f32 %v2105, %v2155
        %v2164 = vmul.f32 %v2146, %v2156
        %v2165 = vmul.f32 %v2148, %v2157
        %v2166 = vmul.f32 %v2107, %v2158
        %v2167 = vmul.f32 %v2109, %v2159
        %v2168 = vmul.f32 %v2150, %v2160
        %v2169 = vmul.f32 %v2152, %v2161
        %v2170 = vmul.f32 %v2162, 0.044715
        %v2171 = vmul.f32 %v2163, 0.044715
        %v2172 = vmul.f32 %v2164, 0.044715
        %v2173 = vmul.f32 %v2165, 0.044715
        %v2174 = vmul.f32 %v2166, 0.044715
        %v2175 = vmul.f32 %v2167, 0.044715
        %v2176 = vmul.f32 %v2168, 0.044715
        %v2177 = vmul.f32 %v2169, 0.044715
        %v2178 = vadd.f32 %v2103, %v2170
        %v2179 = vadd.f32 %v2105, %v2171
        %v2180 = vadd.f32 %v2146, %v2172
        %v2181 = vadd.f32 %v2148, %v2173
        %v2182 = vadd.f32 %v2107, %v2174
        %v2183 = vadd.f32 %v2109, %v2175
        %v2184 = vadd.f32 %v2150, %v2176
        %v2185 = vadd.f32 %v2152, %v2177
        %v2186 = vmul.f32 %v2178, 0.7978846
        %v2187 = vmul.f32 %v2179, 0.7978846
        %v2188 = vmul.f32 %v2180, 0.7978846
        %v2189 = vmul.f32 %v2181, 0.7978846
        %v2190 = vmul.f32 %v2182, 0.7978846
        %v2191 = vmul.f32 %v2183, 0.7978846
        %v2192 = vmul.f32 %v2184, 0.7978846
        %v2193 = vmul.f32 %v2185, 0.7978846
        %v2194 = vtanh.pop %v2186
        %v2195 = vtanh.pop %v2187
        %v2196 = vtanh.pop %v2188
        %v2197 = vtanh.pop %v2189
        %v2198 = vtanh.pop %v2190
        %v2199 = vtanh.pop %v2191
        %v2200 = vtanh.pop %v2192
        %v2201 = vtanh.pop %v2193
        %v2202 = vadd.f32 %v2194, 1.0
        %v2203 = vadd.f32 %v2195, 1.0
        %v2204 = vadd.f32 %v2196, 1.0
        %v2205 = vadd.f32 %v2197, 1.0
        %v2206 = vadd.f32 %v2198, 1.0
        %v2207 = vadd.f32 %v2199, 1.0
        %v2208 = vadd.f32 %v2200, 1.0
        %v2209 = vadd.f32 %v2201, 1.0
        %v2210 = vmul.f32 %v2202, 0.5
        %v2211 = vmul.f32 %v2203, 0.5
        %v2212 = vmul.f32 %v2204, 0.5
        %v2213 = vmul.f32 %v2205, 0.5
        %v2214 = vmul.f32 %v2206, 0.5
        %v2215 = vmul.f32 %v2207, 0.5
        %v2216 = vmul.f32 %v2208, 0.5
        %v2217 = vmul.f32 %v2209, 0.5
        %v2218 = vmul.f32 %v2103, %v2210
        %v2219 = vmul.f32 %v2105, %v2211
        %v2220 = vmul.f32 %v2146, %v2212
        %v2221 = vmul.f32 %v2148, %v2213
        %v2222 = vmul.f32 %v2107, %v2214
        %v2223 = vmul.f32 %v2109, %v2215
        %v2224 = vmul.f32 %v2150, %v2216
        %v2225 = vmul.f32 %v2152, %v2217
        %v2226 = vpack.c.bf16 %v2222, %v2218
        %v2227 = vpack.c.bf16 %v2223, %v2219
        %v2228 = vpack.c.bf16 %v2224, %v2220
        %v2229 = vpack.c.bf16 %v2225, %v2221
        %v2230 = vld [vmem:[%s722] sm:$0xf]
        %v2231 = vld [vmem:[%s722 + $0x4] sm:$0xf]
        %v2232 = vld [vmem:[%s722 + $0x8] sm:$0xf]
        %v2233 = vld [vmem:[%s722 + $0xc] sm:$0xf]
        %v2234 = vld [vmem:[%s722 + $0x10] sm:$0xf]
        %v2235 = vld [vmem:[%s722 + $0x14] sm:$0xf]
        %v2236 = vld [vmem:[%s722 + $0x18] sm:$0xf]
        %v2237 = vld [vmem:[%s722 + $0x1c] sm:$0xf]
        %v2238 = vld [vmem:[%s722 + $0x20] sm:$0xf]
        %v2239 = vld [vmem:[%s722 + $0x24] sm:$0xf]
        %v2240 = vld [vmem:[%s722 + $0x28] sm:$0xf]
        %v2241 = vld [vmem:[%s722 + $0x2c] sm:$0xf]
        %v2242 = vld [vmem:[%s722 + $0x30] sm:$0xf]
        %v2243 = vld [vmem:[%s722 + $0x34] sm:$0xf]
        %v2244 = vld [vmem:[%s722 + $0x38] sm:$0xf]
        %v2245 = vld [vmem:[%s722 + $0x3c] sm:$0xf]
        %v2246 = vld [vmem:[%s722 + $0x40] sm:$0xf]
        %v2247 = vld [vmem:[%s722 + $0x44] sm:$0xf]
        %v2248 = vld [vmem:[%s722 + $0x48] sm:$0xf]
        %v2249 = vld [vmem:[%s722 + $0x4c] sm:$0xf]
        %v2250 = vld [vmem:[%s722 + $0x50] sm:$0xf]
        %v2251 = vld [vmem:[%s722 + $0x54] sm:$0xf]
        %v2252 = vld [vmem:[%s722 + $0x58] sm:$0xf]
        %v2253 = vld [vmem:[%s722 + $0x5c] sm:$0xf]
        %v2254 = vld [vmem:[%s722 + $0x60] sm:$0xf]
        %v2255 = vld [vmem:[%s722 + $0x64] sm:$0xf]
        %v2256 = vld [vmem:[%s722 + $0x68] sm:$0xf]
        %v2257 = vld [vmem:[%s722 + $0x6c] sm:$0xf]
        %v2258 = vld [vmem:[%s722 + $0x70] sm:$0xf]
        %v2259 = vld [vmem:[%s722 + $0x74] sm:$0xf]
        %v2260 = vld [vmem:[%s722 + $0x78] sm:$0xf]
        %v2261 = vld [vmem:[%s722 + $0x7c] sm:$0xf]
        %v2262 = vld [vmem:[%s722 + $0x80] sm:$0xf]
        %v2263 = vld [vmem:[%s722 + $0x84] sm:$0xf]
        %v2264 = vld [vmem:[%s722 + $0x88] sm:$0xf]
        %v2265 = vld [vmem:[%s722 + $0x8c] sm:$0xf]
        %v2266 = vld [vmem:[%s722 + $0x90] sm:$0xf]
        %v2267 = vld [vmem:[%s722 + $0x94] sm:$0xf]
        %v2268 = vld [vmem:[%s722 + $0x98] sm:$0xf]
        %v2269 = vld [vmem:[%s722 + $0x9c] sm:$0xf]
        %v2270 = vld [vmem:[%s722 + $0xa0] sm:$0xf]
        %v2271 = vld [vmem:[%s722 + $0xa4] sm:$0xf]
        %v2272 = vld [vmem:[%s722 + $0xa8] sm:$0xf]
        %v2273 = vld [vmem:[%s722 + $0xac] sm:$0xf]
        %v2274 = vld [vmem:[%s722 + $0xb0] sm:$0xf]
        %v2275 = vld [vmem:[%s722 + $0xb4] sm:$0xf]
        %v2276 = vld [vmem:[%s722 + $0xb8] sm:$0xf]
        %v2277 = vld [vmem:[%s722 + $0xbc] sm:$0xf]
        %v2278 = vld [vmem:[%s722 + $0xc0] sm:$0xf]
        %v2279 = vld [vmem:[%s722 + $0xc4] sm:$0xf]
        %v2280 = vld [vmem:[%s722 + $0xc8] sm:$0xf]
        %v2281 = vld [vmem:[%s722 + $0xcc] sm:$0xf]
        %v2282 = vld [vmem:[%s722 + $0xd0] sm:$0xf]
        %v2283 = vld [vmem:[%s722 + $0xd4] sm:$0xf]
        %v2284 = vld [vmem:[%s722 + $0xd8] sm:$0xf]
        %v2285 = vld [vmem:[%s722 + $0xdc] sm:$0xf]
        %v2286 = vld [vmem:[%s722 + $0xe0] sm:$0xf]
        %v2287 = vld [vmem:[%s722 + $0xe4] sm:$0xf]
        %v2288 = vld [vmem:[%s722 + $0xe8] sm:$0xf]
        %v2289 = vld [vmem:[%s722 + $0xec] sm:$0xf]
        %v2290 = vld [vmem:[%s722 + $0xf0] sm:$0xf]
        %v2291 = vld [vmem:[%s722 + $0xf4] sm:$0xf]
        %v2292 = vld [vmem:[%s722 + $0xf8] sm:$0xf]
        %v2293 = vld [vmem:[%s722 + $0xfc] sm:$0xf]
        %v2294 = vld [vmem:[%s834] sm:$0x1]
        %v2296 = vlaneseq
        %v2297 = vshrl.u32 %v2296, 7
        %v2298 = vsub.s32 0, %v2297
        %v2299 = vrot.slane %v2294, %v2298
        %v2365 = vunpack.c.l.b16 %v2230
        %v2366 = vunpack.c.l.b16 %v2231
        %v2367 = vunpack.c.l.b16 %v2232
        %v2368 = vunpack.c.l.b16 %v2233
        %v2369 = vunpack.c.l.b16 %v2234
        %v2370 = vunpack.c.l.b16 %v2235
        %v2371 = vunpack.c.l.b16 %v2236
        %v2372 = vunpack.c.l.b16 %v2237
        %v2373 = vunpack.c.l.b16 %v2238
        %v2374 = vunpack.c.l.b16 %v2239
        %v2375 = vunpack.c.l.b16 %v2240
        %v2376 = vunpack.c.l.b16 %v2241
        %v2377 = vunpack.c.l.b16 %v2242
        %v2378 = vunpack.c.l.b16 %v2243
        %v2379 = vunpack.c.l.b16 %v2244
        %v2380 = vunpack.c.l.b16 %v2245
        %v2381 = vunpack.c.l.b16 %v2246
        %v2382 = vunpack.c.l.b16 %v2247
        %v2383 = vunpack.c.l.b16 %v2248
        %v2384 = vunpack.c.l.b16 %v2249
        %v2385 = vunpack.c.l.b16 %v2250
        %v2386 = vunpack.c.l.b16 %v2251
        %v2387 = vunpack.c.l.b16 %v2252
        %v2388 = vunpack.c.l.b16 %v2253
        %v2389 = vunpack.c.l.b16 %v2254
        %v2390 = vunpack.c.l.b16 %v2255
        %v2391 = vunpack.c.l.b16 %v2256
        %v2392 = vunpack.c.l.b16 %v2257
        %v2393 = vunpack.c.l.b16 %v2258
        %v2394 = vunpack.c.l.b16 %v2259
        %v2395 = vunpack.c.l.b16 %v2260
        %v2396 = vunpack.c.l.b16 %v2261
        %v2397 = vunpack.c.l.b16 %v2262
        %v2398 = vunpack.c.l.b16 %v2263
        %v2399 = vunpack.c.l.b16 %v2264
        %v2400 = vunpack.c.l.b16 %v2265
        %v2401 = vunpack.c.l.b16 %v2266
        %v2402 = vunpack.c.l.b16 %v2267
        %v2403 = vunpack.c.l.b16 %v2268
        %v2404 = vunpack.c.l.b16 %v2269
        %v2405 = vunpack.c.l.b16 %v2270
        %v2406 = vunpack.c.l.b16 %v2271
        %v2407 = vunpack.c.l.b16 %v2272
        %v2408 = vunpack.c.l.b16 %v2273
        %v2409 = vunpack.c.l.b16 %v2274
        %v2410 = vunpack.c.l.b16 %v2275
        %v2411 = vunpack.c.l.b16 %v2276
        %v2412 = vunpack.c.l.b16 %v2277
        %v2413 = vunpack.c.l.b16 %v2278
        %v2414 = vunpack.c.l.b16 %v2279
        %v2415 = vunpack.c.l.b16 %v2280
        %v2416 = vunpack.c.l.b16 %v2281
        %v2417 = vunpack.c.l.b16 %v2282
        %v2418 = vunpack.c.l.b16 %v2283
        %v2419 = vunpack.c.l.b16 %v2284
        %v2420 = vunpack.c.l.b16 %v2285
        %v2421 = vunpack.c.l.b16 %v2286
        %v2422 = vunpack.c.l.b16 %v2287
        %v2423 = vunpack.c.l.b16 %v2288
        %v2424 = vunpack.c.l.b16 %v2289
        %v2425 = vunpack.c.l.b16 %v2290
        %v2426 = vunpack.c.l.b16 %v2291
        %v2427 = vunpack.c.l.b16 %v2292
        %v2428 = vunpack.c.l.b16 %v2293
        %v2429 = vpack.c.b16 %v2366, %v2365
        %v2430 = vpack.c.b16 %v2368, %v2367
        %v2431 = vpack.c.b16 %v2370, %v2369
        %v2432 = vpack.c.b16 %v2372, %v2371
        %v2433 = vpack.c.b16 %v2374, %v2373
        %v2434 = vpack.c.b16 %v2376, %v2375
        %v2435 = vpack.c.b16 %v2378, %v2377
        %v2436 = vpack.c.b16 %v2380, %v2379
        %v2437 = vpack.c.b16 %v2382, %v2381
        %v2438 = vpack.c.b16 %v2384, %v2383
        %v2439 = vpack.c.b16 %v2386, %v2385
        %v2440 = vpack.c.b16 %v2388, %v2387
        %v2441 = vpack.c.b16 %v2390, %v2389
        %v2442 = vpack.c.b16 %v2392, %v2391
        %v2443 = vpack.c.b16 %v2394, %v2393
        %v2444 = vpack.c.b16 %v2396, %v2395
        %v2445 = vpack.c.b16 %v2398, %v2397
        %v2446 = vpack.c.b16 %v2400, %v2399
        %v2447 = vpack.c.b16 %v2402, %v2401
        %v2448 = vpack.c.b16 %v2404, %v2403
        %v2449 = vpack.c.b16 %v2406, %v2405
        %v2450 = vpack.c.b16 %v2408, %v2407
        %v2451 = vpack.c.b16 %v2410, %v2409
        %v2452 = vpack.c.b16 %v2412, %v2411
        %v2453 = vpack.c.b16 %v2414, %v2413
        %v2454 = vpack.c.b16 %v2416, %v2415
        %v2455 = vpack.c.b16 %v2418, %v2417
        %v2456 = vpack.c.b16 %v2420, %v2419
        %v2457 = vpack.c.b16 %v2422, %v2421
        %v2458 = vpack.c.b16 %v2424, %v2423
        %v2459 = vpack.c.b16 %v2426, %v2425
        %v2460 = vpack.c.b16 %v2428, %v2427
        %2493 = vmatprep.subr.bf16.mxu0 0
        %2494 = vmatpush1.bf16.msra.mxu0 %v2429
        %2495 = vmatprep.subr.bf16.mxu0 0
        %2496 = vmatpush1.bf16.msra.mxu0 %v2430
        %2497 = vmatprep.subr.bf16.mxu0 0
        %2498 = vmatpush1.bf16.msra.mxu0 %v2431
        %2499 = vmatprep.subr.bf16.mxu0 0
        %2500 = vmatpush1.bf16.msra.mxu0 %v2432
        %2501 = vmatprep.subr.bf16.mxu0 0
        %2502 = vmatpush1.bf16.msra.mxu0 %v2433
        %2503 = vmatprep.subr.bf16.mxu0 0
        %2504 = vmatpush1.bf16.msra.mxu0 %v2434
        %2505 = vmatprep.subr.bf16.mxu0 0
        %2506 = vmatpush1.bf16.msra.mxu0 %v2435
        %2507 = vmatprep.subr.bf16.mxu0 0
        %2508 = vmatpush1.bf16.msra.mxu0 %v2436
        %2509 = vmatprep.subr.bf16.mxu0 0
        %2510 = vmatpush1.bf16.msra.mxu0 %v2437
        %2511 = vmatprep.subr.bf16.mxu0 0
        %2512 = vmatpush1.bf16.msra.mxu0 %v2438
        %2513 = vmatprep.subr.bf16.mxu0 0
        %2514 = vmatpush1.bf16.msra.mxu0 %v2439
        %2515 = vmatprep.subr.bf16.mxu0 0
        %2516 = vmatpush1.bf16.msra.mxu0 %v2440
        %2517 = vmatprep.subr.bf16.mxu0 0
        %2518 = vmatpush1.bf16.msra.mxu0 %v2441
        %2519 = vmatprep.subr.bf16.mxu0 0
        %2520 = vmatpush1.bf16.msra.mxu0 %v2442
        %2521 = vmatprep.subr.bf16.mxu0 0
        %2522 = vmatpush1.bf16.msra.mxu0 %v2443
        %2523 = vmatprep.subr.bf16.mxu0 0
        %2524 = vmatpush1.bf16.msra.mxu0 %v2444
        %2525 = vmatprep.mubr.bf16.mxu0 %v2227
        %2526 = vmatmul.mubr.bf16.gmra.mrb[0].mxu0 %v2226
        %v2527 = vpop.f32.mrb[0].mxu0
        %v2528 = vadd.f32 %v2299, %v2527
        %v2529 = vpop.f32.mrb[0].mxu0
        %v2530 = vpop.f32.mrb[0].mxu0
        %v2531 = vadd.f32 %v2299, %v2530
        %v2532 = vpop.f32.mrb[0].mxu0
        %2533 = vdwg.mxu0
        %2534 = vmatprep.subr.bf16.mxu0 0
        %2535 = vmatpush1.bf16.msra.mxu0 %v2445
        %2536 = vmatprep.subr.bf16.mxu0 0
        %2537 = vmatpush1.bf16.msra.mxu0 %v2446
        %2538 = vmatprep.subr.bf16.mxu0 0
        %2539 = vmatpush1.bf16.msra.mxu0 %v2447
        %2540 = vmatprep.subr.bf16.mxu0 0
        %2541 = vmatpush1.bf16.msra.mxu0 %v2448
        %2542 = vmatprep.subr.bf16.mxu0 0
        %2543 = vmatpush1.bf16.msra.mxu0 %v2449
        %2544 = vmatprep.subr.bf16.mxu0 0
        %2545 = vmatpush1.bf16.msra.mxu0 %v2450
        %2546 = vmatprep.subr.bf16.mxu0 0
        %2547 = vmatpush1.bf16.msra.mxu0 %v2451
        %2548 = vmatprep.subr.bf16.mxu0 0
        %2549 = vmatpush1.bf16.msra.mxu0 %v2452
        %2550 = vmatprep.subr.bf16.mxu0 0
        %2551 = vmatpush1.bf16.msra.mxu0 %v2453
        %2552 = vmatprep.subr.bf16.mxu0 0
        %2553 = vmatpush1.bf16.msra.mxu0 %v2454
        %2554 = vmatprep.subr.bf16.mxu0 0
        %2555 = vmatpush1.bf16.msra.mxu0 %v2455
        %2556 = vmatprep.subr.bf16.mxu0 0
        %2557 = vmatpush1.bf16.msra.mxu0 %v2456
        %2558 = vmatprep.subr.bf16.mxu0 0
        %2559 = vmatpush1.bf16.msra.mxu0 %v2457
        %2560 = vmatprep.subr.bf16.mxu0 0
        %2561 = vmatpush1.bf16.msra.mxu0 %v2458
        %2562 = vmatprep.subr.bf16.mxu0 0
        %2563 = vmatpush1.bf16.msra.mxu0 %v2459
        %2564 = vmatprep.subr.bf16.mxu0 0
        %2565 = vmatpush1.bf16.msra.mxu0 %v2460
        %2566 = vmatprep.mubr.bf16.mxu0 %v2229
        %2567 = vmatmul.mubr.bf16.gmra.mrb[0].mxu0 %v2228
        %v2568 = vpop.f32.mrb[0].mxu0
        %v2569 = vadd.f32 %v2528, %v2568
        %v2570 = vpop.f32.mrb[0].mxu0
        %v2571 = vpop.f32.mrb[0].mxu0
        %v2572 = vadd.f32 %v2531, %v2571
        %v2573 = vpop.f32.mrb[0].mxu0
        %2574 = vdwg.mxu0
        %v2575 = vadd.f32 %v1811, %v2569
        %v2576 = vadd.f32 %v1812, %v2572
        %2577 = vst [vmem:[#allocation2] sm:$0xff] %v2575
        %2578 = vst [vmem:[#allocation2 + $0x8] sm:$0xff] %v2576
        %p2579 = scmp.eq.s32.totalorder %s38, 1
        // Predicated region
        $region117: #{tpu_custom_call.1} parent=83 // pred_check
          %p2580 = pneg %p2579
        $region118: #{tpu_custom_call.1} parent=83 // pred_check_branch
          %2582 = sbr.rel (%p2580) target = $region120
        $region119: #{tpu_custom_call.1} parent=83 // pred_region
          %v2583 = vld [vmem:[%s14] sm:$0x1]
          %v2584 = vld [vmem:[%s15] sm:$0x1]
          %2585 = vadd.xlane.f32.xlu0 %v2575
          %v2586 = vpop.xlane.xlu0 %2585
          %2587 = vadd.xlane.f32.xlu0 %v2576
          %v2588 = vpop.xlane.xlu0 %2587
          %v2589 = vmul.f32 %v2586, %v852
          %v2590 = vmul.f32 %v2588, %v852
          %v2591 = vsub.f32 %v2575, %v2589
          %v2592 = vsub.f32 %v2576, %v2590
          %v2593 = vmul.f32 %v2591, %v2591
          %v2594 = vmul.f32 %v2592, %v2592
          %2595 = vadd.xlane.f32.xlu0 %v2593
          %v2596 = vpop.xlane.xlu0 %2595
          %2597 = vadd.xlane.f32.xlu0 %v2594
          %v2598 = vpop.xlane.xlu0 %2597
          %v2599 = vmul.f32 %v2596, %v852
          %v2600 = vmul.f32 %v2598, %v852
          %v2601 = vadd.f32 %v2599, 1e-05
          %v2602 = vadd.f32 %v2600, 1e-05
          %v2603 = vrsqrt.pop %v2601
          %v2604 = vrsqrt.pop %v2602
          %v2605 = vmul.f32 %v2591, %v2603
          %v2606 = vmul.f32 %v2592, %v2604
          %v2608 = vlaneseq
          %v2609 = vshrl.u32 %v2608, 7
          %v2610 = vsub.s32 0, %v2609
          %v2611 = vrot.slane %v2583, %v2610
          %v2613 = vmul.f32 %v2605, %v2611
          %v2614 = vmul.f32 %v2606, %v2611
          %v2616 = vlaneseq
          %v2617 = vshrl.u32 %v2616, 7
          %v2618 = vsub.s32 0, %v2617
          %v2619 = vrot.slane %v2584, %v2618
          %v2621 = vadd.f32 %v2613, %v2619
          %v2622 = vadd.f32 %v2614, %v2619
          %2623 = vst [vmem:[#allocation15] sm:$0xff] %v2621
          %2624 = vst [vmem:[#allocation15 + $0x8] sm:$0xff] %v2622
        $region120: #{tpu_custom_call.1} parent=83 // pred_fallthru
          _
        // Predicated region
        $region121: #{tpu_custom_call.1} parent=83 // pred_check
          %p2625 = pneg %p452
        $region122: #{tpu_custom_call.1} parent=83 // pred_check_branch
          %2627 = sbr.rel (%p2625) target = $region124
        $region123: #{tpu_custom_call.1} parent=83 // pred_region
          %s2629 = ssub.s32 256, 256
          %2630 = vsyncadd [#allocation5], %s2629
          %s2631 = sshll.u32 [#allocation15], 4
          %s2632 = int_to_ptr.vmem [resolvable:$true] %s2631
          %2637 = dma.vmem_to_hbm [thread:$0]  %s2632, 256, %s16, [#allocation5], 128, 128, 8
        $region124: #{tpu_custom_call.1} parent=83 // pred_fallthru
          _
        // Predicated region
        $region125: #{tpu_custom_call.1} parent=83 // pred_check
          %p2638 = pneg %p452
        $region126: #{tpu_custom_call.1} parent=83 // pred_check_branch
          %2640 = sbr.rel (%p2638) target = $region128
        $region127: #{tpu_custom_call.1} parent=83 // pred_region
          %2641 = dma.done [#allocation5], 256
        $region128: #{tpu_custom_call.1} parent=83 // pred_fallthru
          _
      $region84: #{tpu_custom_call.1} parent=5 // pred_fallthru
        _
      %p2642 = scmp.le.s32.totalorder 2, %s33
      // Predicated region
      $region129: #{tpu_custom_call.1} parent=5 // pred_check
        %p2643 = pneg %p2642
      $region130: #{tpu_custom_call.1} parent=5 // pred_check_branch
        %2645 = sbr.rel (%p2643) target = $region132
      $region131: #{tpu_custom_call.1} parent=5 // pred_region
        %s2646 = ssub.s32 %s33, 2
      $region132: #{tpu_custom_call.1} parent=5 // pred_fallthru
        _
    $region6: #{tpu_custom_call.1} parent=1 // loop_footer
      %s37 = sadd.s32 1, %s33
    $region7: #{tpu_custom_call.1} parent=1 // loop_footer_branch
      %32 = sbr.rel target = $region3
    $region8: #{tpu_custom_call.1} parent=1 // loop_exit
      _
    %2647 = vsyncpa [#allocation4], 1
    %s2648 = scalar_lea.sflag [#allocation4], 1
    %2649 = vsyncpa %s2648, 1
    %2650 = vsyncpa [#allocation7], 1
    %s2651 = scalar_lea.sflag [#allocation7], 1
    %2652 = vsyncpa %s2651, 1
    %2653 = vsyncpa [#allocation10], 1
    %s2654 = scalar_lea.sflag [#allocation10], 1
    %2655 = vsyncpa %s2654, 1
    %2656 = vsyncpa [#allocation13], 1
    %s2657 = scalar_lea.sflag [#allocation13], 1
    %2658 = vsyncpa %s2657, 1
    %2659 = vsyncpa [#allocation5], 1
    %s2660 = scalar_lea.sflag [#allocation5], 1
    %2661 = vsyncpa %s2660, 1

</llo_original>
